<compile_context>
chip_gen: v7x
topology: tpu7x:2x2x1
jax: 0.10.0
libtpu: 0.0.40
codegen_flags: <defaults>
</compile_context>

<pallas_src>
import functools

import jax
import jax.numpy as jnp
import numpy as np
from jax.experimental import pallas as pl
from jax.experimental.pallas import tpu as pltpu

NUM_HIDDEN = 512          # matches the PyTorch module constant
H = NUM_HIDDEN // 2       # per-direction LSTM hidden size (256)


# ----------------------------------------------------------------------------
# Fused kernel: input projection (one MXU matmul) -> unrolled bidirectional
# LSTM recurrence (VMEM-resident gates, vreg-resident h/c) -> Linear+sigmoid.
# ----------------------------------------------------------------------------
def _bilstm_head_kernel(x_ref, wih_ref, b_ref, whhf_ref, whhb_ref,
                        wout_ref, bout_ref, o_ref, gates_scr, *, T, B):
    Hd = whhf_ref.shape[0]          # per-direction hidden size
    G = 4 * Hd                      # per-direction gate width

    # ---- hoisted input projection: all timesteps, both directions at once.
    # (T*B, D) @ (D, 8H) + bias  ->  VMEM scratch (T*B, 8H)
    gates_scr[...] = (
        jnp.dot(x_ref[...], wih_ref[...], preferred_element_type=jnp.float32)
        + b_ref[...])

    def cell(g_x, h, c, whh_ref):
        gates = g_x + jnp.dot(h, whh_ref[...],
                              preferred_element_type=jnp.float32)   # (B, 4H)
        i_g = jax.nn.sigmoid(gates[:, 0 * Hd:1 * Hd])
        f_g = jax.nn.sigmoid(gates[:, 1 * Hd:2 * Hd])
        g_g = jnp.tanh(gates[:, 2 * Hd:3 * Hd])
        o_g = jax.nn.sigmoid(gates[:, 3 * Hd:4 * Hd])
        c_new = f_g * c + i_g * g_g
        h_new = o_g * jnp.tanh(c_new)
        return h_new, c_new

    zeros = jnp.zeros((B, Hd), jnp.float32)
    h_f, c_f = zeros, zeros
    h_b, c_b = zeros, zeros
    h_b_last = zeros

    # Fully unrolled time loop (T is small and static): no grid-step overhead,
    # full LLO scheduling visibility.  Forward walks t = 0..T-1; the backward
    # direction walks t = T-1..0 in the same loop body.
    for s in range(T):
        rf = s * B                  # forward row offset into gates_scr
        rb = (T - 1 - s) * B        # backward row offset (time reversed)
        g_f = gates_scr[rf:rf + B, 0:G]
        g_b = gates_scr[rb:rb + B, G:2 * G]
        h_f, c_f = cell(g_f, h_f, c_f, whhf_ref)
        h_b, c_b = cell(g_b, h_b, c_b, whhb_ref)
        if s == 0:
            # output[-1] of a bidirectional nn.LSTM uses the backward hidden
            # state after it has processed only the last token (its 1st step).
            h_b_last = h_b
    # (Backward steps beyond s==0 do not feed the head; kept for fidelity to
    #  the module's bidirectional LSTM — they are negligible at these sizes.)

    # ---- Linear(2H, 1) + sigmoid on the VPU/XLU (no N=1 MXU matmul).
    w_f = wout_ref[:, 0:Hd]         # (1, H)  weights for the forward half
    w_b = wout_ref[:, Hd:2 * Hd]    # (1, H)  weights for the backward half
    logit = (jnp.sum(h_f * w_f, axis=1, keepdims=True)
             + jnp.sum(h_b_last * w_b, axis=1, keepdims=True)
             + bout_ref[...])
    o_ref[...] = jax.nn.sigmoid(logit)


def _bilstm_head(x_flat, wih, b, whh_f, whh_b, w_out, b_out, *, T, B):
    Hd = whh_f.shape[0]
    kernel = functools.partial(_bilstm_head_kernel, T=T, B=B)
    return pl.pallas_call(
        kernel,
        out_shape=jax.ShapeDtypeStruct((B, 1), jnp.float32),
        in_specs=[
            pl.BlockSpec(x_flat.shape, lambda: (0, 0)),   # (T*B, D)
            pl.BlockSpec(wih.shape, lambda: (0, 0)),      # (D, 8H)
            pl.BlockSpec(b.shape, lambda: (0, 0)),        # (1, 8H)
            pl.BlockSpec(whh_f.shape, lambda: (0, 0)),    # (H, 4H)
            pl.BlockSpec(whh_b.shape, lambda: (0, 0)),    # (H, 4H)
            pl.BlockSpec(w_out.shape, lambda: (0, 0)),    # (1, 2H)
            pl.BlockSpec(b_out.shape, lambda: (0, 0)),    # (1, 1)
        ],
        out_specs=pl.BlockSpec((B, 1), lambda: (0, 0)),
        scratch_shapes=[pltpu.VMEM((T * B, 8 * Hd), jnp.float32)],
    )(x_flat, wih, b, whh_f, whh_b, w_out, b_out)


# ----------------------------------------------------------------------------
# Full forward pass (embedding gather is XLA glue; everything else is Pallas).
# ----------------------------------------------------------------------------
@jax.jit
def forward(text, params):
    T, B = text.shape
    x = jnp.take(params["embed"], text, axis=0)          # (T, B, D)
    x_flat = x.reshape(T * B, x.shape[-1])                # (T*B, D)
    return _bilstm_head(x_flat, params["wih"], params["b"],
                        params["whh_f"], params["whh_b"],
                        params["w_out"], params["b_out"], T=T, B=B)


# ----------------------------------------------------------------------------
# Pure-JAX reference (lax.scan LSTM) for correctness.
# ----------------------------------------------------------------------------
def _lstm_ref(x, wih, whh, b, reverse):
    T, B, D = x.shape
    Hd = whh.shape[0]
    xs = x[::-1] if reverse else x

    def step(carry, xt):
        h, c = carry
        gates = xt @ wih + h @ whh + b
        i_g = jax.nn.sigmoid(gates[:, :Hd])
        f_g = jax.nn.sigmoid(gates[:, Hd:2 * Hd])
        g_g = jnp.tanh(gates[:, 2 * Hd:3 * Hd])
        o_g = jax.nn.sigmoid(gates[:, 3 * Hd:])
        c = f_g * c + i_g * g_g
        h = o_g * jnp.tanh(c)
        return (h, c), h

    init = (jnp.zeros((B, Hd), jnp.float32), jnp.zeros((B, Hd), jnp.float32))
    _, hs = jax.lax.scan(step, init, xs)
    return hs[::-1] if reverse else hs


def forward_ref(text, params):
    x = jnp.take(params["embed"], text, axis=0)
    G = 4 * H
    fwd = _lstm_ref(x, params["wih"][:, :G], params["whh_f"],
                    params["b"][:, :G], False)
    bwd = _lstm_ref(x, params["wih"][:, G:], params["whh_b"],
                    params["b"][:, G:], True)
    last = jnp.concatenate([fwd[-1], bwd[-1]], axis=-1)    # (B, 2H)
    return jax.nn.sigmoid(last @ params["w_out"].T + params["b_out"])


# ----------------------------------------------------------------------------
# Deterministic parameter construction (pre-packed kernel layout).
# ----------------------------------------------------------------------------
def make_params(key, vocab_size, embed_dim):
    ks = jax.random.split(key, 10)
    s = 0.05
    n = lambda k, shape: s * jax.random.normal(k, shape, jnp.float32)
    return {
        "embed": jax.random.normal(ks[0], (vocab_size, embed_dim), jnp.float32),
        # W_ih^T of both directions, packed [fwd | bwd] along the gate axis.
        "wih": jnp.concatenate([n(ks[1], (embed_dim, 4 * H)),
                                n(ks[4], (embed_dim, 4 * H))], axis=1),
        # combined bias (b_ih + b_hh), packed the same way.
        "b": jnp.concatenate([n(ks[3], (1, 4 * H)),
                              n(ks[6], (1, 4 * H))], axis=1),
        "whh_f": n(ks[2], (H, 4 * H)),
        "whh_b": n(ks[5], (H, 4 * H)),
        # Linear(NUM_HIDDEN, 1): PyTorch-layout weight (1, NUM_HIDDEN) + bias.
        "w_out": n(ks[7], (1, NUM_HIDDEN)),
        "b_out": n(ks[8], (1, 1)),
    }


if __name__ == "__main__":
    T, B = 8, 2               # seq_len, batch  (seq-first, like nn.LSTM default)
    vocab_size, embed_dim = 50, 32

    key = jax.random.PRNGKey(0)
    k_tok, k_par = jax.random.split(key)
    text = jax.random.randint(k_tok, (T, B), 0, vocab_size, dtype=jnp.int32)
    params = make_params(k_par, vocab_size, embed_dim)

    out = jax.block_until_ready(forward(text, params))

    ref = forward_ref(text, params)
    np.testing.assert_allclose(np.asarray(out), np.asarray(ref),
                               rtol=5e-3, atol=5e-3)
    assert out.shape == (B, 1)
    print("KERNEL_OK")
</pallas_src>

<mosaic_0001>
module attributes {stable_mosaic.version = 11 : i64} {
  func.func @_bilstm_head_kernel(%arg0: memref<16x32xf32, #tpu.memory_space<vmem>>, %arg1: memref<32x2048xf32, #tpu.memory_space<vmem>>, %arg2: memref<1x2048xf32, #tpu.memory_space<vmem>>, %arg3: memref<256x1024xf32, #tpu.memory_space<vmem>>, %arg4: memref<256x1024xf32, #tpu.memory_space<vmem>>, %arg5: memref<1x512xf32, #tpu.memory_space<vmem>>, %arg6: memref<1x1xf32, #tpu.memory_space<vmem>>, %arg7: memref<2x1xf32, #tpu.memory_space<vmem>>, %arg8: memref<16x2048xf32, #tpu.memory_space<vmem>>) attributes {dimension_semantics = [], scalar_prefetch = 0 : i64, scratch_operands = 1 : i64, tpu.core_type = #tpu.core_type<tc>} {
    %c0 = arith.constant 0 : index
    %c0_0 = arith.constant 0 : index
    %0 = vector.load %arg0[%c0, %c0_0] : memref<16x32xf32, #tpu.memory_space<vmem>>, vector<16x32xf32>
    %c0_1 = arith.constant 0 : index
    %c0_2 = arith.constant 0 : index
    %1 = vector.load %arg1[%c0_1, %c0_2] : memref<32x2048xf32, #tpu.memory_space<vmem>>, vector<32x2048xf32>
    %cst = arith.constant dense<0.000000e+00> : vector<16x2048xf32>
    %2 = tpu.matmul %0, %1, %cst {dimension_numbers = #tpu.dot_dimension_numbers<[1], [0], [0], [1], [0, 0, 1, 1], [], []>} : vector<16x32xf32>, vector<32x2048xf32>, vector<16x2048xf32> -> vector<16x2048xf32>
    %c0_3 = arith.constant 0 : index
    %c0_4 = arith.constant 0 : index
    %3 = vector.load %arg2[%c0_3, %c0_4] : memref<1x2048xf32, #tpu.memory_space<vmem>>, vector<1x2048xf32>
    %4 = vector.broadcast %3 : vector<1x2048xf32> to vector<16x2048xf32>
    %5 = arith.addf %2, %4 : vector<16x2048xf32>
    %c0_5 = arith.constant 0 : index
    %c0_6 = arith.constant 0 : index
    %6 = vector.load %arg8[%c0_5, %c0_6] : memref<16x2048xf32, #tpu.memory_space<vmem>>, vector<16x2048xf32>
    tpu.vector_store %arg8[%c0_5, %c0_6], %5 {strides = array<i32>} : memref<16x2048xf32, #tpu.memory_space<vmem>>, vector<16x2048xf32>,
    %cst_7 = arith.constant 0.000000e+00 : f32
    %7 = vector.broadcast %cst_7 : f32 to vector<2x256xf32>
    %c0_8 = arith.constant 0 : index
    %c0_9 = arith.constant 0 : index
    %8 = vector.load %arg8[%c0_8, %c0_9] : memref<16x2048xf32, #tpu.memory_space<vmem>>, vector<2x1024xf32>
    %c14 = arith.constant 14 : index
    %c1024 = arith.constant 1024 : index
    %9 = vector.load %arg8[%c14, %c1024] : memref<16x2048xf32, #tpu.memory_space<vmem>>, vector<2x1024xf32>
    %c0_10 = arith.constant 0 : index
    %c0_11 = arith.constant 0 : index
    %10 = vector.load %arg3[%c0_10, %c0_11] : memref<256x1024xf32, #tpu.memory_space<vmem>>, vector<256x1024xf32>
    %cst_12 = arith.constant dense<0.000000e+00> : vector<2x1024xf32>
    %11 = tpu.matmul %7, %10, %cst_12 {dimension_numbers = #tpu.dot_dimension_numbers<[1], [0], [0], [1], [0, 0, 1, 1], [], []>} : vector<2x256xf32>, vector<256x1024xf32>, vector<2x1024xf32> -> vector<2x1024xf32>
    %12 = arith.addf %8, %11 : vector<2x1024xf32>
    %13 = vector.extract_strided_slice %12 {offsets = [0, 0], sizes = [2, 256], strides = [1, 1]} : vector<2x1024xf32> to vector<2x256xf32>
    %14 = arith.negf %13 : vector<2x256xf32>
    %15 = math.exp %14 : vector<2x256xf32>
    %cst_13 = arith.constant 1.000000e+00 : f32
    %16 = vector.broadcast %cst_13 : f32 to vector<2x256xf32>
    %17 = arith.addf %16, %15 : vector<2x256xf32>
    %18 = arith.divf %16, %17 : vector<2x256xf32>
    %19 = vector.extract_strided_slice %12 {offsets = [0, 256], sizes = [2, 256], strides = [1, 1]} : vector<2x1024xf32> to vector<2x256xf32>
    %20 = arith.negf %19 : vector<2x256xf32>
    %21 = math.exp %20 : vector<2x256xf32>
    %cst_14 = arith.constant 1.000000e+00 : f32
    %22 = vector.broadcast %cst_14 : f32 to vector<2x256xf32>
    %23 = arith.addf %22, %21 : vector<2x256xf32>
    %24 = arith.divf %22, %23 : vector<2x256xf32>
    %25 = vector.extract_strided_slice %12 {offsets = [0, 512], sizes = [2, 256], strides = [1, 1]} : vector<2x1024xf32> to vector<2x256xf32>
    %26 = math.tanh %25 : vector<2x256xf32>
    %27 = vector.extract_strided_slice %12 {offsets = [0, 768], sizes = [2, 256], strides = [1, 1]} : vector<2x1024xf32> to vector<2x256xf32>
    %28 = arith.negf %27 : vector<2x256xf32>
    %29 = math.exp %28 : vector<2x256xf32>
    %cst_15 = arith.constant 1.000000e+00 : f32
    %30 = vector.broadcast %cst_15 : f32 to vector<2x256xf32>
    %31 = arith.addf %30, %29 : vector<2x256xf32>
    %32 = arith.divf %30, %31 : vector<2x256xf32>
    %33 = arith.mulf %24, %7 : vector<2x256xf32>
    %34 = arith.mulf %18, %26 : vector<2x256xf32>
    %35 = arith.addf %33, %34 : vector<2x256xf32>
    %36 = math.tanh %35 : vector<2x256xf32>
    %37 = arith.mulf %32, %36 : vector<2x256xf32>
    %c0_16 = arith.constant 0 : index
    %c0_17 = arith.constant 0 : index
    %38 = vector.load %arg4[%c0_16, %c0_17] : memref<256x1024xf32, #tpu.memory_space<vmem>>, vector<256x1024xf32>
    %cst_18 = arith.constant dense<0.000000e+00> : vector<2x1024xf32>
    %39 = tpu.matmul %7, %38, %cst_18 {dimension_numbers = #tpu.dot_dimension_numbers<[1], [0], [0], [1], [0, 0, 1, 1], [], []>} : vector<2x256xf32>, vector<256x1024xf32>, vector<2x1024xf32> -> vector<2x1024xf32>
    %40 = arith.addf %9, %39 : vector<2x1024xf32>
    %41 = vector.extract_strided_slice %40 {offsets = [0, 0], sizes = [2, 256], strides = [1, 1]} : vector<2x1024xf32> to vector<2x256xf32>
    %42 = arith.negf %41 : vector<2x256xf32>
    %43 = math.exp %42 : vector<2x256xf32>
    %cst_19 = arith.constant 1.000000e+00 : f32
    %44 = vector.broadcast %cst_19 : f32 to vector<2x256xf32>
    %45 = arith.addf %44, %43 : vector<2x256xf32>
    %46 = arith.divf %44, %45 : vector<2x256xf32>
    %47 = vector.extract_strided_slice %40 {offsets = [0, 256], sizes = [2, 256], strides = [1, 1]} : vector<2x1024xf32> to vector<2x256xf32>
    %48 = arith.negf %47 : vector<2x256xf32>
    %49 = math.exp %48 : vector<2x256xf32>
    %cst_20 = arith.constant 1.000000e+00 : f32
    %50 = vector.broadcast %cst_20 : f32 to vector<2x256xf32>
    %51 = arith.addf %50, %49 : vector<2x256xf32>
    %52 = arith.divf %50, %51 : vector<2x256xf32>
    %53 = vector.extract_strided_slice %40 {offsets = [0, 512], sizes = [2, 256], strides = [1, 1]} : vector<2x1024xf32> to vector<2x256xf32>
    %54 = math.tanh %53 : vector<2x256xf32>
    %55 = vector.extract_strided_slice %40 {offsets = [0, 768], sizes = [2, 256], strides = [1, 1]} : vector<2x1024xf32> to vector<2x256xf32>
    %56 = arith.negf %55 : vector<2x256xf32>
    %57 = math.exp %56 : vector<2x256xf32>
    %cst_21 = arith.constant 1.000000e+00 : f32
    %58 = vector.broadcast %cst_21 : f32 to vector<2x256xf32>
    %59 = arith.addf %58, %57 : vector<2x256xf32>
    %60 = arith.divf %58, %59 : vector<2x256xf32>
    %61 = arith.mulf %52, %7 : vector<2x256xf32>
    %62 = arith.mulf %46, %54 : vector<2x256xf32>
    %63 = arith.addf %61, %62 : vector<2x256xf32>
    %64 = math.tanh %63 : vector<2x256xf32>
    %65 = arith.mulf %60, %64 : vector<2x256xf32>
    %c2 = arith.constant 2 : index
    %c0_22 = arith.constant 0 : index
    %66 = vector.load %arg8[%c2, %c0_22] : memref<16x2048xf32, #tpu.memory_space<vmem>>, vector<2x1024xf32>
    %c0_23 = arith.constant 0 : index
    %c0_24 = arith.constant 0 : index
    %67 = vector.load %arg3[%c0_23, %c0_24] : memref<256x1024xf32, #tpu.memory_space<vmem>>, vector<256x1024xf32>
    %cst_25 = arith.constant dense<0.000000e+00> : vector<2x1024xf32>
    %68 = tpu.matmul %37, %67, %cst_25 {dimension_numbers = #tpu.dot_dimension_numbers<[1], [0], [0], [1], [0, 0, 1, 1], [], []>} : vector<2x256xf32>, vector<256x1024xf32>, vector<2x1024xf32> -> vector<2x1024xf32>
    %69 = arith.addf %66, %68 : vector<2x1024xf32>
    %70 = vector.extract_strided_slice %69 {offsets = [0, 0], sizes = [2, 256], strides = [1, 1]} : vector<2x1024xf32> to vector<2x256xf32>
    %71 = arith.negf %70 : vector<2x256xf32>
    %72 = math.exp %71 : vector<2x256xf32>
    %cst_26 = arith.constant 1.000000e+00 : f32
    %73 = vector.broadcast %cst_26 : f32 to vector<2x256xf32>
    %74 = arith.addf %73, %72 : vector<2x256xf32>
    %75 = arith.divf %73, %74 : vector<2x256xf32>
    %76 = vector.extract_strided_slice %69 {offsets = [0, 256], sizes = [2, 256], strides = [1, 1]} : vector<2x1024xf32> to vector<2x256xf32>
    %77 = arith.negf %76 : vector<2x256xf32>
    %78 = math.exp %77 : vector<2x256xf32>
    %cst_27 = arith.constant 1.000000e+00 : f32
    %79 = vector.broadcast %cst_27 : f32 to vector<2x256xf32>
    %80 = arith.addf %79, %78 : vector<2x256xf32>
    %81 = arith.divf %79, %80 : vector<2x256xf32>
    %82 = vector.extract_strided_slice %69 {offsets = [0, 512], sizes = [2, 256], strides = [1, 1]} : vector<2x1024xf32> to vector<2x256xf32>
    %83 = math.tanh %82 : vector<2x256xf32>
    %84 = vector.extract_strided_slice %69 {offsets = [0, 768], sizes = [2, 256], strides = [1, 1]} : vector<2x1024xf32> to vector<2x256xf32>
    %85 = arith.negf %84 : vector<2x256xf32>
    %86 = math.exp %85 : vector<2x256xf32>
    %cst_28 = arith.constant 1.000000e+00 : f32
    %87 = vector.broadcast %cst_28 : f32 to vector<2x256xf32>
    %88 = arith.addf %87, %86 : vector<2x256xf32>
    %89 = arith.divf %87, %88 : vector<2x256xf32>
    %90 = arith.mulf %81, %35 : vector<2x256xf32>
    %91 = arith.mulf %75, %83 : vector<2x256xf32>
    %92 = arith.addf %90, %91 : vector<2x256xf32>
    %93 = math.tanh %92 : vector<2x256xf32>
    %94 = arith.mulf %89, %93 : vector<2x256xf32>
    %c4 = arith.constant 4 : index
    %c0_29 = arith.constant 0 : index
    %95 = vector.load %arg8[%c4, %c0_29] : memref<16x2048xf32, #tpu.memory_space<vmem>>, vector<2x1024xf32>
    %c0_30 = arith.constant 0 : index
    %c0_31 = arith.constant 0 : index
    %96 = vector.load %arg3[%c0_30, %c0_31] : memref<256x1024xf32, #tpu.memory_space<vmem>>, vector<256x1024xf32>
    %cst_32 = arith.constant dense<0.000000e+00> : vector<2x1024xf32>
    %97 = tpu.matmul %94, %96, %cst_32 {dimension_numbers = #tpu.dot_dimension_numbers<[1], [0], [0], [1], [0, 0, 1, 1], [], []>} : vector<2x256xf32>, vector<256x1024xf32>, vector<2x1024xf32> -> vector<2x1024xf32>
    %98 = arith.addf %95, %97 : vector<2x1024xf32>
    %99 = vector.extract_strided_slice %98 {offsets = [0, 0], sizes = [2, 256], strides = [1, 1]} : vector<2x1024xf32> to vector<2x256xf32>
    %100 = arith.negf %99 : vector<2x256xf32>
    %101 = math.exp %100 : vector<2x256xf32>
    %cst_33 = arith.constant 1.000000e+00 : f32
    %102 = vector.broadcast %cst_33 : f32 to vector<2x256xf32>
    %103 = arith.addf %102, %101 : vector<2x256xf32>
    %104 = arith.divf %102, %103 : vector<2x256xf32>
    %105 = vector.extract_strided_slice %98 {offsets = [0, 256], sizes = [2, 256], strides = [1, 1]} : vector<2x1024xf32> to vector<2x256xf32>
    %106 = arith.negf %105 : vector<2x256xf32>
    %107 = math.exp %106 : vector<2x256xf32>
    %cst_34 = arith.constant 1.000000e+00 : f32
    %108 = vector.broadcast %cst_34 : f32 to vector<2x256xf32>
    %109 = arith.addf %108, %107 : vector<2x256xf32>
    %110 = arith.divf %108, %109 : vector<2x256xf32>
    %111 = vector.extract_strided_slice %98 {offsets = [0, 512], sizes = [2, 256], strides = [1, 1]} : vector<2x1024xf32> to vector<2x256xf32>
    %112 = math.tanh %111 : vector<2x256xf32>
    %113 = vector.extract_strided_slice %98 {offsets = [0, 768], sizes = [2, 256], strides = [1, 1]} : vector<2x1024xf32> to vector<2x256xf32>
    %114 = arith.negf %113 : vector<2x256xf32>
    %115 = math.exp %114 : vector<2x256xf32>
    %cst_35 = arith.constant 1.000000e+00 : f32
    %116 = vector.broadcast %cst_35 : f32 to vector<2x256xf32>
    %117 = arith.addf %116, %115 : vector<2x256xf32>
    %118 = arith.divf %116, %117 : vector<2x256xf32>
    %119 = arith.mulf %110, %92 : vector<2x256xf32>
    %120 = arith.mulf %104, %112 : vector<2x256xf32>
    %121 = arith.addf %119, %120 : vector<2x256xf32>
    %122 = math.tanh %121 : vector<2x256xf32>
    %123 = arith.mulf %118, %122 : vector<2x256xf32>
    %c6 = arith.constant 6 : index
    %c0_36 = arith.constant 0 : index
    %124 = vector.load %arg8[%c6, %c0_36] : memref<16x2048xf32, #tpu.memory_space<vmem>>, vector<2x1024xf32>
    %c0_37 = arith.constant 0 : index
    %c0_38 = arith.constant 0 : index
    %125 = vector.load %arg3[%c0_37, %c0_38] : memref<256x1024xf32, #tpu.memory_space<vmem>>, vector<256x1024xf32>
    %cst_39 = arith.constant dense<0.000000e+00> : vector<2x1024xf32>
    %126 = tpu.matmul %123, %125, %cst_39 {dimension_numbers = #tpu.dot_dimension_numbers<[1], [0], [0], [1], [0, 0, 1, 1], [], []>} : vector<2x256xf32>, vector<256x1024xf32>, vector<2x1024xf32> -> vector<2x1024xf32>
    %127 = arith.addf %124, %126 : vector<2x1024xf32>
    %128 = vector.extract_strided_slice %127 {offsets = [0, 0], sizes = [2, 256], strides = [1, 1]} : vector<2x1024xf32> to vector<2x256xf32>
    %129 = arith.negf %128 : vector<2x256xf32>
    %130 = math.exp %129 : vector<2x256xf32>
    %cst_40 = arith.constant 1.000000e+00 : f32
    %131 = vector.broadcast %cst_40 : f32 to vector<2x256xf32>
    %132 = arith.addf %131, %130 : vector<2x256xf32>
    %133 = arith.divf %131, %132 : vector<2x256xf32>
    %134 = vector.extract_strided_slice %127 {offsets = [0, 256], sizes = [2, 256], strides = [1, 1]} : vector<2x1024xf32> to vector<2x256xf32>
    %135 = arith.negf %134 : vector<2x256xf32>
    %136 = math.exp %135 : vector<2x256xf32>
    %cst_41 = arith.constant 1.000000e+00 : f32
    %137 = vector.broadcast %cst_41 : f32 to vector<2x256xf32>
    %138 = arith.addf %137, %136 : vector<2x256xf32>
    %139 = arith.divf %137, %138 : vector<2x256xf32>
    %140 = vector.extract_strided_slice %127 {offsets = [0, 512], sizes = [2, 256], strides = [1, 1]} : vector<2x1024xf32> to vector<2x256xf32>
    %141 = math.tanh %140 : vector<2x256xf32>
    %142 = vector.extract_strided_slice %127 {offsets = [0, 768], sizes = [2, 256], strides = [1, 1]} : vector<2x1024xf32> to vector<2x256xf32>
    %143 = arith.negf %142 : vector<2x256xf32>
    %144 = math.exp %143 : vector<2x256xf32>
    %cst_42 = arith.constant 1.000000e+00 : f32
    %145 = vector.broadcast %cst_42 : f32 to vector<2x256xf32>
    %146 = arith.addf %145, %144 : vector<2x256xf32>
    %147 = arith.divf %145, %146 : vector<2x256xf32>
    %148 = arith.mulf %139, %121 : vector<2x256xf32>
    %149 = arith.mulf %133, %141 : vector<2x256xf32>
    %150 = arith.addf %148, %149 : vector<2x256xf32>
    %151 = math.tanh %150 : vector<2x256xf32>
    %152 = arith.mulf %147, %151 : vector<2x256xf32>
    %c8 = arith.constant 8 : index
    %c0_43 = arith.constant 0 : index
    %153 = vector.load %arg8[%c8, %c0_43] : memref<16x2048xf32, #tpu.memory_space<vmem>>, vector<2x1024xf32>
    %c0_44 = arith.constant 0 : index
    %c0_45 = arith.constant 0 : index
    %154 = vector.load %arg3[%c0_44, %c0_45] : memref<256x1024xf32, #tpu.memory_space<vmem>>, vector<256x1024xf32>
    %cst_46 = arith.constant dense<0.000000e+00> : vector<2x1024xf32>
    %155 = tpu.matmul %152, %154, %cst_46 {dimension_numbers = #tpu.dot_dimension_numbers<[1], [0], [0], [1], [0, 0, 1, 1], [], []>} : vector<2x256xf32>, vector<256x1024xf32>, vector<2x1024xf32> -> vector<2x1024xf32>
    %156 = arith.addf %153, %155 : vector<2x1024xf32>
    %157 = vector.extract_strided_slice %156 {offsets = [0, 0], sizes = [2, 256], strides = [1, 1]} : vector<2x1024xf32> to vector<2x256xf32>
    %158 = arith.negf %157 : vector<2x256xf32>
    %159 = math.exp %158 : vector<2x256xf32>
    %cst_47 = arith.constant 1.000000e+00 : f32
    %160 = vector.broadcast %cst_47 : f32 to vector<2x256xf32>
    %161 = arith.addf %160, %159 : vector<2x256xf32>
    %162 = arith.divf %160, %161 : vector<2x256xf32>
    %163 = vector.extract_strided_slice %156 {offsets = [0, 256], sizes = [2, 256], strides = [1, 1]} : vector<2x1024xf32> to vector<2x256xf32>
    %164 = arith.negf %163 : vector<2x256xf32>
    %165 = math.exp %164 : vector<2x256xf32>
    %cst_48 = arith.constant 1.000000e+00 : f32
    %166 = vector.broadcast %cst_48 : f32 to vector<2x256xf32>
    %167 = arith.addf %166, %165 : vector<2x256xf32>
    %168 = arith.divf %166, %167 : vector<2x256xf32>
    %169 = vector.extract_strided_slice %156 {offsets = [0, 512], sizes = [2, 256], strides = [1, 1]} : vector<2x1024xf32> to vector<2x256xf32>
    %170 = math.tanh %169 : vector<2x256xf32>
    %171 = vector.extract_strided_slice %156 {offsets = [0, 768], sizes = [2, 256], strides = [1, 1]} : vector<2x1024xf32> to vector<2x256xf32>
    %172 = arith.negf %171 : vector<2x256xf32>
    %173 = math.exp %172 : vector<2x256xf32>
    %cst_49 = arith.constant 1.000000e+00 : f32
    %174 = vector.broadcast %cst_49 : f32 to vector<2x256xf32>
    %175 = arith.addf %174, %173 : vector<2x256xf32>
    %176 = arith.divf %174, %175 : vector<2x256xf32>
    %177 = arith.mulf %168, %150 : vector<2x256xf32>
    %178 = arith.mulf %162, %170 : vector<2x256xf32>
    %179 = arith.addf %177, %178 : vector<2x256xf32>
    %180 = math.tanh %179 : vector<2x256xf32>
    %181 = arith.mulf %176, %180 : vector<2x256xf32>
    %c10 = arith.constant 10 : index
    %c0_50 = arith.constant 0 : index
    %182 = vector.load %arg8[%c10, %c0_50] : memref<16x2048xf32, #tpu.memory_space<vmem>>, vector<2x1024xf32>
    %c0_51 = arith.constant 0 : index
    %c0_52 = arith.constant 0 : index
    %183 = vector.load %arg3[%c0_51, %c0_52] : memref<256x1024xf32, #tpu.memory_space<vmem>>, vector<256x1024xf32>
    %cst_53 = arith.constant dense<0.000000e+00> : vector<2x1024xf32>
    %184 = tpu.matmul %181, %183, %cst_53 {dimension_numbers = #tpu.dot_dimension_numbers<[1], [0], [0], [1], [0, 0, 1, 1], [], []>} : vector<2x256xf32>, vector<256x1024xf32>, vector<2x1024xf32> -> vector<2x1024xf32>
    %185 = arith.addf %182, %184 : vector<2x1024xf32>
    %186 = vector.extract_strided_slice %185 {offsets = [0, 0], sizes = [2, 256], strides = [1, 1]} : vector<2x1024xf32> to vector<2x256xf32>
    %187 = arith.negf %186 : vector<2x256xf32>
    %188 = math.exp %187 : vector<2x256xf32>
    %cst_54 = arith.constant 1.000000e+00 : f32
    %189 = vector.broadcast %cst_54 : f32 to vector<2x256xf32>
    %190 = arith.addf %189, %188 : vector<2x256xf32>
    %191 = arith.divf %189, %190 : vector<2x256xf32>
    %192 = vector.extract_strided_slice %185 {offsets = [0, 256], sizes = [2, 256], strides = [1, 1]} : vector<2x1024xf32> to vector<2x256xf32>
    %193 = arith.negf %192 : vector<2x256xf32>
    %194 = math.exp %193 : vector<2x256xf32>
    %cst_55 = arith.constant 1.000000e+00 : f32
    %195 = vector.broadcast %cst_55 : f32 to vector<2x256xf32>
    %196 = arith.addf %195, %194 : vector<2x256xf32>
    %197 = arith.divf %195, %196 : vector<2x256xf32>
    %198 = vector.extract_strided_slice %185 {offsets = [0, 512], sizes = [2, 256], strides = [1, 1]} : vector<2x1024xf32> to vector<2x256xf32>
    %199 = math.tanh %198 : vector<2x256xf32>
    %200 = vector.extract_strided_slice %185 {offsets = [0, 768], sizes = [2, 256], strides = [1, 1]} : vector<2x1024xf32> to vector<2x256xf32>
    %201 = arith.negf %200 : vector<2x256xf32>
    %202 = math.exp %201 : vector<2x256xf32>
    %cst_56 = arith.constant 1.000000e+00 : f32
    %203 = vector.broadcast %cst_56 : f32 to vector<2x256xf32>
    %204 = arith.addf %203, %202 : vector<2x256xf32>
    %205 = arith.divf %203, %204 : vector<2x256xf32>
    %206 = arith.mulf %197, %179 : vector<2x256xf32>
    %207 = arith.mulf %191, %199 : vector<2x256xf32>
    %208 = arith.addf %206, %207 : vector<2x256xf32>
    %209 = math.tanh %208 : vector<2x256xf32>
    %210 = arith.mulf %205, %209 : vector<2x256xf32>
    %c12 = arith.constant 12 : index
    %c0_57 = arith.constant 0 : index
    %211 = vector.load %arg8[%c12, %c0_57] : memref<16x2048xf32, #tpu.memory_space<vmem>>, vector<2x1024xf32>
    %c0_58 = arith.constant 0 : index
    %c0_59 = arith.constant 0 : index
    %212 = vector.load %arg3[%c0_58, %c0_59] : memref<256x1024xf32, #tpu.memory_space<vmem>>, vector<256x1024xf32>
    %cst_60 = arith.constant dense<0.000000e+00> : vector<2x1024xf32>
    %213 = tpu.matmul %210, %212, %cst_60 {dimension_numbers = #tpu.dot_dimension_numbers<[1], [0], [0], [1], [0, 0, 1, 1], [], []>} : vector<2x256xf32>, vector<256x1024xf32>, vector<2x1024xf32> -> vector<2x1024xf32>
    %214 = arith.addf %211, %213 : vector<2x1024xf32>
    %215 = vector.extract_strided_slice %214 {offsets = [0, 0], sizes = [2, 256], strides = [1, 1]} : vector<2x1024xf32> to vector<2x256xf32>
    %216 = arith.negf %215 : vector<2x256xf32>
    %217 = math.exp %216 : vector<2x256xf32>
    %cst_61 = arith.constant 1.000000e+00 : f32
    %218 = vector.broadcast %cst_61 : f32 to vector<2x256xf32>
    %219 = arith.addf %218, %217 : vector<2x256xf32>
    %220 = arith.divf %218, %219 : vector<2x256xf32>
    %221 = vector.extract_strided_slice %214 {offsets = [0, 256], sizes = [2, 256], strides = [1, 1]} : vector<2x1024xf32> to vector<2x256xf32>
    %222 = arith.negf %221 : vector<2x256xf32>
    %223 = math.exp %222 : vector<2x256xf32>
    %cst_62 = arith.constant 1.000000e+00 : f32
    %224 = vector.broadcast %cst_62 : f32 to vector<2x256xf32>
    %225 = arith.addf %224, %223 : vector<2x256xf32>
    %226 = arith.divf %224, %225 : vector<2x256xf32>
    %227 = vector.extract_strided_slice %214 {offsets = [0, 512], sizes = [2, 256], strides = [1, 1]} : vector<2x1024xf32> to vector<2x256xf32>
    %228 = math.tanh %227 : vector<2x256xf32>
    %229 = vector.extract_strided_slice %214 {offsets = [0, 768], sizes = [2, 256], strides = [1, 1]} : vector<2x1024xf32> to vector<2x256xf32>
    %230 = arith.negf %229 : vector<2x256xf32>
    %231 = math.exp %230 : vector<2x256xf32>
    %cst_63 = arith.constant 1.000000e+00 : f32
    %232 = vector.broadcast %cst_63 : f32 to vector<2x256xf32>
    %233 = arith.addf %232, %231 : vector<2x256xf32>
    %234 = arith.divf %232, %233 : vector<2x256xf32>
    %235 = arith.mulf %226, %208 : vector<2x256xf32>
    %236 = arith.mulf %220, %228 : vector<2x256xf32>
    %237 = arith.addf %235, %236 : vector<2x256xf32>
    %238 = math.tanh %237 : vector<2x256xf32>
    %239 = arith.mulf %234, %238 : vector<2x256xf32>
    %c14_64 = arith.constant 14 : index
    %c0_65 = arith.constant 0 : index
    %240 = vector.load %arg8[%c14_64, %c0_65] : memref<16x2048xf32, #tpu.memory_space<vmem>>, vector<2x1024xf32>
    %c0_66 = arith.constant 0 : index
    %c0_67 = arith.constant 0 : index
    %241 = vector.load %arg3[%c0_66, %c0_67] : memref<256x1024xf32, #tpu.memory_space<vmem>>, vector<256x1024xf32>
    %cst_68 = arith.constant dense<0.000000e+00> : vector<2x1024xf32>
    %242 = tpu.matmul %239, %241, %cst_68 {dimension_numbers = #tpu.dot_dimension_numbers<[1], [0], [0], [1], [0, 0, 1, 1], [], []>} : vector<2x256xf32>, vector<256x1024xf32>, vector<2x1024xf32> -> vector<2x1024xf32>
    %243 = arith.addf %240, %242 : vector<2x1024xf32>
    %244 = vector.extract_strided_slice %243 {offsets = [0, 0], sizes = [2, 256], strides = [1, 1]} : vector<2x1024xf32> to vector<2x256xf32>
    %245 = arith.negf %244 : vector<2x256xf32>
    %246 = math.exp %245 : vector<2x256xf32>
    %cst_69 = arith.constant 1.000000e+00 : f32
    %247 = vector.broadcast %cst_69 : f32 to vector<2x256xf32>
    %248 = arith.addf %247, %246 : vector<2x256xf32>
    %249 = arith.divf %247, %248 : vector<2x256xf32>
    %250 = vector.extract_strided_slice %243 {offsets = [0, 256], sizes = [2, 256], strides = [1, 1]} : vector<2x1024xf32> to vector<2x256xf32>
    %251 = arith.negf %250 : vector<2x256xf32>
    %252 = math.exp %251 : vector<2x256xf32>
    %cst_70 = arith.constant 1.000000e+00 : f32
    %253 = vector.broadcast %cst_70 : f32 to vector<2x256xf32>
    %254 = arith.addf %253, %252 : vector<2x256xf32>
    %255 = arith.divf %253, %254 : vector<2x256xf32>
    %256 = vector.extract_strided_slice %243 {offsets = [0, 512], sizes = [2, 256], strides = [1, 1]} : vector<2x1024xf32> to vector<2x256xf32>
    %257 = math.tanh %256 : vector<2x256xf32>
    %258 = vector.extract_strided_slice %243 {offsets = [0, 768], sizes = [2, 256], strides = [1, 1]} : vector<2x1024xf32> to vector<2x256xf32>
    %259 = arith.negf %258 : vector<2x256xf32>
    %260 = math.exp %259 : vector<2x256xf32>
    %cst_71 = arith.constant 1.000000e+00 : f32
    %261 = vector.broadcast %cst_71 : f32 to vector<2x256xf32>
    %262 = arith.addf %261, %260 : vector<2x256xf32>
    %263 = arith.divf %261, %262 : vector<2x256xf32>
    %264 = arith.mulf %255, %237 : vector<2x256xf32>
    %265 = arith.mulf %249, %257 : vector<2x256xf32>
    %266 = arith.addf %264, %265 : vector<2x256xf32>
    %267 = math.tanh %266 : vector<2x256xf32>
    %268 = arith.mulf %263, %267 : vector<2x256xf32>
    %c0_72 = arith.constant 0 : index
    %c0_73 = arith.constant 0 : index
    %269 = vector.load %arg5[%c0_72, %c0_73] : memref<1x512xf32, #tpu.memory_space<vmem>>, vector<1x256xf32>
    %c0_74 = arith.constant 0 : index
    %c256 = arith.constant 256 : index
    %270 = vector.load %arg5[%c0_74, %c256] : memref<1x512xf32, #tpu.memory_space<vmem>>, vector<1x256xf32>
    %271 = vector.broadcast %269 : vector<1x256xf32> to vector<2x256xf32>
    %272 = arith.mulf %268, %271 : vector<2x256xf32>
    %cst_75 = arith.constant dense<0.000000e+00> : vector<2xf32>
    %273 = vector.multi_reduction <add>, %272, %cst_75 [1] : vector<2x256xf32> to vector<2xf32>
    %274 = vector.shape_cast %273 : vector<2xf32> to vector<2x1xf32>
    %275 = vector.broadcast %270 : vector<1x256xf32> to vector<2x256xf32>
    %276 = arith.mulf %65, %275 : vector<2x256xf32>
    %cst_76 = arith.constant dense<0.000000e+00> : vector<2xf32>
    %277 = vector.multi_reduction <add>, %276, %cst_76 [1] : vector<2x256xf32> to vector<2xf32>
    %278 = vector.shape_cast %277 : vector<2xf32> to vector<2x1xf32>
    %279 = arith.addf %274, %278 : vector<2x1xf32>
    %c0_77 = arith.constant 0 : index
    %c0_78 = arith.constant 0 : index
    %280 = vector.load %arg6[%c0_77, %c0_78] : memref<1x1xf32, #tpu.memory_space<vmem>>, vector<1x1xf32>
    %281 = vector.broadcast %280 : vector<1x1xf32> to vector<2x1xf32>
    %282 = arith.addf %279, %281 : vector<2x1xf32>
    %283 = arith.negf %282 : vector<2x1xf32>
    %284 = math.exp %283 : vector<2x1xf32>
    %cst_79 = arith.constant 1.000000e+00 : f32
    %285 = vector.broadcast %cst_79 : f32 to vector<2x1xf32>
    %286 = arith.addf %285, %284 : vector<2x1xf32>
    %287 = arith.divf %285, %286 : vector<2x1xf32>
    %c0_80 = arith.constant 0 : index
    %c0_81 = arith.constant 0 : index
    %288 = vector.load %arg7[%c0_80, %c0_81] : memref<2x1xf32, #tpu.memory_space<vmem>>, vector<2x1xf32>
    tpu.vector_store %arg7[%c0_80, %c0_81], %287 {strides = array<i32>} : memref<2x1xf32, #tpu.memory_space<vmem>>, vector<2x1xf32>,
    return
  }
}

</mosaic_0001>

<llo_original>
// kernel: forward.1
$region0: #{forward.1}
  #allocation0 [shape = 'u32[]', space=smem, size = 0x4, offset = 0x4, fixed_abs, tag = 'smem constant byte address 0x4 - core index']
  #allocation1 [shape = 'u32[144,128]{1,0:T(1,128)}', space=vmem, size = 0x12000, scoped, tag = 'internal scratch']
  #allocation2 [shape = 'f32[16,2048]{1,0:T(8,128)}', space=vmem, size = 0x20000, scoped, tag = 'scratch operand']
  #allocation3 [shape = 'f32[1,1]{1,0:T(1,128)S(1)}', space=vmem, size = 0x200, scoped, tag = 'scoped memory for forward.1']
  %s0 = inlined_call_operand.vmem [shape: f32[16,32], index: 0, kind: input, shape index: {}]
  %s1 = inlined_call_operand.hbm [shape: f32[32,2048], index: 1, kind: input, shape index: {}]
  %s2 = inlined_call_operand.vmem [shape: f32[1,2048], index: 2, kind: input, shape index: {}]
  %s3 = inlined_call_operand.hbm [shape: f32[256,1024], index: 3, kind: input, shape index: {}]
  %s4 = inlined_call_operand.hbm [shape: f32[256,1024], index: 4, kind: input, shape index: {}]
  %s5 = inlined_call_operand.vmem [shape: f32[1,512], index: 5, kind: input, shape index: {}]
  %s6 = inlined_call_operand.<no memory space> [shape: f32[1,1], index: 6, kind: input, shape index: {}]
  %s7 = inlined_call_operand.vmem [shape: f32[2,1], index: 7, kind: output, shape index: {}]
  %s8 = sld [smem:[#allocation0]]
  $region50: #{forward.1} parent=0
    _
  %s10 = ssub.s32 1, %s8
  %s11 = scalar_select 0, %s10, %s8
  %v12 = vstv %s6
  %13 = vst [vmem:[#allocation3] sm:$0x1] %v12
  $region1: #{forward.1} parent=0
    #allocation4 [shape = 'u8[262144]{0}', space=vmem, size = 0x40000, scoped, tag = 'input window, operand 1, single buffered']
    #allocation5 [shape = 's32[1]{0}', space=sflag, size = 0x4, scoped, tag = 'scoped memory for forward.1']
    #allocation6 [shape = 'u8[1048576]{0}', space=vmem, size = 0x100000, scoped, tag = 'input window, operand 3, single buffered']
    #allocation7 [shape = 's32[1]{0}', space=sflag, size = 0x4, scoped, tag = 'scoped memory for forward.1']
    #allocation8 [shape = 'u8[1048576]{0}', space=vmem, size = 0x100000, scoped, tag = 'input window, operand 4, single buffered']
    %14 = vsyncpa [#allocation5], 0
    %15 = vsyncpa [#allocation7], 0
    // Predicated region
    $region2: #{forward.1} parent=1 // pred_check
      _
    $region3: #{forward.1} parent=1 // pred_check_branch
      %17 = sbr.rel (0) target = $region5
    $region4: #{forward.1} parent=1 // pred_region
      _
    $region5: #{forward.1} parent=1 // pred_fallthru
      _
    // Predicated region
    $region6: #{forward.1} parent=1 // pred_check
      _
    $region7: #{forward.1} parent=1 // pred_check_branch
      %19 = sbr.rel (0) target = $region9
    $region8: #{forward.1} parent=1 // pred_region
      %s21 = ssub.s32 8192, 8192
      %22 = vsyncadd [#allocation5], %s21
      %s23 = sshll.u32 [#allocation4], 4
      %s24 = int_to_ptr.vmem [resolvable:$true] %s23
      %29 = dma.hbm_to_vmem [thread:$0]  %s1, 8192, %s24, [#allocation5], 2048, 2048, 128
    $region9: #{forward.1} parent=1 // pred_fallthru
      _
    // Predicated region
    $region10: #{forward.1} parent=1 // pred_check
      _
    $region11: #{forward.1} parent=1 // pred_check_branch
      %31 = sbr.rel (0) target = $region13
    $region12: #{forward.1} parent=1 // pred_region
      _
    $region13: #{forward.1} parent=1 // pred_fallthru
      _
    // Predicated region
    $region14: #{forward.1} parent=1 // pred_check
      _
    $region15: #{forward.1} parent=1 // pred_check_branch
      %33 = sbr.rel (0) target = $region17
    $region16: #{forward.1} parent=1 // pred_region
      %s35 = ssub.s32 32768, 32768
      %36 = vsyncadd [#allocation7], %s35
      %s37 = sshll.u32 [#allocation6], 4
      %s38 = int_to_ptr.vmem [resolvable:$true] %s37
      %43 = dma.hbm_to_vmem [thread:$0]  %s3, 32768, %s38, [#allocation7], 1024, 1024, 64
    $region17: #{forward.1} parent=1 // pred_fallthru
      _
    // Predicated region
    $region18: #{forward.1} parent=1 // pred_check
      _
    $region19: #{forward.1} parent=1 // pred_check_branch
      %45 = sbr.rel (0) target = $region21
    $region20: #{forward.1} parent=1 // pred_region
      %s47 = ssub.s32 32768, 32768
      %48 = vsyncadd [#allocation7], %s47
      %s49 = sshll.u32 [#allocation8], 4
      %s50 = int_to_ptr.vmem [resolvable:$true] %s49
      %55 = dma.hbm_to_vmem [thread:$0]  %s4, 32768, %s50, [#allocation7], 1024, 1024, 64
    $region21: #{forward.1} parent=1 // pred_fallthru
      _
    // Predicated region
    $region22: #{forward.1} parent=1 // pred_check
      _
    $region23: #{forward.1} parent=1 // pred_check_branch
      %57 = sbr.rel (0) target = $region25
    $region24: #{forward.1} parent=1 // pred_region
      _
    $region25: #{forward.1} parent=1 // pred_fallthru
      _
    // Predicated region
    $region26: #{forward.1} parent=1 // pred_check
      _
    $region27: #{forward.1} parent=1 // pred_check_branch
      %59 = sbr.rel (0) target = $region29
    $region28: #{forward.1} parent=1 // pred_region
      _
    $region29: #{forward.1} parent=1 // pred_fallthru
      _
    // Predicated region
    $region30: #{forward.1} parent=1 // pred_check
      _
    $region31: #{forward.1} parent=1 // pred_check_branch
      %61 = sbr.rel (0) target = $region33
    $region32: #{forward.1} parent=1 // pred_region
      %62 = dma.done [#allocation5], 8192
    $region33: #{forward.1} parent=1 // pred_fallthru
      _
    // Predicated region
    $region34: #{forward.1} parent=1 // pred_check
      _
    $region35: #{forward.1} parent=1 // pred_check_branch
      %64 = sbr.rel (0) target = $region37
    $region36: #{forward.1} parent=1 // pred_region
      %65 = dma.done [#allocation7], 32768
    $region37: #{forward.1} parent=1 // pred_fallthru
      _
    // Predicated region
    $region38: #{forward.1} parent=1 // pred_check
      _
    $region39: #{forward.1} parent=1 // pred_check_branch
      %67 = sbr.rel (0) target = $region41
    $region40: #{forward.1} parent=1 // pred_region
      %68 = dma.done [#allocation7], 32768
    $region41: #{forward.1} parent=1 // pred_fallthru
      _
    %v69 = vld [vmem:[%s0] sm:$0xff]
    %v70 = vld [vmem:[%s0 + $0x8] sm:$0xff]
    %v71 = vld [vmem:[#allocation4] sm:$0xff]
    %v72 = vld [vmem:[#allocation4 + $0x8] sm:$0xff]
    %v73 = vld [vmem:[#allocation4 + $0x10] sm:$0xff]
    %v74 = vld [vmem:[#allocation4 + $0x18] sm:$0xff]
    %v75 = vld [vmem:[#allocation4 + $0x20] sm:$0xff]
    %v76 = vld [vmem:[#allocation4 + $0x28] sm:$0xff]
    %v77 = vld [vmem:[#allocation4 + $0x30] sm:$0xff]
    %v78 = vld [vmem:[#allocation4 + $0x38] sm:$0xff]
    %v79 = vld [vmem:[#allocation4 + $0x40] sm:$0xff]
    %v80 = vld [vmem:[#allocation4 + $0x48] sm:$0xff]
    %v81 = vld [vmem:[#allocation4 + $0x50] sm:$0xff]
    %v82 = vld [vmem:[#allocation4 + $0x58] sm:$0xff]
    %v83 = vld [vmem:[#allocation4 + $0x60] sm:$0xff]
    %v84 = vld [vmem:[#allocation4 + $0x68] sm:$0xff]
    %v85 = vld [vmem:[#allocation4 + $0x70] sm:$0xff]
    %v86 = vld [vmem:[#allocation4 + $0x78] sm:$0xff]
    %v87 = vld [vmem:[#allocation4 + $0x80] sm:$0xff]
    %v88 = vld [vmem:[#allocation4 + $0x88] sm:$0xff]
    %v89 = vld [vmem:[#allocation4 + $0x90] sm:$0xff]
    %v90 = vld [vmem:[#allocation4 + $0x98] sm:$0xff]
    %v91 = vld [vmem:[#allocation4 + $0xa0] sm:$0xff]
    %v92 = vld [vmem:[#allocation4 + $0xa8] sm:$0xff]
    %v93 = vld [vmem:[#allocation4 + $0xb0] sm:$0xff]
    %v94 = vld [vmem:[#allocation4 + $0xb8] sm:$0xff]
    %v95 = vld [vmem:[#allocation4 + $0xc0] sm:$0xff]
    %v96 = vld [vmem:[#allocation4 + $0xc8] sm:$0xff]
    %v97 = vld [vmem:[#allocation4 + $0xd0] sm:$0xff]
    %v98 = vld [vmem:[#allocation4 + $0xd8] sm:$0xff]
    %v99 = vld [vmem:[#allocation4 + $0xe0] sm:$0xff]
    %v100 = vld [vmem:[#allocation4 + $0xe8] sm:$0xff]
    %v101 = vld [vmem:[#allocation4 + $0xf0] sm:$0xff]
    %v102 = vld [vmem:[#allocation4 + $0xf8] sm:$0xff]
    %v103 = vld [vmem:[#allocation4 + $0x100] sm:$0xff]
    %v104 = vld [vmem:[#allocation4 + $0x108] sm:$0xff]
    %v105 = vld [vmem:[#allocation4 + $0x110] sm:$0xff]
    %v106 = vld [vmem:[#allocation4 + $0x118] sm:$0xff]
    %v107 = vld [vmem:[#allocation4 + $0x120] sm:$0xff]
    %v108 = vld [vmem:[#allocation4 + $0x128] sm:$0xff]
    %v109 = vld [vmem:[#allocation4 + $0x130] sm:$0xff]
    %v110 = vld [vmem:[#allocation4 + $0x138] sm:$0xff]
    %v111 = vld [vmem:[#allocation4 + $0x140] sm:$0xff]
    %v112 = vld [vmem:[#allocation4 + $0x148] sm:$0xff]
    %v113 = vld [vmem:[#allocation4 + $0x150] sm:$0xff]
    %v114 = vld [vmem:[#allocation4 + $0x158] sm:$0xff]
    %v115 = vld [vmem:[#allocation4 + $0x160] sm:$0xff]
    %v116 = vld [vmem:[#allocation4 + $0x168] sm:$0xff]
    %v117 = vld [vmem:[#allocation4 + $0x170] sm:$0xff]
    %v118 = vld [vmem:[#allocation4 + $0x178] sm:$0xff]
    %v119 = vld [vmem:[#allocation4 + $0x180] sm:$0xff]
    %v120 = vld [vmem:[#allocation4 + $0x188] sm:$0xff]
    %v121 = vld [vmem:[#allocation4 + $0x190] sm:$0xff]
    %v122 = vld [vmem:[#allocation4 + $0x198] sm:$0xff]
    %v123 = vld [vmem:[#allocation4 + $0x1a0] sm:$0xff]
    %v124 = vld [vmem:[#allocation4 + $0x1a8] sm:$0xff]
    %v125 = vld [vmem:[#allocation4 + $0x1b0] sm:$0xff]
    %v126 = vld [vmem:[#allocation4 + $0x1b8] sm:$0xff]
    %v127 = vld [vmem:[#allocation4 + $0x1c0] sm:$0xff]
    %v128 = vld [vmem:[#allocation4 + $0x1c8] sm:$0xff]
    %v129 = vld [vmem:[#allocation4 + $0x1d0] sm:$0xff]
    %v130 = vld [vmem:[#allocation4 + $0x1d8] sm:$0xff]
    %v131 = vld [vmem:[#allocation4 + $0x1e0] sm:$0xff]
    %v132 = vld [vmem:[#allocation4 + $0x1e8] sm:$0xff]
    %v133 = vld [vmem:[#allocation4 + $0x1f0] sm:$0xff]
    %v134 = vld [vmem:[#allocation4 + $0x1f8] sm:$0xff]
    %v135 = vld [vmem:[%s2] sm:$0xff]
    %v136 = vld [vmem:[%s2 + $0x8] sm:$0xff]
    %v139 = vlaneseq
    %v140 = vshrl.u32 %v139, 7
    %v141 = vsub.s32 0, %v140
    %v142 = vrot.slane %v135, %v141
    %v143 = vlaneseq
    %v144 = vshrl.u32 %v143, 7
    %v145 = vsub.s32 1, %v144
    %v146 = vrot.slane %v135, %v145
    %v147 = vlaneseq
    %v148 = vshrl.u32 %v147, 7
    %v149 = vsub.s32 2, %v148
    %v150 = vrot.slane %v135, %v149
    %v151 = vlaneseq
    %v152 = vshrl.u32 %v151, 7
    %v153 = vsub.s32 3, %v152
    %v154 = vrot.slane %v135, %v153
    %v155 = vlaneseq
    %v156 = vshrl.u32 %v155, 7
    %v157 = vsub.s32 4, %v156
    %v158 = vrot.slane %v135, %v157
    %v159 = vlaneseq
    %v160 = vshrl.u32 %v159, 7
    %v161 = vsub.s32 5, %v160
    %v162 = vrot.slane %v135, %v161
    %v163 = vlaneseq
    %v164 = vshrl.u32 %v163, 7
    %v165 = vsub.s32 6, %v164
    %v166 = vrot.slane %v135, %v165
    %v167 = vlaneseq
    %v168 = vshrl.u32 %v167, 7
    %v169 = vsub.s32 7, %v168
    %v170 = vrot.slane %v135, %v169
    %v171 = vlaneseq
    %v172 = vshrl.u32 %v171, 7
    %v173 = vsub.s32 0, %v172
    %v174 = vrot.slane %v136, %v173
    %v175 = vlaneseq
    %v176 = vshrl.u32 %v175, 7
    %v177 = vsub.s32 1, %v176
    %v178 = vrot.slane %v136, %v177
    %v179 = vlaneseq
    %v180 = vshrl.u32 %v179, 7
    %v181 = vsub.s32 2, %v180
    %v182 = vrot.slane %v136, %v181
    %v183 = vlaneseq
    %v184 = vshrl.u32 %v183, 7
    %v185 = vsub.s32 3, %v184
    %v186 = vrot.slane %v136, %v185
    %v187 = vlaneseq
    %v188 = vshrl.u32 %v187, 7
    %v189 = vsub.s32 4, %v188
    %v190 = vrot.slane %v136, %v189
    %v191 = vlaneseq
    %v192 = vshrl.u32 %v191, 7
    %v193 = vsub.s32 5, %v192
    %v194 = vrot.slane %v136, %v193
    %v195 = vlaneseq
    %v196 = vshrl.u32 %v195, 7
    %v197 = vsub.s32 6, %v196
    %v198 = vrot.slane %v136, %v197
    %v199 = vlaneseq
    %v200 = vshrl.u32 %v199, 7
    %v201 = vsub.s32 7, %v200
    %v202 = vrot.slane %v136, %v201
    %vm219 = vcmask 261120
    %v221 = vsel %vm219, %v69, 0
    %v224 = vsel %vm219, %v70, 0
    %226 = vmatprep.subr.mxu0 %v72
    %227 = vmatpush1.msra.mxu0 %v71
    %228 = vmatprep.subr.mxu0 %v88
    %229 = vmatpush1.msra.mxu0 %v87
    %230 = vmatprep.subr.mxu0 %v104
    %231 = vmatpush1.msra.mxu0 %v103
    %232 = vmatprep.subr.mxu0 %v120
    %233 = vmatpush1.msra.mxu0 %v119
    %234 = vmatprep.subr.mxu0 0.0
    %235 = vmatpush1.msra.mxu0 0.0
    %236 = vmatprep.subr.mxu0 0.0
    %237 = vmatpush1.msra.mxu0 0.0
    %238 = vmatprep.subr.mxu0 0.0
    %239 = vmatpush1.msra.mxu0 0.0
    %240 = vmatprep.subr.mxu0 0.0
    %241 = vmatpush1.msra.mxu0 0.0
    %242 = vmatprep.subr.mxu0 0.0
    %243 = vmatpush1.msra.mxu0 0.0
    %244 = vmatprep.subr.mxu0 0.0
    %245 = vmatpush1.msra.mxu0 0.0
    %246 = vmatprep.subr.mxu0 0.0
    %247 = vmatpush1.msra.mxu0 0.0
    %248 = vmatprep.subr.mxu0 0.0
    %249 = vmatpush1.msra.mxu0 0.0
    %250 = vmatprep.subr.mxu0 0.0
    %251 = vmatpush1.msra.mxu0 0.0
    %252 = vmatprep.subr.mxu0 0.0
    %253 = vmatpush1.msra.mxu0 0.0
    %254 = vmatprep.subr.mxu0 0.0
    %255 = vmatpush1.msra.mxu0 0.0
    %256 = vmatprep.subr.mxu0 0.0
    %257 = vmatpush1.msra.mxu0 0.0
    %258 = vmatprep.subr.mxu0 0.0
    %259 = vmatpush1.msra.mxu0 0.0
    %260 = vmatprep.subr.mxu0 0.0
    %261 = vmatpush1.msra.mxu0 0.0
    %262 = vmatprep.subr.mxu0 0.0
    %263 = vmatpush1.msra.mxu0 0.0
    %264 = vmatprep.subr.mxu0 0.0
    %265 = vmatpush1.msra.mxu0 0.0
    %266 = vmatprep.subr.mxu0 0.0
    %267 = vmatpush1.msra.mxu0 0.0
    %268 = vmatprep.subr.mxu0 0.0
    %269 = vmatpush1.msra.mxu0 0.0
    %270 = vmatprep.subr.mxu0 0.0
    %271 = vmatpush1.msra.mxu0 0.0
    %272 = vmatprep.subr.mxu0 0.0
    %273 = vmatpush1.msra.mxu0 0.0
    %274 = vmatprep.subr.mxu0 0.0
    %275 = vmatpush1.msra.mxu0 0.0
    %276 = vmatprep.subr.mxu0 0.0
    %277 = vmatpush1.msra.mxu0 0.0
    %278 = vmatprep.subr.mxu0 0.0
    %279 = vmatpush1.msra.mxu0 0.0
    %280 = vmatprep.subr.mxu0 0.0
    %281 = vmatpush1.msra.mxu0 0.0
    %282 = vmatprep.subr.mxu0 0.0
    %283 = vmatpush1.msra.mxu0 0.0
    %284 = vmatprep.subr.mxu0 0.0
    %285 = vmatpush1.msra.mxu0 0.0
    %286 = vmatprep.subr.mxu0 0.0
    %287 = vmatpush1.msra.mxu0 0.0
    %288 = vmatprep.subr.mxu0 0.0
    %289 = vmatpush1.msra.mxu0 0.0
    %290 = vmatprep.mubr.f32.mxu0 0.0
    %291 = vmatmul.mubr.f32.gmra.mrb[0].mxu0 %v221
    %v292 = vpop.f32.mrb[0].mxu0
    %v293 = vadd.f32 %v142, %v292
    %v294 = vpop.f32.mrb[0].mxu0
    %v295 = vadd.f32 %v146, %v294
    %296 = vmatprep.mubr.f32.mxu0 0.0
    %297 = vmatmul.mubr.f32.gmra.mrb[0].mxu0 %v224
    %v298 = vpop.f32.mrb[0].mxu0
    %v299 = vadd.f32 %v142, %v298
    %v300 = vpop.f32.mrb[0].mxu0
    %v301 = vadd.f32 %v146, %v300
    %302 = vdwg.mxu0
    %303 = vmatprep.subr.mxu0 %v74
    %304 = vmatpush1.msra.mxu0 %v73
    %305 = vmatprep.subr.mxu0 %v90
    %306 = vmatpush1.msra.mxu0 %v89
    %307 = vmatprep.subr.mxu0 %v106
    %308 = vmatpush1.msra.mxu0 %v105
    %309 = vmatprep.subr.mxu0 %v122
    %310 = vmatpush1.msra.mxu0 %v121
    %311 = vmatprep.subr.mxu0 0.0
    %312 = vmatpush1.msra.mxu0 0.0
    %313 = vmatprep.subr.mxu0 0.0
    %314 = vmatpush1.msra.mxu0 0.0
    %315 = vmatprep.subr.mxu0 0.0
    %316 = vmatpush1.msra.mxu0 0.0
    %317 = vmatprep.subr.mxu0 0.0
    %318 = vmatpush1.msra.mxu0 0.0
    %319 = vmatprep.subr.mxu0 0.0
    %320 = vmatpush1.msra.mxu0 0.0
    %321 = vmatprep.subr.mxu0 0.0
    %322 = vmatpush1.msra.mxu0 0.0
    %323 = vmatprep.subr.mxu0 0.0
    %324 = vmatpush1.msra.mxu0 0.0
    %325 = vmatprep.subr.mxu0 0.0
    %326 = vmatpush1.msra.mxu0 0.0
    %327 = vmatprep.subr.mxu0 0.0
    %328 = vmatpush1.msra.mxu0 0.0
    %329 = vmatprep.subr.mxu0 0.0
    %330 = vmatpush1.msra.mxu0 0.0
    %331 = vmatprep.subr.mxu0 0.0
    %332 = vmatpush1.msra.mxu0 0.0
    %333 = vmatprep.subr.mxu0 0.0
    %334 = vmatpush1.msra.mxu0 0.0
    %335 = vmatprep.subr.mxu0 0.0
    %336 = vmatpush1.msra.mxu0 0.0
    %337 = vmatprep.subr.mxu0 0.0
    %338 = vmatpush1.msra.mxu0 0.0
    %339 = vmatprep.subr.mxu0 0.0
    %340 = vmatpush1.msra.mxu0 0.0
    %341 = vmatprep.subr.mxu0 0.0
    %342 = vmatpush1.msra.mxu0 0.0
    %343 = vmatprep.subr.mxu0 0.0
    %344 = vmatpush1.msra.mxu0 0.0
    %345 = vmatprep.subr.mxu0 0.0
    %346 = vmatpush1.msra.mxu0 0.0
    %347 = vmatprep.subr.mxu0 0.0
    %348 = vmatpush1.msra.mxu0 0.0
    %349 = vmatprep.subr.mxu0 0.0
    %350 = vmatpush1.msra.mxu0 0.0
    %351 = vmatprep.subr.mxu0 0.0
    %352 = vmatpush1.msra.mxu0 0.0
    %353 = vmatprep.subr.mxu0 0.0
    %354 = vmatpush1.msra.mxu0 0.0
    %355 = vmatprep.subr.mxu0 0.0
    %356 = vmatpush1.msra.mxu0 0.0
    %357 = vmatprep.subr.mxu0 0.0
    %358 = vmatpush1.msra.mxu0 0.0
    %359 = vmatprep.subr.mxu0 0.0
    %360 = vmatpush1.msra.mxu0 0.0
    %361 = vmatprep.subr.mxu0 0.0
    %362 = vmatpush1.msra.mxu0 0.0
    %363 = vmatprep.subr.mxu0 0.0
    %364 = vmatpush1.msra.mxu0 0.0
    %365 = vmatprep.subr.mxu0 0.0
    %366 = vmatpush1.msra.mxu0 0.0
    %367 = vmatprep.mubr.f32.mxu0 0.0
    %368 = vmatmul.mubr.f32.gmra.mrb[0].mxu0 %v221
    %v369 = vpop.f32.mrb[0].mxu0
    %v370 = vadd.f32 %v150, %v369
    %v371 = vpop.f32.mrb[0].mxu0
    %v372 = vadd.f32 %v154, %v371
    %373 = vmatprep.mubr.f32.mxu0 0.0
    %374 = vmatmul.mubr.f32.gmra.mrb[0].mxu0 %v224
    %v375 = vpop.f32.mrb[0].mxu0
    %v376 = vadd.f32 %v150, %v375
    %v377 = vpop.f32.mrb[0].mxu0
    %v378 = vadd.f32 %v154, %v377
    %379 = vdwg.mxu0
    %380 = vmatprep.subr.mxu0 %v76
    %381 = vmatpush1.msra.mxu0 %v75
    %382 = vmatprep.subr.mxu0 %v92
    %383 = vmatpush1.msra.mxu0 %v91
    %384 = vmatprep.subr.mxu0 %v108
    %385 = vmatpush1.msra.mxu0 %v107
    %386 = vmatprep.subr.mxu0 %v124
    %387 = vmatpush1.msra.mxu0 %v123
    %388 = vmatprep.subr.mxu0 0.0
    %389 = vmatpush1.msra.mxu0 0.0
    %390 = vmatprep.subr.mxu0 0.0
    %391 = vmatpush1.msra.mxu0 0.0
    %392 = vmatprep.subr.mxu0 0.0
    %393 = vmatpush1.msra.mxu0 0.0
    %394 = vmatprep.subr.mxu0 0.0
    %395 = vmatpush1.msra.mxu0 0.0
    %396 = vmatprep.subr.mxu0 0.0
    %397 = vmatpush1.msra.mxu0 0.0
    %398 = vmatprep.subr.mxu0 0.0
    %399 = vmatpush1.msra.mxu0 0.0
    %400 = vmatprep.subr.mxu0 0.0
    %401 = vmatpush1.msra.mxu0 0.0
    %402 = vmatprep.subr.mxu0 0.0
    %403 = vmatpush1.msra.mxu0 0.0
    %404 = vmatprep.subr.mxu0 0.0
    %405 = vmatpush1.msra.mxu0 0.0
    %406 = vmatprep.subr.mxu0 0.0
    %407 = vmatpush1.msra.mxu0 0.0
    %408 = vmatprep.subr.mxu0 0.0
    %409 = vmatpush1.msra.mxu0 0.0
    %410 = vmatprep.subr.mxu0 0.0
    %411 = vmatpush1.msra.mxu0 0.0
    %412 = vmatprep.subr.mxu0 0.0
    %413 = vmatpush1.msra.mxu0 0.0
    %414 = vmatprep.subr.mxu0 0.0
    %415 = vmatpush1.msra.mxu0 0.0
    %416 = vmatprep.subr.mxu0 0.0
    %417 = vmatpush1.msra.mxu0 0.0
    %418 = vmatprep.subr.mxu0 0.0
    %419 = vmatpush1.msra.mxu0 0.0
    %420 = vmatprep.subr.mxu0 0.0
    %421 = vmatpush1.msra.mxu0 0.0
    %422 = vmatprep.subr.mxu0 0.0
    %423 = vmatpush1.msra.mxu0 0.0
    %424 = vmatprep.subr.mxu0 0.0
    %425 = vmatpush1.msra.mxu0 0.0
    %426 = vmatprep.subr.mxu0 0.0
    %427 = vmatpush1.msra.mxu0 0.0
    %428 = vmatprep.subr.mxu0 0.0
    %429 = vmatpush1.msra.mxu0 0.0
    %430 = vmatprep.subr.mxu0 0.0
    %431 = vmatpush1.msra.mxu0 0.0
    %432 = vmatprep.subr.mxu0 0.0
    %433 = vmatpush1.msra.mxu0 0.0
    %434 = vmatprep.subr.mxu0 0.0
    %435 = vmatpush1.msra.mxu0 0.0
    %436 = vmatprep.subr.mxu0 0.0
    %437 = vmatpush1.msra.mxu0 0.0
    %438 = vmatprep.subr.mxu0 0.0
    %439 = vmatpush1.msra.mxu0 0.0
    %440 = vmatprep.subr.mxu0 0.0
    %441 = vmatpush1.msra.mxu0 0.0
    %442 = vmatprep.subr.mxu0 0.0
    %443 = vmatpush1.msra.mxu0 0.0
    %444 = vmatprep.mubr.f32.mxu0 0.0
    %445 = vmatmul.mubr.f32.gmra.mrb[0].mxu0 %v221
    %v446 = vpop.f32.mrb[0].mxu0
    %v447 = vadd.f32 %v158, %v446
    %v448 = vpop.f32.mrb[0].mxu0
    %v449 = vadd.f32 %v162, %v448
    %450 = vmatprep.mubr.f32.mxu0 0.0
    %451 = vmatmul.mubr.f32.gmra.mrb[0].mxu0 %v224
    %v452 = vpop.f32.mrb[0].mxu0
    %v453 = vadd.f32 %v158, %v452
    %v454 = vpop.f32.mrb[0].mxu0
    %v455 = vadd.f32 %v162, %v454
    %456 = vdwg.mxu0
    %457 = vmatprep.subr.mxu0 %v78
    %458 = vmatpush1.msra.mxu0 %v77
    %459 = vmatprep.subr.mxu0 %v94
    %460 = vmatpush1.msra.mxu0 %v93
    %461 = vmatprep.subr.mxu0 %v110
    %462 = vmatpush1.msra.mxu0 %v109
    %463 = vmatprep.subr.mxu0 %v126
    %464 = vmatpush1.msra.mxu0 %v125
    %465 = vmatprep.subr.mxu0 0.0
    %466 = vmatpush1.msra.mxu0 0.0
    %467 = vmatprep.subr.mxu0 0.0
    %468 = vmatpush1.msra.mxu0 0.0
    %469 = vmatprep.subr.mxu0 0.0
    %470 = vmatpush1.msra.mxu0 0.0
    %471 = vmatprep.subr.mxu0 0.0
    %472 = vmatpush1.msra.mxu0 0.0
    %473 = vmatprep.subr.mxu0 0.0
    %474 = vmatpush1.msra.mxu0 0.0
    %475 = vmatprep.subr.mxu0 0.0
    %476 = vmatpush1.msra.mxu0 0.0
    %477 = vmatprep.subr.mxu0 0.0
    %478 = vmatpush1.msra.mxu0 0.0
    %479 = vmatprep.subr.mxu0 0.0
    %480 = vmatpush1.msra.mxu0 0.0
    %481 = vmatprep.subr.mxu0 0.0
    %482 = vmatpush1.msra.mxu0 0.0
    %483 = vmatprep.subr.mxu0 0.0
    %484 = vmatpush1.msra.mxu0 0.0
    %485 = vmatprep.subr.mxu0 0.0
    %486 = vmatpush1.msra.mxu0 0.0
    %487 = vmatprep.subr.mxu0 0.0
    %488 = vmatpush1.msra.mxu0 0.0
    %489 = vmatprep.subr.mxu0 0.0
    %490 = vmatpush1.msra.mxu0 0.0
    %491 = vmatprep.subr.mxu0 0.0
    %492 = vmatpush1.msra.mxu0 0.0
    %493 = vmatprep.subr.mxu0 0.0
    %494 = vmatpush1.msra.mxu0 0.0
    %495 = vmatprep.subr.mxu0 0.0
    %496 = vmatpush1.msra.mxu0 0.0
    %497 = vmatprep.subr.mxu0 0.0
    %498 = vmatpush1.msra.mxu0 0.0
    %499 = vmatprep.subr.mxu0 0.0
    %500 = vmatpush1.msra.mxu0 0.0
    %501 = vmatprep.subr.mxu0 0.0
    %502 = vmatpush1.msra.mxu0 0.0
    %503 = vmatprep.subr.mxu0 0.0
    %504 = vmatpush1.msra.mxu0 0.0
    %505 = vmatprep.subr.mxu0 0.0
    %506 = vmatpush1.msra.mxu0 0.0
    %507 = vmatprep.subr.mxu0 0.0
    %508 = vmatpush1.msra.mxu0 0.0
    %509 = vmatprep.subr.mxu0 0.0
    %510 = vmatpush1.msra.mxu0 0.0
    %511 = vmatprep.subr.mxu0 0.0
    %512 = vmatpush1.msra.mxu0 0.0
    %513 = vmatprep.subr.mxu0 0.0
    %514 = vmatpush1.msra.mxu0 0.0
    %515 = vmatprep.subr.mxu0 0.0
    %516 = vmatpush1.msra.mxu0 0.0
    %517 = vmatprep.subr.mxu0 0.0
    %518 = vmatpush1.msra.mxu0 0.0
    %519 = vmatprep.subr.mxu0 0.0
    %520 = vmatpush1.msra.mxu0 0.0
    %521 = vmatprep.mubr.f32.mxu0 0.0
    %522 = vmatmul.mubr.f32.gmra.mrb[0].mxu0 %v221
    %v523 = vpop.f32.mrb[0].mxu0
    %v524 = vadd.f32 %v166, %v523
    %v525 = vpop.f32.mrb[0].mxu0
    %v526 = vadd.f32 %v170, %v525
    %527 = vmatprep.mubr.f32.mxu0 0.0
    %528 = vmatmul.mubr.f32.gmra.mrb[0].mxu0 %v224
    %v529 = vpop.f32.mrb[0].mxu0
    %v530 = vadd.f32 %v166, %v529
    %v531 = vpop.f32.mrb[0].mxu0
    %v532 = vadd.f32 %v170, %v531
    %533 = vdwg.mxu0
    %534 = vmatprep.subr.mxu0 %v80
    %535 = vmatpush1.msra.mxu0 %v79
    %536 = vmatprep.subr.mxu0 %v96
    %537 = vmatpush1.msra.mxu0 %v95
    %538 = vmatprep.subr.mxu0 %v112
    %539 = vmatpush1.msra.mxu0 %v111
    %540 = vmatprep.subr.mxu0 %v128
    %541 = vmatpush1.msra.mxu0 %v127
    %542 = vmatprep.subr.mxu0 0.0
    %543 = vmatpush1.msra.mxu0 0.0
    %544 = vmatprep.subr.mxu0 0.0
    %545 = vmatpush1.msra.mxu0 0.0
    %546 = vmatprep.subr.mxu0 0.0
    %547 = vmatpush1.msra.mxu0 0.0
    %548 = vmatprep.subr.mxu0 0.0
    %549 = vmatpush1.msra.mxu0 0.0
    %550 = vmatprep.subr.mxu0 0.0
    %551 = vmatpush1.msra.mxu0 0.0
    %552 = vmatprep.subr.mxu0 0.0
    %553 = vmatpush1.msra.mxu0 0.0
    %554 = vmatprep.subr.mxu0 0.0
    %555 = vmatpush1.msra.mxu0 0.0
    %556 = vmatprep.subr.mxu0 0.0
    %557 = vmatpush1.msra.mxu0 0.0
    %558 = vmatprep.subr.mxu0 0.0
    %559 = vmatpush1.msra.mxu0 0.0
    %560 = vmatprep.subr.mxu0 0.0
    %561 = vmatpush1.msra.mxu0 0.0
    %562 = vmatprep.subr.mxu0 0.0
    %563 = vmatpush1.msra.mxu0 0.0
    %564 = vmatprep.subr.mxu0 0.0
    %565 = vmatpush1.msra.mxu0 0.0
    %566 = vmatprep.subr.mxu0 0.0
    %567 = vmatpush1.msra.mxu0 0.0
    %568 = vmatprep.subr.mxu0 0.0
    %569 = vmatpush1.msra.mxu0 0.0
    %570 = vmatprep.subr.mxu0 0.0
    %571 = vmatpush1.msra.mxu0 0.0
    %572 = vmatprep.subr.mxu0 0.0
    %573 = vmatpush1.msra.mxu0 0.0
    %574 = vmatprep.subr.mxu0 0.0
    %575 = vmatpush1.msra.mxu0 0.0
    %576 = vmatprep.subr.mxu0 0.0
    %577 = vmatpush1.msra.mxu0 0.0
    %578 = vmatprep.subr.mxu0 0.0
    %579 = vmatpush1.msra.mxu0 0.0
    %580 = vmatprep.subr.mxu0 0.0
    %581 = vmatpush1.msra.mxu0 0.0
    %582 = vmatprep.subr.mxu0 0.0
    %583 = vmatpush1.msra.mxu0 0.0
    %584 = vmatprep.subr.mxu0 0.0
    %585 = vmatpush1.msra.mxu0 0.0
    %586 = vmatprep.subr.mxu0 0.0
    %587 = vmatpush1.msra.mxu0 0.0
    %588 = vmatprep.subr.mxu0 0.0
    %589 = vmatpush1.msra.mxu0 0.0
    %590 = vmatprep.subr.mxu0 0.0
    %591 = vmatpush1.msra.mxu0 0.0
    %592 = vmatprep.subr.mxu0 0.0
    %593 = vmatpush1.msra.mxu0 0.0
    %594 = vmatprep.subr.mxu0 0.0
    %595 = vmatpush1.msra.mxu0 0.0
    %596 = vmatprep.subr.mxu0 0.0
    %597 = vmatpush1.msra.mxu0 0.0
    %598 = vmatprep.mubr.f32.mxu0 0.0
    %599 = vmatmul.mubr.f32.gmra.mrb[0].mxu0 %v221
    %v600 = vpop.f32.mrb[0].mxu0
    %v601 = vadd.f32 %v174, %v600
    %v602 = vpop.f32.mrb[0].mxu0
    %v603 = vadd.f32 %v178, %v602
    %604 = vmatprep.mubr.f32.mxu0 0.0
    %605 = vmatmul.mubr.f32.gmra.mrb[0].mxu0 %v224
    %v606 = vpop.f32.mrb[0].mxu0
    %v607 = vadd.f32 %v174, %v606
    %v608 = vpop.f32.mrb[0].mxu0
    %v609 = vadd.f32 %v178, %v608
    %610 = vdwg.mxu0
    %611 = vmatprep.subr.mxu0 %v82
    %612 = vmatpush1.msra.mxu0 %v81
    %613 = vmatprep.subr.mxu0 %v98
    %614 = vmatpush1.msra.mxu0 %v97
    %615 = vmatprep.subr.mxu0 %v114
    %616 = vmatpush1.msra.mxu0 %v113
    %617 = vmatprep.subr.mxu0 %v130
    %618 = vmatpush1.msra.mxu0 %v129
    %619 = vmatprep.subr.mxu0 0.0
    %620 = vmatpush1.msra.mxu0 0.0
    %621 = vmatprep.subr.mxu0 0.0
    %622 = vmatpush1.msra.mxu0 0.0
    %623 = vmatprep.subr.mxu0 0.0
    %624 = vmatpush1.msra.mxu0 0.0
    %625 = vmatprep.subr.mxu0 0.0
    %626 = vmatpush1.msra.mxu0 0.0
    %627 = vmatprep.subr.mxu0 0.0
    %628 = vmatpush1.msra.mxu0 0.0
    %629 = vmatprep.subr.mxu0 0.0
    %630 = vmatpush1.msra.mxu0 0.0
    %631 = vmatprep.subr.mxu0 0.0
    %632 = vmatpush1.msra.mxu0 0.0
    %633 = vmatprep.subr.mxu0 0.0
    %634 = vmatpush1.msra.mxu0 0.0
    %635 = vmatprep.subr.mxu0 0.0
    %636 = vmatpush1.msra.mxu0 0.0
    %637 = vmatprep.subr.mxu0 0.0
    %638 = vmatpush1.msra.mxu0 0.0
    %639 = vmatprep.subr.mxu0 0.0
    %640 = vmatpush1.msra.mxu0 0.0
    %641 = vmatprep.subr.mxu0 0.0
    %642 = vmatpush1.msra.mxu0 0.0
    %643 = vmatprep.subr.mxu0 0.0
    %644 = vmatpush1.msra.mxu0 0.0
    %645 = vmatprep.subr.mxu0 0.0
    %646 = vmatpush1.msra.mxu0 0.0
    %647 = vmatprep.subr.mxu0 0.0
    %648 = vmatpush1.msra.mxu0 0.0
    %649 = vmatprep.subr.mxu0 0.0
    %650 = vmatpush1.msra.mxu0 0.0
    %651 = vmatprep.subr.mxu0 0.0
    %652 = vmatpush1.msra.mxu0 0.0
    %653 = vmatprep.subr.mxu0 0.0
    %654 = vmatpush1.msra.mxu0 0.0
    %655 = vmatprep.subr.mxu0 0.0
    %656 = vmatpush1.msra.mxu0 0.0
    %657 = vmatprep.subr.mxu0 0.0
    %658 = vmatpush1.msra.mxu0 0.0
    %659 = vmatprep.subr.mxu0 0.0
    %660 = vmatpush1.msra.mxu0 0.0
    %661 = vmatprep.subr.mxu0 0.0
    %662 = vmatpush1.msra.mxu0 0.0
    %663 = vmatprep.subr.mxu0 0.0
    %664 = vmatpush1.msra.mxu0 0.0
    %665 = vmatprep.subr.mxu0 0.0
    %666 = vmatpush1.msra.mxu0 0.0
    %667 = vmatprep.subr.mxu0 0.0
    %668 = vmatpush1.msra.mxu0 0.0
    %669 = vmatprep.subr.mxu0 0.0
    %670 = vmatpush1.msra.mxu0 0.0
    %671 = vmatprep.subr.mxu0 0.0
    %672 = vmatpush1.msra.mxu0 0.0
    %673 = vmatprep.subr.mxu0 0.0
    %674 = vmatpush1.msra.mxu0 0.0
    %675 = vmatprep.mubr.f32.mxu0 0.0
    %676 = vmatmul.mubr.f32.gmra.mrb[0].mxu0 %v221
    %v677 = vpop.f32.mrb[0].mxu0
    %v678 = vadd.f32 %v182, %v677
    %v679 = vpop.f32.mrb[0].mxu0
    %v680 = vadd.f32 %v186, %v679
    %681 = vmatprep.mubr.f32.mxu0 0.0
    %682 = vmatmul.mubr.f32.gmra.mrb[0].mxu0 %v224
    %v683 = vpop.f32.mrb[0].mxu0
    %v684 = vadd.f32 %v182, %v683
    %v685 = vpop.f32.mrb[0].mxu0
    %v686 = vadd.f32 %v186, %v685
    %687 = vdwg.mxu0
    %688 = vmatprep.subr.mxu0 %v84
    %689 = vmatpush1.msra.mxu0 %v83
    %690 = vmatprep.subr.mxu0 %v100
    %691 = vmatpush1.msra.mxu0 %v99
    %692 = vmatprep.subr.mxu0 %v116
    %693 = vmatpush1.msra.mxu0 %v115
    %694 = vmatprep.subr.mxu0 %v132
    %695 = vmatpush1.msra.mxu0 %v131
    %696 = vmatprep.subr.mxu0 0.0
    %697 = vmatpush1.msra.mxu0 0.0
    %698 = vmatprep.subr.mxu0 0.0
    %699 = vmatpush1.msra.mxu0 0.0
    %700 = vmatprep.subr.mxu0 0.0
    %701 = vmatpush1.msra.mxu0 0.0
    %702 = vmatprep.subr.mxu0 0.0
    %703 = vmatpush1.msra.mxu0 0.0
    %704 = vmatprep.subr.mxu0 0.0
    %705 = vmatpush1.msra.mxu0 0.0
    %706 = vmatprep.subr.mxu0 0.0
    %707 = vmatpush1.msra.mxu0 0.0
    %708 = vmatprep.subr.mxu0 0.0
    %709 = vmatpush1.msra.mxu0 0.0
    %710 = vmatprep.subr.mxu0 0.0
    %711 = vmatpush1.msra.mxu0 0.0
    %712 = vmatprep.subr.mxu0 0.0
    %713 = vmatpush1.msra.mxu0 0.0
    %714 = vmatprep.subr.mxu0 0.0
    %715 = vmatpush1.msra.mxu0 0.0
    %716 = vmatprep.subr.mxu0 0.0
    %717 = vmatpush1.msra.mxu0 0.0
    %718 = vmatprep.subr.mxu0 0.0
    %719 = vmatpush1.msra.mxu0 0.0
    %720 = vmatprep.subr.mxu0 0.0
    %721 = vmatpush1.msra.mxu0 0.0
    %722 = vmatprep.subr.mxu0 0.0
    %723 = vmatpush1.msra.mxu0 0.0
    %724 = vmatprep.subr.mxu0 0.0
    %725 = vmatpush1.msra.mxu0 0.0
    %726 = vmatprep.subr.mxu0 0.0
    %727 = vmatpush1.msra.mxu0 0.0
    %728 = vmatprep.subr.mxu0 0.0
    %729 = vmatpush1.msra.mxu0 0.0
    %730 = vmatprep.subr.mxu0 0.0
    %731 = vmatpush1.msra.mxu0 0.0
    %732 = vmatprep.subr.mxu0 0.0
    %733 = vmatpush1.msra.mxu0 0.0
    %734 = vmatprep.subr.mxu0 0.0
    %735 = vmatpush1.msra.mxu0 0.0
    %736 = vmatprep.subr.mxu0 0.0
    %737 = vmatpush1.msra.mxu0 0.0
    %738 = vmatprep.subr.mxu0 0.0
    %739 = vmatpush1.msra.mxu0 0.0
    %740 = vmatprep.subr.mxu0 0.0
    %741 = vmatpush1.msra.mxu0 0.0
    %742 = vmatprep.subr.mxu0 0.0
    %743 = vmatpush1.msra.mxu0 0.0
    %744 = vmatprep.subr.mxu0 0.0
    %745 = vmatpush1.msra.mxu0 0.0
    %746 = vmatprep.subr.mxu0 0.0
    %747 = vmatpush1.msra.mxu0 0.0
    %748 = vmatprep.subr.mxu0 0.0
    %749 = vmatpush1.msra.mxu0 0.0
    %750 = vmatprep.subr.mxu0 0.0
    %751 = vmatpush1.msra.mxu0 0.0
    %752 = vmatprep.mubr.f32.mxu0 0.0
    %753 = vmatmul.mubr.f32.gmra.mrb[0].mxu0 %v221
    %v754 = vpop.f32.mrb[0].mxu0
    %v755 = vadd.f32 %v190, %v754
    %v756 = vpop.f32.mrb[0].mxu0
    %v757 = vadd.f32 %v194, %v756
    %758 = vmatprep.mubr.f32.mxu0 0.0
    %759 = vmatmul.mubr.f32.gmra.mrb[0].mxu0 %v224
    %v760 = vpop.f32.mrb[0].mxu0
    %v761 = vadd.f32 %v190, %v760
    %v762 = vpop.f32.mrb[0].mxu0
    %v763 = vadd.f32 %v194, %v762
    %764 = vdwg.mxu0
    %765 = vmatprep.subr.mxu0 %v86
    %766 = vmatpush1.msra.mxu0 %v85
    %767 = vmatprep.subr.mxu0 %v102
    %768 = vmatpush1.msra.mxu0 %v101
    %769 = vmatprep.subr.mxu0 %v118
    %770 = vmatpush1.msra.mxu0 %v117
    %771 = vmatprep.subr.mxu0 %v134
    %772 = vmatpush1.msra.mxu0 %v133
    %773 = vmatprep.subr.mxu0 0.0
    %774 = vmatpush1.msra.mxu0 0.0
    %775 = vmatprep.subr.mxu0 0.0
    %776 = vmatpush1.msra.mxu0 0.0
    %777 = vmatprep.subr.mxu0 0.0
    %778 = vmatpush1.msra.mxu0 0.0
    %779 = vmatprep.subr.mxu0 0.0
    %780 = vmatpush1.msra.mxu0 0.0
    %781 = vmatprep.subr.mxu0 0.0
    %782 = vmatpush1.msra.mxu0 0.0
    %783 = vmatprep.subr.mxu0 0.0
    %784 = vmatpush1.msra.mxu0 0.0
    %785 = vmatprep.subr.mxu0 0.0
    %786 = vmatpush1.msra.mxu0 0.0
    %787 = vmatprep.subr.mxu0 0.0
    %788 = vmatpush1.msra.mxu0 0.0
    %789 = vmatprep.subr.mxu0 0.0
    %790 = vmatpush1.msra.mxu0 0.0
    %791 = vmatprep.subr.mxu0 0.0
    %792 = vmatpush1.msra.mxu0 0.0
    %793 = vmatprep.subr.mxu0 0.0
    %794 = vmatpush1.msra.mxu0 0.0
    %795 = vmatprep.subr.mxu0 0.0
    %796 = vmatpush1.msra.mxu0 0.0
    %797 = vmatprep.subr.mxu0 0.0
    %798 = vmatpush1.msra.mxu0 0.0
    %799 = vmatprep.subr.mxu0 0.0
    %800 = vmatpush1.msra.mxu0 0.0
    %801 = vmatprep.subr.mxu0 0.0
    %802 = vmatpush1.msra.mxu0 0.0
    %803 = vmatprep.subr.mxu0 0.0
    %804 = vmatpush1.msra.mxu0 0.0
    %805 = vmatprep.subr.mxu0 0.0
    %806 = vmatpush1.msra.mxu0 0.0
    %807 = vmatprep.subr.mxu0 0.0
    %808 = vmatpush1.msra.mxu0 0.0
    %809 = vmatprep.subr.mxu0 0.0
    %810 = vmatpush1.msra.mxu0 0.0
    %811 = vmatprep.subr.mxu0 0.0
    %812 = vmatpush1.msra.mxu0 0.0
    %813 = vmatprep.subr.mxu0 0.0
    %814 = vmatpush1.msra.mxu0 0.0
    %815 = vmatprep.subr.mxu0 0.0
    %816 = vmatpush1.msra.mxu0 0.0
    %817 = vmatprep.subr.mxu0 0.0
    %818 = vmatpush1.msra.mxu0 0.0
    %819 = vmatprep.subr.mxu0 0.0
    %820 = vmatpush1.msra.mxu0 0.0
    %821 = vmatprep.subr.mxu0 0.0
    %822 = vmatpush1.msra.mxu0 0.0
    %823 = vmatprep.subr.mxu0 0.0
    %824 = vmatpush1.msra.mxu0 0.0
    %825 = vmatprep.subr.mxu0 0.0
    %826 = vmatpush1.msra.mxu0 0.0
    %827 = vmatprep.subr.mxu0 0.0
    %828 = vmatpush1.msra.mxu0 0.0
    %829 = vmatprep.mubr.f32.mxu0 0.0
    %830 = vmatmul.mubr.f32.gmra.mrb[0].mxu0 %v221
    %v831 = vpop.f32.mrb[0].mxu0
    %v832 = vadd.f32 %v198, %v831
    %v833 = vpop.f32.mrb[0].mxu0
    %v834 = vadd.f32 %v202, %v833
    %835 = vmatprep.mubr.f32.mxu0 0.0
    %836 = vmatmul.mubr.f32.gmra.mrb[0].mxu0 %v224
    %v837 = vpop.f32.mrb[0].mxu0
    %v838 = vadd.f32 %v198, %v837
    %v839 = vpop.f32.mrb[0].mxu0
    %v840 = vadd.f32 %v202, %v839
    %841 = vdwg.mxu0
    %842 = vst [vmem:[#allocation2] sm:$0xff] %v293
    %843 = vst [vmem:[#allocation2 + $0x8] sm:$0xff] %v295
    %844 = vst [vmem:[#allocation2 + $0x10] sm:$0xff] %v370
    %845 = vst [vmem:[#allocation2 + $0x18] sm:$0xff] %v372
    %846 = vst [vmem:[#allocation2 + $0x20] sm:$0xff] %v447
    %847 = vst [vmem:[#allocation2 + $0x28] sm:$0xff] %v449
    %848 = vst [vmem:[#allocation2 + $0x30] sm:$0xff] %v524
    %849 = vst [vmem:[#allocation2 + $0x38] sm:$0xff] %v526
    %850 = vst [vmem:[#allocation2 + $0x40] sm:$0xff] %v601
    %851 = vst [vmem:[#allocation2 + $0x48] sm:$0xff] %v603
    %852 = vst [vmem:[#allocation2 + $0x50] sm:$0xff] %v678
    %853 = vst [vmem:[#allocation2 + $0x58] sm:$0xff] %v680
    %854 = vst [vmem:[#allocation2 + $0x60] sm:$0xff] %v755
    %855 = vst [vmem:[#allocation2 + $0x68] sm:$0xff] %v757
    %856 = vst [vmem:[#allocation2 + $0x70] sm:$0xff] %v832
    %857 = vst [vmem:[#allocation2 + $0x78] sm:$0xff] %v834
    %858 = vst [vmem:[#allocation2 + $0x80] sm:$0xff] %v299
    %859 = vst [vmem:[#allocation2 + $0x88] sm:$0xff] %v301
    %860 = vst [vmem:[#allocation2 + $0x90] sm:$0xff] %v376
    %861 = vst [vmem:[#allocation2 + $0x98] sm:$0xff] %v378
    %862 = vst [vmem:[#allocation2 + $0xa0] sm:$0xff] %v453
    %863 = vst [vmem:[#allocation2 + $0xa8] sm:$0xff] %v455
    %864 = vst [vmem:[#allocation2 + $0xb0] sm:$0xff] %v530
    %865 = vst [vmem:[#allocation2 + $0xb8] sm:$0xff] %v532
    %866 = vst [vmem:[#allocation2 + $0xc0] sm:$0xff] %v607
    %867 = vst [vmem:[#allocation2 + $0xc8] sm:$0xff] %v609
    %868 = vst [vmem:[#allocation2 + $0xd0] sm:$0xff] %v684
    %869 = vst [vmem:[#allocation2 + $0xd8] sm:$0xff] %v686
    %870 = vst [vmem:[#allocation2 + $0xe0] sm:$0xff] %v761
    %871 = vst [vmem:[#allocation2 + $0xe8] sm:$0xff] %v763
    %872 = vst [vmem:[#allocation2 + $0xf0] sm:$0xff] %v838
    %873 = vst [vmem:[#allocation2 + $0xf8] sm:$0xff] %v840
    %v874 = vld [vmem:[#allocation2] sm:$0x3]
    %v875 = vld [vmem:[#allocation2 + $0x8] sm:$0x3]
    %v876 = vld [vmem:[#allocation2 + $0x10] sm:$0x3]
    %v877 = vld [vmem:[#allocation2 + $0x18] sm:$0x3]
    %v878 = vld [vmem:[#allocation2 + $0x20] sm:$0x3]
    %v879 = vld [vmem:[#allocation2 + $0x28] sm:$0x3]
    %v880 = vld [vmem:[#allocation2 + $0x30] sm:$0x3]
    %v881 = vld [vmem:[#allocation2 + $0x38] sm:$0x3]
    %v882 = vld [vmem:[#allocation2 + $0xc0] sm:$0xc0]
    %v883 = vld [vmem:[#allocation2 + $0xc8] sm:$0xc0]
    %v884 = vld [vmem:[#allocation2 + $0xd0] sm:$0xc0]
    %v885 = vld [vmem:[#allocation2 + $0xd8] sm:$0xc0]
    %v886 = vld [vmem:[#allocation2 + $0xe0] sm:$0xc0]
    %v887 = vld [vmem:[#allocation2 + $0xe8] sm:$0xc0]
    %v888 = vld [vmem:[#allocation2 + $0xf0] sm:$0xc0]
    %v889 = vld [vmem:[#allocation2 + $0xf8] sm:$0xc0]
    %v890 = vld [vmem:[#allocation6] sm:$0xff]
    %v891 = vld [vmem:[#allocation6 + $0x8] sm:$0xff]
    %v892 = vld [vmem:[#allocation6 + $0x10] sm:$0xff]
    %v893 = vld [vmem:[#allocation6 + $0x18] sm:$0xff]
    %v894 = vld [vmem:[#allocation6 + $0x20] sm:$0xff]
    %v895 = vld [vmem:[#allocation6 + $0x28] sm:$0xff]
    %v896 = vld [vmem:[#allocation6 + $0x30] sm:$0xff]
    %v897 = vld [vmem:[#allocation6 + $0x38] sm:$0xff]
    %v898 = vld [vmem:[#allocation6 + $0x40] sm:$0xff]
    %v899 = vld [vmem:[#allocation6 + $0x48] sm:$0xff]
    %v900 = vld [vmem:[#allocation6 + $0x50] sm:$0xff]
    %v901 = vld [vmem:[#allocation6 + $0x58] sm:$0xff]
    %v902 = vld [vmem:[#allocation6 + $0x60] sm:$0xff]
    %v903 = vld [vmem:[#allocation6 + $0x68] sm:$0xff]
    %v904 = vld [vmem:[#allocation6 + $0x70] sm:$0xff]
    %v905 = vld [vmem:[#allocation6 + $0x78] sm:$0xff]
    %v906 = vld [vmem:[#allocation6 + $0x80] sm:$0xff]
    %v907 = vld [vmem:[#allocation6 + $0x88] sm:$0xff]
    %v908 = vld [vmem:[#allocation6 + $0x90] sm:$0xff]
    %v909 = vld [vmem:[#allocation6 + $0x98] sm:$0xff]
    %v910 = vld [vmem:[#allocation6 + $0xa0] sm:$0xff]
    %v911 = vld [vmem:[#allocation6 + $0xa8] sm:$0xff]
    %v912 = vld [vmem:[#allocation6 + $0xb0] sm:$0xff]
    %v913 = vld [vmem:[#allocation6 + $0xb8] sm:$0xff]
    %v914 = vld [vmem:[#allocation6 + $0xc0] sm:$0xff]
    %v915 = vld [vmem:[#allocation6 + $0xc8] sm:$0xff]
    %v916 = vld [vmem:[#allocation6 + $0xd0] sm:$0xff]
    %v917 = vld [vmem:[#allocation6 + $0xd8] sm:$0xff]
    %v918 = vld [vmem:[#allocation6 + $0xe0] sm:$0xff]
    %v919 = vld [vmem:[#allocation6 + $0xe8] sm:$0xff]
    %v920 = vld [vmem:[#allocation6 + $0xf0] sm:$0xff]
    %v921 = vld [vmem:[#allocation6 + $0xf8] sm:$0xff]
    %v922 = vld [vmem:[#allocation6 + $0x100] sm:$0xff]
    %v923 = vld [vmem:[#allocation6 + $0x108] sm:$0xff]
    %v924 = vld [vmem:[#allocation6 + $0x110] sm:$0xff]
    %v925 = vld [vmem:[#allocation6 + $0x118] sm:$0xff]
    %v926 = vld [vmem:[#allocation6 + $0x120] sm:$0xff]
    %v927 = vld [vmem:[#allocation6 + $0x128] sm:$0xff]
    %v928 = vld [vmem:[#allocation6 + $0x130] sm:$0xff]
    %v929 = vld [vmem:[#allocation6 + $0x138] sm:$0xff]
    %v930 = vld [vmem:[#allocation6 + $0x140] sm:$0xff]
    %v931 = vld [vmem:[#allocation6 + $0x148] sm:$0xff]
    %v932 = vld [vmem:[#allocation6 + $0x150] sm:$0xff]
    %v933 = vld [vmem:[#allocation6 + $0x158] sm:$0xff]
    %v934 = vld [vmem:[#allocation6 + $0x160] sm:$0xff]
    %v935 = vld [vmem:[#allocation6 + $0x168] sm:$0xff]
    %v936 = vld [vmem:[#allocation6 + $0x170] sm:$0xff]
    %v937 = vld [vmem:[#allocation6 + $0x178] sm:$0xff]
    %v938 = vld [vmem:[#allocation6 + $0x180] sm:$0xff]
    %v939 = vld [vmem:[#allocation6 + $0x188] sm:$0xff]
    %v940 = vld [vmem:[#allocation6 + $0x190] sm:$0xff]
    %v941 = vld [vmem:[#allocation6 + $0x198] sm:$0xff]
    %v942 = vld [vmem:[#allocation6 + $0x1a0] sm:$0xff]
    %v943 = vld [vmem:[#allocation6 + $0x1a8] sm:$0xff]
    %v944 = vld [vmem:[#allocation6 + $0x1b0] sm:$0xff]
    %v945 = vld [vmem:[#allocation6 + $0x1b8] sm:$0xff]
    %v946 = vld [vmem:[#allocation6 + $0x1c0] sm:$0xff]
    %v947 = vld [vmem:[#allocation6 + $0x1c8] sm:$0xff]
    %v948 = vld [vmem:[#allocation6 + $0x1d0] sm:$0xff]
    %v949 = vld [vmem:[#allocation6 + $0x1d8] sm:$0xff]
    %v950 = vld [vmem:[#allocation6 + $0x1e0] sm:$0xff]
    %v951 = vld [vmem:[#allocation6 + $0x1e8] sm:$0xff]
    %v952 = vld [vmem:[#allocation6 + $0x1f0] sm:$0xff]
    %v953 = vld [vmem:[#allocation6 + $0x1f8] sm:$0xff]
    %v954 = vld [vmem:[#allocation6 + $0x200] sm:$0xff]
    %v955 = vld [vmem:[#allocation6 + $0x208] sm:$0xff]
    %v956 = vld [vmem:[#allocation6 + $0x210] sm:$0xff]
    %v957 = vld [vmem:[#allocation6 + $0x218] sm:$0xff]
    %v958 = vld [vmem:[#allocation6 + $0x220] sm:$0xff]
    %v959 = vld [vmem:[#allocation6 + $0x228] sm:$0xff]
    %v960 = vld [vmem:[#allocation6 + $0x230] sm:$0xff]
    %v961 = vld [vmem:[#allocation6 + $0x238] sm:$0xff]
    %v962 = vld [vmem:[#allocation6 + $0x240] sm:$0xff]
    %v963 = vld [vmem:[#allocation6 + $0x248] sm:$0xff]
    %v964 = vld [vmem:[#allocation6 + $0x250] sm:$0xff]
    %v965 = vld [vmem:[#allocation6 + $0x258] sm:$0xff]
    %v966 = vld [vmem:[#allocation6 + $0x260] sm:$0xff]
    %v967 = vld [vmem:[#allocation6 + $0x268] sm:$0xff]
    %v968 = vld [vmem:[#allocation6 + $0x270] sm:$0xff]
    %v969 = vld [vmem:[#allocation6 + $0x278] sm:$0xff]
    %v970 = vld [vmem:[#allocation6 + $0x280] sm:$0xff]
    %v971 = vld [vmem:[#allocation6 + $0x288] sm:$0xff]
    %v972 = vld [vmem:[#allocation6 + $0x290] sm:$0xff]
    %v973 = vld [vmem:[#allocation6 + $0x298] sm:$0xff]
    %v974 = vld [vmem:[#allocation6 + $0x2a0] sm:$0xff]
    %v975 = vld [vmem:[#allocation6 + $0x2a8] sm:$0xff]
    %v976 = vld [vmem:[#allocation6 + $0x2b0] sm:$0xff]
    %v977 = vld [vmem:[#allocation6 + $0x2b8] sm:$0xff]
    %v978 = vld [vmem:[#allocation6 + $0x2c0] sm:$0xff]
    %v979 = vld [vmem:[#allocation6 + $0x2c8] sm:$0xff]
    %v980 = vld [vmem:[#allocation6 + $0x2d0] sm:$0xff]
    %v981 = vld [vmem:[#allocation6 + $0x2d8] sm:$0xff]
    %v982 = vld [vmem:[#allocation6 + $0x2e0] sm:$0xff]
    %v983 = vld [vmem:[#allocation6 + $0x2e8] sm:$0xff]
    %v984 = vld [vmem:[#allocation6 + $0x2f0] sm:$0xff]
    %v985 = vld [vmem:[#allocation6 + $0x2f8] sm:$0xff]
    %v986 = vld [vmem:[#allocation6 + $0x300] sm:$0xff]
    %v987 = vld [vmem:[#allocation6 + $0x308] sm:$0xff]
    %v988 = vld [vmem:[#allocation6 + $0x310] sm:$0xff]
    %v989 = vld [vmem:[#allocation6 + $0x318] sm:$0xff]
    %v990 = vld [vmem:[#allocation6 + $0x320] sm:$0xff]
    %v991 = vld [vmem:[#allocation6 + $0x328] sm:$0xff]
    %v992 = vld [vmem:[#allocation6 + $0x330] sm:$0xff]
    %v993 = vld [vmem:[#allocation6 + $0x338] sm:$0xff]
    %v994 = vld [vmem:[#allocation6 + $0x340] sm:$0xff]
    %v995 = vld [vmem:[#allocation6 + $0x348] sm:$0xff]
    %v996 = vld [vmem:[#allocation6 + $0x350] sm:$0xff]
    %v997 = vld [vmem:[#allocation6 + $0x358] sm:$0xff]
    %v998 = vld [vmem:[#allocation6 + $0x360] sm:$0xff]
    %v999 = vld [vmem:[#allocation6 + $0x368] sm:$0xff]
    %v1000 = vld [vmem:[#allocation6 + $0x370] sm:$0xff]
    %v1001 = vld [vmem:[#allocation6 + $0x378] sm:$0xff]
    %v1002 = vld [vmem:[#allocation6 + $0x380] sm:$0xff]
    %v1003 = vld [vmem:[#allocation6 + $0x388] sm:$0xff]
    %v1004 = vld [vmem:[#allocation6 + $0x390] sm:$0xff]
    %v1005 = vld [vmem:[#allocation6 + $0x398] sm:$0xff]
    %v1006 = vld [vmem:[#allocation6 + $0x3a0] sm:$0xff]
    %v1007 = vld [vmem:[#allocation6 + $0x3a8] sm:$0xff]
    %v1008 = vld [vmem:[#allocation6 + $0x3b0] sm:$0xff]
    %v1009 = vld [vmem:[#allocation6 + $0x3b8] sm:$0xff]
    %v1010 = vld [vmem:[#allocation6 + $0x3c0] sm:$0xff]
    %v1011 = vld [vmem:[#allocation6 + $0x3c8] sm:$0xff]
    %v1012 = vld [vmem:[#allocation6 + $0x3d0] sm:$0xff]
    %v1013 = vld [vmem:[#allocation6 + $0x3d8] sm:$0xff]
    %v1014 = vld [vmem:[#allocation6 + $0x3e0] sm:$0xff]
    %v1015 = vld [vmem:[#allocation6 + $0x3e8] sm:$0xff]
    %v1016 = vld [vmem:[#allocation6 + $0x3f0] sm:$0xff]
    %v1017 = vld [vmem:[#allocation6 + $0x3f8] sm:$0xff]
    %v1018 = vld [vmem:[#allocation6 + $0x400] sm:$0xff]
    %v1019 = vld [vmem:[#allocation6 + $0x408] sm:$0xff]
    %v1020 = vld [vmem:[#allocation6 + $0x410] sm:$0xff]
    %v1021 = vld [vmem:[#allocation6 + $0x418] sm:$0xff]
    %v1022 = vld [vmem:[#allocation6 + $0x420] sm:$0xff]
    %v1023 = vld [vmem:[#allocation6 + $0x428] sm:$0xff]
    %v1024 = vld [vmem:[#allocation6 + $0x430] sm:$0xff]
    %v1025 = vld [vmem:[#allocation6 + $0x438] sm:$0xff]
    %v1026 = vld [vmem:[#allocation6 + $0x440] sm:$0xff]
    %v1027 = vld [vmem:[#allocation6 + $0x448] sm:$0xff]
    %v1028 = vld [vmem:[#allocation6 + $0x450] sm:$0xff]
    %v1029 = vld [vmem:[#allocation6 + $0x458] sm:$0xff]
    %v1030 = vld [vmem:[#allocation6 + $0x460] sm:$0xff]
    %v1031 = vld [vmem:[#allocation6 + $0x468] sm:$0xff]
    %v1032 = vld [vmem:[#allocation6 + $0x470] sm:$0xff]
    %v1033 = vld [vmem:[#allocation6 + $0x478] sm:$0xff]
    %v1034 = vld [vmem:[#allocation6 + $0x480] sm:$0xff]
    %v1035 = vld [vmem:[#allocation6 + $0x488] sm:$0xff]
    %v1036 = vld [vmem:[#allocation6 + $0x490] sm:$0xff]
    %v1037 = vld [vmem:[#allocation6 + $0x498] sm:$0xff]
    %v1038 = vld [vmem:[#allocation6 + $0x4a0] sm:$0xff]
    %v1039 = vld [vmem:[#allocation6 + $0x4a8] sm:$0xff]
    %v1040 = vld [vmem:[#allocation6 + $0x4b0] sm:$0xff]
    %v1041 = vld [vmem:[#allocation6 + $0x4b8] sm:$0xff]
    %v1042 = vld [vmem:[#allocation6 + $0x4c0] sm:$0xff]
    %v1043 = vld [vmem:[#allocation6 + $0x4c8] sm:$0xff]
    %v1044 = vld [vmem:[#allocation6 + $0x4d0] sm:$0xff]
    %v1045 = vld [vmem:[#allocation6 + $0x4d8] sm:$0xff]
    %v1046 = vld [vmem:[#allocation6 + $0x4e0] sm:$0xff]
    %v1047 = vld [vmem:[#allocation6 + $0x4e8] sm:$0xff]
    %v1048 = vld [vmem:[#allocation6 + $0x4f0] sm:$0xff]
    %v1049 = vld [vmem:[#allocation6 + $0x4f8] sm:$0xff]
    %v1050 = vld [vmem:[#allocation6 + $0x500] sm:$0xff]
    %v1051 = vld [vmem:[#allocation6 + $0x508] sm:$0xff]
    %v1052 = vld [vmem:[#allocation6 + $0x510] sm:$0xff]
    %v1053 = vld [vmem:[#allocation6 + $0x518] sm:$0xff]
    %v1054 = vld [vmem:[#allocation6 + $0x520] sm:$0xff]
    %v1055 = vld [vmem:[#allocation6 + $0x528] sm:$0xff]
    %v1056 = vld [vmem:[#allocation6 + $0x530] sm:$0xff]
    %v1057 = vld [vmem:[#allocation6 + $0x538] sm:$0xff]
    %v1058 = vld [vmem:[#allocation6 + $0x540] sm:$0xff]
    %v1059 = vld [vmem:[#allocation6 + $0x548] sm:$0xff]
    %v1060 = vld [vmem:[#allocation6 + $0x550] sm:$0xff]
    %v1061 = vld [vmem:[#allocation6 + $0x558] sm:$0xff]
    %v1062 = vld [vmem:[#allocation6 + $0x560] sm:$0xff]
    %v1063 = vld [vmem:[#allocation6 + $0x568] sm:$0xff]
    %v1064 = vld [vmem:[#allocation6 + $0x570] sm:$0xff]
    %v1065 = vld [vmem:[#allocation6 + $0x578] sm:$0xff]
    %v1066 = vld [vmem:[#allocation6 + $0x580] sm:$0xff]
    %v1067 = vld [vmem:[#allocation6 + $0x588] sm:$0xff]
    %v1068 = vld [vmem:[#allocation6 + $0x590] sm:$0xff]
    %v1069 = vld [vmem:[#allocation6 + $0x598] sm:$0xff]
    %v1070 = vld [vmem:[#allocation6 + $0x5a0] sm:$0xff]
    %v1071 = vld [vmem:[#allocation6 + $0x5a8] sm:$0xff]
    %v1072 = vld [vmem:[#allocation6 + $0x5b0] sm:$0xff]
    %v1073 = vld [vmem:[#allocation6 + $0x5b8] sm:$0xff]
    %v1074 = vld [vmem:[#allocation6 + $0x5c0] sm:$0xff]
    %v1075 = vld [vmem:[#allocation6 + $0x5c8] sm:$0xff]
    %v1076 = vld [vmem:[#allocation6 + $0x5d0] sm:$0xff]
    %v1077 = vld [vmem:[#allocation6 + $0x5d8] sm:$0xff]
    %v1078 = vld [vmem:[#allocation6 + $0x5e0] sm:$0xff]
    %v1079 = vld [vmem:[#allocation6 + $0x5e8] sm:$0xff]
    %v1080 = vld [vmem:[#allocation6 + $0x5f0] sm:$0xff]
    %v1081 = vld [vmem:[#allocation6 + $0x5f8] sm:$0xff]
    %v1082 = vld [vmem:[#allocation6 + $0x600] sm:$0xff]
    %v1083 = vld [vmem:[#allocation6 + $0x608] sm:$0xff]
    %v1084 = vld [vmem:[#allocation6 + $0x610] sm:$0xff]
    %v1085 = vld [vmem:[#allocation6 + $0x618] sm:$0xff]
    %v1086 = vld [vmem:[#allocation6 + $0x620] sm:$0xff]
    %v1087 = vld [vmem:[#allocation6 + $0x628] sm:$0xff]
    %v1088 = vld [vmem:[#allocation6 + $0x630] sm:$0xff]
    %v1089 = vld [vmem:[#allocation6 + $0x638] sm:$0xff]
    %v1090 = vld [vmem:[#allocation6 + $0x640] sm:$0xff]
    %v1091 = vld [vmem:[#allocation6 + $0x648] sm:$0xff]
    %v1092 = vld [vmem:[#allocation6 + $0x650] sm:$0xff]
    %v1093 = vld [vmem:[#allocation6 + $0x658] sm:$0xff]
    %v1094 = vld [vmem:[#allocation6 + $0x660] sm:$0xff]
    %v1095 = vld [vmem:[#allocation6 + $0x668] sm:$0xff]
    %v1096 = vld [vmem:[#allocation6 + $0x670] sm:$0xff]
    %v1097 = vld [vmem:[#allocation6 + $0x678] sm:$0xff]
    %v1098 = vld [vmem:[#allocation6 + $0x680] sm:$0xff]
    %v1099 = vld [vmem:[#allocation6 + $0x688] sm:$0xff]
    %v1100 = vld [vmem:[#allocation6 + $0x690] sm:$0xff]
    %v1101 = vld [vmem:[#allocation6 + $0x698] sm:$0xff]
    %v1102 = vld [vmem:[#allocation6 + $0x6a0] sm:$0xff]
    %v1103 = vld [vmem:[#allocation6 + $0x6a8] sm:$0xff]
    %v1104 = vld [vmem:[#allocation6 + $0x6b0] sm:$0xff]
    %v1105 = vld [vmem:[#allocation6 + $0x6b8] sm:$0xff]
    %v1106 = vld [vmem:[#allocation6 + $0x6c0] sm:$0xff]
    %v1107 = vld [vmem:[#allocation6 + $0x6c8] sm:$0xff]
    %v1108 = vld [vmem:[#allocation6 + $0x6d0] sm:$0xff]
    %v1109 = vld [vmem:[#allocation6 + $0x6d8] sm:$0xff]
    %v1110 = vld [vmem:[#allocation6 + $0x6e0] sm:$0xff]
    %v1111 = vld [vmem:[#allocation6 + $0x6e8] sm:$0xff]
    %v1112 = vld [vmem:[#allocation6 + $0x6f0] sm:$0xff]
    %v1113 = vld [vmem:[#allocation6 + $0x6f8] sm:$0xff]
    %v1114 = vld [vmem:[#allocation6 + $0x700] sm:$0xff]
    %v1115 = vld [vmem:[#allocation6 + $0x708] sm:$0xff]
    %v1116 = vld [vmem:[#allocation6 + $0x710] sm:$0xff]
    %v1117 = vld [vmem:[#allocation6 + $0x718] sm:$0xff]
    %v1118 = vld [vmem:[#allocation6 + $0x720] sm:$0xff]
    %v1119 = vld [vmem:[#allocation6 + $0x728] sm:$0xff]
    %v1120 = vld [vmem:[#allocation6 + $0x730] sm:$0xff]
    %v1121 = vld [vmem:[#allocation6 + $0x738] sm:$0xff]
    %v1122 = vld [vmem:[#allocation6 + $0x740] sm:$0xff]
    %v1123 = vld [vmem:[#allocation6 + $0x748] sm:$0xff]
    %v1124 = vld [vmem:[#allocation6 + $0x750] sm:$0xff]
    %v1125 = vld [vmem:[#allocation6 + $0x758] sm:$0xff]
    %v1126 = vld [vmem:[#allocation6 + $0x760] sm:$0xff]
    %v1127 = vld [vmem:[#allocation6 + $0x768] sm:$0xff]
    %v1128 = vld [vmem:[#allocation6 + $0x770] sm:$0xff]
    %v1129 = vld [vmem:[#allocation6 + $0x778] sm:$0xff]
    %v1130 = vld [vmem:[#allocation6 + $0x780] sm:$0xff]
    %v1131 = vld [vmem:[#allocation6 + $0x788] sm:$0xff]
    %v1132 = vld [vmem:[#allocation6 + $0x790] sm:$0xff]
    %v1133 = vld [vmem:[#allocation6 + $0x798] sm:$0xff]
    %v1134 = vld [vmem:[#allocation6 + $0x7a0] sm:$0xff]
    %v1135 = vld [vmem:[#allocation6 + $0x7a8] sm:$0xff]
    %v1136 = vld [vmem:[#allocation6 + $0x7b0] sm:$0xff]
    %v1137 = vld [vmem:[#allocation6 + $0x7b8] sm:$0xff]
    %v1138 = vld [vmem:[#allocation6 + $0x7c0] sm:$0xff]
    %v1139 = vld [vmem:[#allocation6 + $0x7c8] sm:$0xff]
    %v1140 = vld [vmem:[#allocation6 + $0x7d0] sm:$0xff]
    %v1141 = vld [vmem:[#allocation6 + $0x7d8] sm:$0xff]
    %v1142 = vld [vmem:[#allocation6 + $0x7e0] sm:$0xff]
    %v1143 = vld [vmem:[#allocation6 + $0x7e8] sm:$0xff]
    %v1144 = vld [vmem:[#allocation6 + $0x7f0] sm:$0xff]
    %v1145 = vld [vmem:[#allocation6 + $0x7f8] sm:$0xff]
    %1146 = vmatprep.subr.mxu0 %v891
    %1147 = vmatpush1.msra.mxu0 %v890
    %1148 = vmatprep.subr.mxu0 %v899
    %1149 = vmatpush1.msra.mxu0 %v898
    %1150 = vmatprep.subr.mxu0 %v907
    %1151 = vmatpush1.msra.mxu0 %v906
    %1152 = vmatprep.subr.mxu0 %v915
    %1153 = vmatpush1.msra.mxu0 %v914
    %1154 = vmatprep.subr.mxu0 %v923
    %1155 = vmatpush1.msra.mxu0 %v922
    %1156 = vmatprep.subr.mxu0 %v931
    %1157 = vmatpush1.msra.mxu0 %v930
    %1158 = vmatprep.subr.mxu0 %v939
    %1159 = vmatpush1.msra.mxu0 %v938
    %1160 = vmatprep.subr.mxu0 %v947
    %1161 = vmatpush1.msra.mxu0 %v946
    %1162 = vmatprep.subr.mxu0 %v955
    %1163 = vmatpush1.msra.mxu0 %v954
    %1164 = vmatprep.subr.mxu0 %v963
    %1165 = vmatpush1.msra.mxu0 %v962
    %1166 = vmatprep.subr.mxu0 %v971
    %1167 = vmatpush1.msra.mxu0 %v970
    %1168 = vmatprep.subr.mxu0 %v979
    %1169 = vmatpush1.msra.mxu0 %v978
    %1170 = vmatprep.subr.mxu0 %v987
    %1171 = vmatpush1.msra.mxu0 %v986
    %1172 = vmatprep.subr.mxu0 %v995
    %1173 = vmatpush1.msra.mxu0 %v994
    %1174 = vmatprep.subr.mxu0 %v1003
    %1175 = vmatpush1.msra.mxu0 %v1002
    %1176 = vmatprep.subr.mxu0 %v1011
    %1177 = vmatpush1.msra.mxu0 %v1010
    %1178 = vmatprep.subr.mxu0 %v1019
    %1179 = vmatpush1.msra.mxu0 %v1018
    %1180 = vmatprep.subr.mxu0 %v1027
    %1181 = vmatpush1.msra.mxu0 %v1026
    %1182 = vmatprep.subr.mxu0 %v1035
    %1183 = vmatpush1.msra.mxu0 %v1034
    %1184 = vmatprep.subr.mxu0 %v1043
    %1185 = vmatpush1.msra.mxu0 %v1042
    %1186 = vmatprep.subr.mxu0 %v1051
    %1187 = vmatpush1.msra.mxu0 %v1050
    %1188 = vmatprep.subr.mxu0 %v1059
    %1189 = vmatpush1.msra.mxu0 %v1058
    %1190 = vmatprep.subr.mxu0 %v1067
    %1191 = vmatpush1.msra.mxu0 %v1066
    %1192 = vmatprep.subr.mxu0 %v1075
    %1193 = vmatpush1.msra.mxu0 %v1074
    %1194 = vmatprep.subr.mxu0 %v1083
    %1195 = vmatpush1.msra.mxu0 %v1082
    %1196 = vmatprep.subr.mxu0 %v1091
    %1197 = vmatpush1.msra.mxu0 %v1090
    %1198 = vmatprep.subr.mxu0 %v1099
    %1199 = vmatpush1.msra.mxu0 %v1098
    %1200 = vmatprep.subr.mxu0 %v1107
    %1201 = vmatpush1.msra.mxu0 %v1106
    %1202 = vmatprep.subr.mxu0 %v1115
    %1203 = vmatpush1.msra.mxu0 %v1114
    %1204 = vmatprep.subr.mxu0 %v1123
    %1205 = vmatpush1.msra.mxu0 %v1122
    %1206 = vmatprep.subr.mxu0 %v1131
    %1207 = vmatpush1.msra.mxu0 %v1130
    %1208 = vmatprep.subr.mxu0 %v1139
    %1209 = vmatpush1.msra.mxu0 %v1138
    %1210 = vmatprep.mubr.f32.mxu0 0.0
    %1211 = vmatmul.mubr.f32.gmra.mrb[0].mxu0 0.0
    %v1212 = vpop.f32.mrb[0].mxu0
    %v1213 = vadd.f32 0.0, %v1212
    %v1214 = vpop.f32.mrb[0].mxu0
    %v1215 = vadd.f32 0.0, %v1214
    %1216 = vdwg.mxu0
    %1217 = vmatprep.subr.mxu0 %v893
    %1218 = vmatpush1.msra.mxu0 %v892
    %1219 = vmatprep.subr.mxu0 %v901
    %1220 = vmatpush1.msra.mxu0 %v900
    %1221 = vmatprep.subr.mxu0 %v909
    %1222 = vmatpush1.msra.mxu0 %v908
    %1223 = vmatprep.subr.mxu0 %v917
    %1224 = vmatpush1.msra.mxu0 %v916
    %1225 = vmatprep.subr.mxu0 %v925
    %1226 = vmatpush1.msra.mxu0 %v924
    %1227 = vmatprep.subr.mxu0 %v933
    %1228 = vmatpush1.msra.mxu0 %v932
    %1229 = vmatprep.subr.mxu0 %v941
    %1230 = vmatpush1.msra.mxu0 %v940
    %1231 = vmatprep.subr.mxu0 %v949
    %1232 = vmatpush1.msra.mxu0 %v948
    %1233 = vmatprep.subr.mxu0 %v957
    %1234 = vmatpush1.msra.mxu0 %v956
    %1235 = vmatprep.subr.mxu0 %v965
    %1236 = vmatpush1.msra.mxu0 %v964
    %1237 = vmatprep.subr.mxu0 %v973
    %1238 = vmatpush1.msra.mxu0 %v972
    %1239 = vmatprep.subr.mxu0 %v981
    %1240 = vmatpush1.msra.mxu0 %v980
    %1241 = vmatprep.subr.mxu0 %v989
    %1242 = vmatpush1.msra.mxu0 %v988
    %1243 = vmatprep.subr.mxu0 %v997
    %1244 = vmatpush1.msra.mxu0 %v996
    %1245 = vmatprep.subr.mxu0 %v1005
    %1246 = vmatpush1.msra.mxu0 %v1004
    %1247 = vmatprep.subr.mxu0 %v1013
    %1248 = vmatpush1.msra.mxu0 %v1012
    %1249 = vmatprep.subr.mxu0 %v1021
    %1250 = vmatpush1.msra.mxu0 %v1020
    %1251 = vmatprep.subr.mxu0 %v1029
    %1252 = vmatpush1.msra.mxu0 %v1028
    %1253 = vmatprep.subr.mxu0 %v1037
    %1254 = vmatpush1.msra.mxu0 %v1036
    %1255 = vmatprep.subr.mxu0 %v1045
    %1256 = vmatpush1.msra.mxu0 %v1044
    %1257 = vmatprep.subr.mxu0 %v1053
    %1258 = vmatpush1.msra.mxu0 %v1052
    %1259 = vmatprep.subr.mxu0 %v1061
    %1260 = vmatpush1.msra.mxu0 %v1060
    %1261 = vmatprep.subr.mxu0 %v1069
    %1262 = vmatpush1.msra.mxu0 %v1068
    %1263 = vmatprep.subr.mxu0 %v1077
    %1264 = vmatpush1.msra.mxu0 %v1076
    %1265 = vmatprep.subr.mxu0 %v1085
    %1266 = vmatpush1.msra.mxu0 %v1084
    %1267 = vmatprep.subr.mxu0 %v1093
    %1268 = vmatpush1.msra.mxu0 %v1092
    %1269 = vmatprep.subr.mxu0 %v1101
    %1270 = vmatpush1.msra.mxu0 %v1100
    %1271 = vmatprep.subr.mxu0 %v1109
    %1272 = vmatpush1.msra.mxu0 %v1108
    %1273 = vmatprep.subr.mxu0 %v1117
    %1274 = vmatpush1.msra.mxu0 %v1116
    %1275 = vmatprep.subr.mxu0 %v1125
    %1276 = vmatpush1.msra.mxu0 %v1124
    %1277 = vmatprep.subr.mxu0 %v1133
    %1278 = vmatpush1.msra.mxu0 %v1132
    %1279 = vmatprep.subr.mxu0 %v1141
    %1280 = vmatpush1.msra.mxu0 %v1140
    %1281 = vmatprep.mubr.f32.mxu0 0.0
    %1282 = vmatmul.mubr.f32.gmra.mrb[0].mxu0 0.0
    %v1283 = vpop.f32.mrb[0].mxu0
    %v1284 = vadd.f32 0.0, %v1283
    %v1285 = vpop.f32.mrb[0].mxu0
    %v1286 = vadd.f32 0.0, %v1285
    %1287 = vdwg.mxu0
    %1288 = vmatprep.subr.mxu0 %v895
    %1289 = vmatpush1.msra.mxu0 %v894
    %1290 = vmatprep.subr.mxu0 %v903
    %1291 = vmatpush1.msra.mxu0 %v902
    %1292 = vmatprep.subr.mxu0 %v911
    %1293 = vmatpush1.msra.mxu0 %v910
    %1294 = vmatprep.subr.mxu0 %v919
    %1295 = vmatpush1.msra.mxu0 %v918
    %1296 = vmatprep.subr.mxu0 %v927
    %1297 = vmatpush1.msra.mxu0 %v926
    %1298 = vmatprep.subr.mxu0 %v935
    %1299 = vmatpush1.msra.mxu0 %v934
    %1300 = vmatprep.subr.mxu0 %v943
    %1301 = vmatpush1.msra.mxu0 %v942
    %1302 = vmatprep.subr.mxu0 %v951
    %1303 = vmatpush1.msra.mxu0 %v950
    %1304 = vmatprep.subr.mxu0 %v959
    %1305 = vmatpush1.msra.mxu0 %v958
    %1306 = vmatprep.subr.mxu0 %v967
    %1307 = vmatpush1.msra.mxu0 %v966
    %1308 = vmatprep.subr.mxu0 %v975
    %1309 = vmatpush1.msra.mxu0 %v974
    %1310 = vmatprep.subr.mxu0 %v983
    %1311 = vmatpush1.msra.mxu0 %v982
    %1312 = vmatprep.subr.mxu0 %v991
    %1313 = vmatpush1.msra.mxu0 %v990
    %1314 = vmatprep.subr.mxu0 %v999
    %1315 = vmatpush1.msra.mxu0 %v998
    %1316 = vmatprep.subr.mxu0 %v1007
    %1317 = vmatpush1.msra.mxu0 %v1006
    %1318 = vmatprep.subr.mxu0 %v1015
    %1319 = vmatpush1.msra.mxu0 %v1014
    %1320 = vmatprep.subr.mxu0 %v1023
    %1321 = vmatpush1.msra.mxu0 %v1022
    %1322 = vmatprep.subr.mxu0 %v1031
    %1323 = vmatpush1.msra.mxu0 %v1030
    %1324 = vmatprep.subr.mxu0 %v1039
    %1325 = vmatpush1.msra.mxu0 %v1038
    %1326 = vmatprep.subr.mxu0 %v1047
    %1327 = vmatpush1.msra.mxu0 %v1046
    %1328 = vmatprep.subr.mxu0 %v1055
    %1329 = vmatpush1.msra.mxu0 %v1054
    %1330 = vmatprep.subr.mxu0 %v1063
    %1331 = vmatpush1.msra.mxu0 %v1062
    %1332 = vmatprep.subr.mxu0 %v1071
    %1333 = vmatpush1.msra.mxu0 %v1070
    %1334 = vmatprep.subr.mxu0 %v1079
    %1335 = vmatpush1.msra.mxu0 %v1078
    %1336 = vmatprep.subr.mxu0 %v1087
    %1337 = vmatpush1.msra.mxu0 %v1086
    %1338 = vmatprep.subr.mxu0 %v1095
    %1339 = vmatpush1.msra.mxu0 %v1094
    %1340 = vmatprep.subr.mxu0 %v1103
    %1341 = vmatpush1.msra.mxu0 %v1102
    %1342 = vmatprep.subr.mxu0 %v1111
    %1343 = vmatpush1.msra.mxu0 %v1110
    %1344 = vmatprep.subr.mxu0 %v1119
    %1345 = vmatpush1.msra.mxu0 %v1118
    %1346 = vmatprep.subr.mxu0 %v1127
    %1347 = vmatpush1.msra.mxu0 %v1126
    %1348 = vmatprep.subr.mxu0 %v1135
    %1349 = vmatpush1.msra.mxu0 %v1134
    %1350 = vmatprep.subr.mxu0 %v1143
    %1351 = vmatpush1.msra.mxu0 %v1142
    %1352 = vmatprep.mubr.f32.mxu0 0.0
    %1353 = vmatmul.mubr.f32.gmra.mrb[0].mxu0 0.0
    %v1354 = vpop.f32.mrb[0].mxu0
    %v1355 = vadd.f32 0.0, %v1354
    %v1356 = vpop.f32.mrb[0].mxu0
    %v1357 = vadd.f32 0.0, %v1356
    %1358 = vdwg.mxu0
    %1359 = vmatprep.subr.mxu0 %v897
    %1360 = vmatpush1.msra.mxu0 %v896
    %1361 = vmatprep.subr.mxu0 %v905
    %1362 = vmatpush1.msra.mxu0 %v904
    %1363 = vmatprep.subr.mxu0 %v913
    %1364 = vmatpush1.msra.mxu0 %v912
    %1365 = vmatprep.subr.mxu0 %v921
    %1366 = vmatpush1.msra.mxu0 %v920
    %1367 = vmatprep.subr.mxu0 %v929
    %1368 = vmatpush1.msra.mxu0 %v928
    %1369 = vmatprep.subr.mxu0 %v937
    %1370 = vmatpush1.msra.mxu0 %v936
    %1371 = vmatprep.subr.mxu0 %v945
    %1372 = vmatpush1.msra.mxu0 %v944
    %1373 = vmatprep.subr.mxu0 %v953
    %1374 = vmatpush1.msra.mxu0 %v952
    %1375 = vmatprep.subr.mxu0 %v961
    %1376 = vmatpush1.msra.mxu0 %v960
    %1377 = vmatprep.subr.mxu0 %v969
    %1378 = vmatpush1.msra.mxu0 %v968
    %1379 = vmatprep.subr.mxu0 %v977
    %1380 = vmatpush1.msra.mxu0 %v976
    %1381 = vmatprep.subr.mxu0 %v985
    %1382 = vmatpush1.msra.mxu0 %v984
    %1383 = vmatprep.subr.mxu0 %v993
    %1384 = vmatpush1.msra.mxu0 %v992
    %1385 = vmatprep.subr.mxu0 %v1001
    %1386 = vmatpush1.msra.mxu0 %v1000
    %1387 = vmatprep.subr.mxu0 %v1009
    %1388 = vmatpush1.msra.mxu0 %v1008
    %1389 = vmatprep.subr.mxu0 %v1017
    %1390 = vmatpush1.msra.mxu0 %v1016
    %1391 = vmatprep.subr.mxu0 %v1025
    %1392 = vmatpush1.msra.mxu0 %v1024
    %1393 = vmatprep.subr.mxu0 %v1033
    %1394 = vmatpush1.msra.mxu0 %v1032
    %1395 = vmatprep.subr.mxu0 %v1041
    %1396 = vmatpush1.msra.mxu0 %v1040
    %1397 = vmatprep.subr.mxu0 %v1049
    %1398 = vmatpush1.msra.mxu0 %v1048
    %1399 = vmatprep.subr.mxu0 %v1057
    %1400 = vmatpush1.msra.mxu0 %v1056
    %1401 = vmatprep.subr.mxu0 %v1065
    %1402 = vmatpush1.msra.mxu0 %v1064
    %1403 = vmatprep.subr.mxu0 %v1073
    %1404 = vmatpush1.msra.mxu0 %v1072
    %1405 = vmatprep.subr.mxu0 %v1081
    %1406 = vmatpush1.msra.mxu0 %v1080
    %1407 = vmatprep.subr.mxu0 %v1089
    %1408 = vmatpush1.msra.mxu0 %v1088
    %1409 = vmatprep.subr.mxu0 %v1097
    %1410 = vmatpush1.msra.mxu0 %v1096
    %1411 = vmatprep.subr.mxu0 %v1105
    %1412 = vmatpush1.msra.mxu0 %v1104
    %1413 = vmatprep.subr.mxu0 %v1113
    %1414 = vmatpush1.msra.mxu0 %v1112
    %1415 = vmatprep.subr.mxu0 %v1121
    %1416 = vmatpush1.msra.mxu0 %v1120
    %1417 = vmatprep.subr.mxu0 %v1129
    %1418 = vmatpush1.msra.mxu0 %v1128
    %1419 = vmatprep.subr.mxu0 %v1137
    %1420 = vmatpush1.msra.mxu0 %v1136
    %1421 = vmatprep.subr.mxu0 %v1145
    %1422 = vmatpush1.msra.mxu0 %v1144
    %1423 = vmatprep.mubr.f32.mxu0 0.0
    %1424 = vmatmul.mubr.f32.gmra.mrb[0].mxu0 0.0
    %v1425 = vpop.f32.mrb[0].mxu0
    %v1426 = vadd.f32 0.0, %v1425
    %v1427 = vpop.f32.mrb[0].mxu0
    %v1428 = vadd.f32 0.0, %v1427
    %1429 = vdwg.mxu0
    %v1430 = vadd.f32 %v874, %v1213
    %v1431 = vadd.f32 %v875, %v1215
    %v1432 = vadd.f32 %v876, %v1284
    %v1433 = vadd.f32 %v877, %v1286
    %v1434 = vadd.f32 %v878, %v1355
    %v1435 = vadd.f32 %v879, %v1357
    %v1436 = vadd.f32 %v880, %v1426
    %v1437 = vadd.f32 %v881, %v1428
    %v1438 = vxor.u32 %v1430, 2147483648
    %v1439 = vxor.u32 %v1431, 2147483648
    %v1440 = vmul.f32 %v1438, 1.442695
    %v1441 = vpow.pop %v1440
    %v1442 = vmul.f32 %v1439, 1.442695
    %v1443 = vpow.pop %v1442
    %v1444 = vadd.f32 %v1441, 1.0
    %v1445 = vadd.f32 %v1443, 1.0
    %v1446 = vrcp.pop %v1444
    %v1447 = vmul.f32 1.0, %v1446
    %v1448 = vrcp.pop %v1445
    %v1449 = vmul.f32 1.0, %v1448
    %v1450 = vxor.u32 %v1432, 2147483648
    %v1451 = vxor.u32 %v1433, 2147483648
    %v1452 = vmul.f32 %v1450, 1.442695
    %v1453 = vpow.pop %v1452
    %v1454 = vmul.f32 %v1451, 1.442695
    %v1455 = vpow.pop %v1454
    %v1456 = vadd.f32 %v1453, 1.0
    %v1457 = vadd.f32 %v1455, 1.0
    %v1458 = vrcp.pop %v1456
    %v1459 = vmul.f32 1.0, %v1458
    %v1460 = vrcp.pop %v1457
    %v1461 = vmul.f32 1.0, %v1460
    %v1462 = vtanh.pop %v1434
    %v1463 = vtanh.pop %v1435
    %v1464 = vxor.u32 %v1436, 2147483648
    %v1465 = vxor.u32 %v1437, 2147483648
    %v1466 = vmul.f32 %v1464, 1.442695
    %v1467 = vpow.pop %v1466
    %v1468 = vmul.f32 %v1465, 1.442695
    %v1469 = vpow.pop %v1468
    %v1470 = vadd.f32 %v1467, 1.0
    %v1471 = vadd.f32 %v1469, 1.0
    %v1472 = vrcp.pop %v1470
    %v1473 = vmul.f32 1.0, %v1472
    %v1474 = vrcp.pop %v1471
    %v1475 = vmul.f32 1.0, %v1474
    %v1476 = vmul.f32 %v1459, 0.0
    %v1477 = vmul.f32 %v1461, 0.0
    %v1478 = vmul.f32 %v1447, %v1462
    %v1479 = vmul.f32 %v1449, %v1463
    %v1480 = vadd.f32 %v1476, %v1478
    %v1481 = vadd.f32 %v1477, %v1479
    %v1482 = vtanh.pop %v1480
    %v1483 = vtanh.pop %v1481
    %v1484 = vmul.f32 %v1473, %v1482
    %v1485 = vmul.f32 %v1475, %v1483
    %v1486 = vld [vmem:[#allocation8] sm:$0xff]
    %v1487 = vld [vmem:[#allocation8 + $0x8] sm:$0xff]
    %v1488 = vld [vmem:[#allocation8 + $0x10] sm:$0xff]
    %v1489 = vld [vmem:[#allocation8 + $0x18] sm:$0xff]
    %v1490 = vld [vmem:[#allocation8 + $0x20] sm:$0xff]
    %v1491 = vld [vmem:[#allocation8 + $0x28] sm:$0xff]
    %v1492 = vld [vmem:[#allocation8 + $0x30] sm:$0xff]
    %v1493 = vld [vmem:[#allocation8 + $0x38] sm:$0xff]
    %v1494 = vld [vmem:[#allocation8 + $0x40] sm:$0xff]
    %v1495 = vld [vmem:[#allocation8 + $0x48] sm:$0xff]
    %v1496 = vld [vmem:[#allocation8 + $0x50] sm:$0xff]
    %v1497 = vld [vmem:[#allocation8 + $0x58] sm:$0xff]
    %v1498 = vld [vmem:[#allocation8 + $0x60] sm:$0xff]
    %v1499 = vld [vmem:[#allocation8 + $0x68] sm:$0xff]
    %v1500 = vld [vmem:[#allocation8 + $0x70] sm:$0xff]
    %v1501 = vld [vmem:[#allocation8 + $0x78] sm:$0xff]
    %v1502 = vld [vmem:[#allocation8 + $0x80] sm:$0xff]
    %v1503 = vld [vmem:[#allocation8 + $0x88] sm:$0xff]
    %v1504 = vld [vmem:[#allocation8 + $0x90] sm:$0xff]
    %v1505 = vld [vmem:[#allocation8 + $0x98] sm:$0xff]
    %v1506 = vld [vmem:[#allocation8 + $0xa0] sm:$0xff]
    %v1507 = vld [vmem:[#allocation8 + $0xa8] sm:$0xff]
    %v1508 = vld [vmem:[#allocation8 + $0xb0] sm:$0xff]
    %v1509 = vld [vmem:[#allocation8 + $0xb8] sm:$0xff]
    %v1510 = vld [vmem:[#allocation8 + $0xc0] sm:$0xff]
    %v1511 = vld [vmem:[#allocation8 + $0xc8] sm:$0xff]
    %v1512 = vld [vmem:[#allocation8 + $0xd0] sm:$0xff]
    %v1513 = vld [vmem:[#allocation8 + $0xd8] sm:$0xff]
    %v1514 = vld [vmem:[#allocation8 + $0xe0] sm:$0xff]
    %v1515 = vld [vmem:[#allocation8 + $0xe8] sm:$0xff]
    %v1516 = vld [vmem:[#allocation8 + $0xf0] sm:$0xff]
    %v1517 = vld [vmem:[#allocation8 + $0xf8] sm:$0xff]
    %v1518 = vld [vmem:[#allocation8 + $0x100] sm:$0xff]
    %v1519 = vld [vmem:[#allocation8 + $0x108] sm:$0xff]
    %v1520 = vld [vmem:[#allocation8 + $0x110] sm:$0xff]
    %v1521 = vld [vmem:[#allocation8 + $0x118] sm:$0xff]
    %v1522 = vld [vmem:[#allocation8 + $0x120] sm:$0xff]
    %v1523 = vld [vmem:[#allocation8 + $0x128] sm:$0xff]
    %v1524 = vld [vmem:[#allocation8 + $0x130] sm:$0xff]
    %v1525 = vld [vmem:[#allocation8 + $0x138] sm:$0xff]
    %v1526 = vld [vmem:[#allocation8 + $0x140] sm:$0xff]
    %v1527 = vld [vmem:[#allocation8 + $0x148] sm:$0xff]
    %v1528 = vld [vmem:[#allocation8 + $0x150] sm:$0xff]
    %v1529 = vld [vmem:[#allocation8 + $0x158] sm:$0xff]
    %v1530 = vld [vmem:[#allocation8 + $0x160] sm:$0xff]
    %v1531 = vld [vmem:[#allocation8 + $0x168] sm:$0xff]
    %v1532 = vld [vmem:[#allocation8 + $0x170] sm:$0xff]
    %v1533 = vld [vmem:[#allocation8 + $0x178] sm:$0xff]
    %v1534 = vld [vmem:[#allocation8 + $0x180] sm:$0xff]
    %v1535 = vld [vmem:[#allocation8 + $0x188] sm:$0xff]
    %v1536 = vld [vmem:[#allocation8 + $0x190] sm:$0xff]
    %v1537 = vld [vmem:[#allocation8 + $0x198] sm:$0xff]
    %v1538 = vld [vmem:[#allocation8 + $0x1a0] sm:$0xff]
    %v1539 = vld [vmem:[#allocation8 + $0x1a8] sm:$0xff]
    %v1540 = vld [vmem:[#allocation8 + $0x1b0] sm:$0xff]
    %v1541 = vld [vmem:[#allocation8 + $0x1b8] sm:$0xff]
    %v1542 = vld [vmem:[#allocation8 + $0x1c0] sm:$0xff]
    %v1543 = vld [vmem:[#allocation8 + $0x1c8] sm:$0xff]
    %v1544 = vld [vmem:[#allocation8 + $0x1d0] sm:$0xff]
    %v1545 = vld [vmem:[#allocation8 + $0x1d8] sm:$0xff]
    %v1546 = vld [vmem:[#allocation8 + $0x1e0] sm:$0xff]
    %v1547 = vld [vmem:[#allocation8 + $0x1e8] sm:$0xff]
    %v1548 = vld [vmem:[#allocation8 + $0x1f0] sm:$0xff]
    %v1549 = vld [vmem:[#allocation8 + $0x1f8] sm:$0xff]
    %v1550 = vld [vmem:[#allocation8 + $0x200] sm:$0xff]
    %v1551 = vld [vmem:[#allocation8 + $0x208] sm:$0xff]
    %v1552 = vld [vmem:[#allocation8 + $0x210] sm:$0xff]
    %v1553 = vld [vmem:[#allocation8 + $0x218] sm:$0xff]
    %v1554 = vld [vmem:[#allocation8 + $0x220] sm:$0xff]
    %v1555 = vld [vmem:[#allocation8 + $0x228] sm:$0xff]
    %v1556 = vld [vmem:[#allocation8 + $0x230] sm:$0xff]
    %v1557 = vld [vmem:[#allocation8 + $0x238] sm:$0xff]
    %v1558 = vld [vmem:[#allocation8 + $0x240] sm:$0xff]
    %v1559 = vld [vmem:[#allocation8 + $0x248] sm:$0xff]
    %v1560 = vld [vmem:[#allocation8 + $0x250] sm:$0xff]
    %v1561 = vld [vmem:[#allocation8 + $0x258] sm:$0xff]
    %v1562 = vld [vmem:[#allocation8 + $0x260] sm:$0xff]
    %v1563 = vld [vmem:[#allocation8 + $0x268] sm:$0xff]
    %v1564 = vld [vmem:[#allocation8 + $0x270] sm:$0xff]
    %v1565 = vld [vmem:[#allocation8 + $0x278] sm:$0xff]
    %v1566 = vld [vmem:[#allocation8 + $0x280] sm:$0xff]
    %v1567 = vld [vmem:[#allocation8 + $0x288] sm:$0xff]
    %v1568 = vld [vmem:[#allocation8 + $0x290] sm:$0xff]
    %v1569 = vld [vmem:[#allocation8 + $0x298] sm:$0xff]
    %v1570 = vld [vmem:[#allocation8 + $0x2a0] sm:$0xff]
    %v1571 = vld [vmem:[#allocation8 + $0x2a8] sm:$0xff]
    %v1572 = vld [vmem:[#allocation8 + $0x2b0] sm:$0xff]
    %v1573 = vld [vmem:[#allocation8 + $0x2b8] sm:$0xff]
    %v1574 = vld [vmem:[#allocation8 + $0x2c0] sm:$0xff]
    %v1575 = vld [vmem:[#allocation8 + $0x2c8] sm:$0xff]
    %v1576 = vld [vmem:[#allocation8 + $0x2d0] sm:$0xff]
    %v1577 = vld [vmem:[#allocation8 + $0x2d8] sm:$0xff]
    %v1578 = vld [vmem:[#allocation8 + $0x2e0] sm:$0xff]
    %v1579 = vld [vmem:[#allocation8 + $0x2e8] sm:$0xff]
    %v1580 = vld [vmem:[#allocation8 + $0x2f0] sm:$0xff]
    %v1581 = vld [vmem:[#allocation8 + $0x2f8] sm:$0xff]
    %v1582 = vld [vmem:[#allocation8 + $0x300] sm:$0xff]
    %v1583 = vld [vmem:[#allocation8 + $0x308] sm:$0xff]
    %v1584 = vld [vmem:[#allocation8 + $0x310] sm:$0xff]
    %v1585 = vld [vmem:[#allocation8 + $0x318] sm:$0xff]
    %v1586 = vld [vmem:[#allocation8 + $0x320] sm:$0xff]
    %v1587 = vld [vmem:[#allocation8 + $0x328] sm:$0xff]
    %v1588 = vld [vmem:[#allocation8 + $0x330] sm:$0xff]
    %v1589 = vld [vmem:[#allocation8 + $0x338] sm:$0xff]
    %v1590 = vld [vmem:[#allocation8 + $0x340] sm:$0xff]
    %v1591 = vld [vmem:[#allocation8 + $0x348] sm:$0xff]
    %v1592 = vld [vmem:[#allocation8 + $0x350] sm:$0xff]
    %v1593 = vld [vmem:[#allocation8 + $0x358] sm:$0xff]
    %v1594 = vld [vmem:[#allocation8 + $0x360] sm:$0xff]
    %v1595 = vld [vmem:[#allocation8 + $0x368] sm:$0xff]
    %v1596 = vld [vmem:[#allocation8 + $0x370] sm:$0xff]
    %v1597 = vld [vmem:[#allocation8 + $0x378] sm:$0xff]
    %v1598 = vld [vmem:[#allocation8 + $0x380] sm:$0xff]
    %v1599 = vld [vmem:[#allocation8 + $0x388] sm:$0xff]
    %v1600 = vld [vmem:[#allocation8 + $0x390] sm:$0xff]
    %v1601 = vld [vmem:[#allocation8 + $0x398] sm:$0xff]
    %v1602 = vld [vmem:[#allocation8 + $0x3a0] sm:$0xff]
    %v1603 = vld [vmem:[#allocation8 + $0x3a8] sm:$0xff]
    %v1604 = vld [vmem:[#allocation8 + $0x3b0] sm:$0xff]
    %v1605 = vld [vmem:[#allocation8 + $0x3b8] sm:$0xff]
    %v1606 = vld [vmem:[#allocation8 + $0x3c0] sm:$0xff]
    %v1607 = vld [vmem:[#allocation8 + $0x3c8] sm:$0xff]
    %v1608 = vld [vmem:[#allocation8 + $0x3d0] sm:$0xff]
    %v1609 = vld [vmem:[#allocation8 + $0x3d8] sm:$0xff]
    %v1610 = vld [vmem:[#allocation8 + $0x3e0] sm:$0xff]
    %v1611 = vld [vmem:[#allocation8 + $0x3e8] sm:$0xff]
    %v1612 = vld [vmem:[#allocation8 + $0x3f0] sm:$0xff]
    %v1613 = vld [vmem:[#allocation8 + $0x3f8] sm:$0xff]
    %v1614 = vld [vmem:[#allocation8 + $0x400] sm:$0xff]
    %v1615 = vld [vmem:[#allocation8 + $0x408] sm:$0xff]
    %v1616 = vld [vmem:[#allocation8 + $0x410] sm:$0xff]
    %v1617 = vld [vmem:[#allocation8 + $0x418] sm:$0xff]
    %v1618 = vld [vmem:[#allocation8 + $0x420] sm:$0xff]
    %v1619 = vld [vmem:[#allocation8 + $0x428] sm:$0xff]
    %v1620 = vld [vmem:[#allocation8 + $0x430] sm:$0xff]
    %v1621 = vld [vmem:[#allocation8 + $0x438] sm:$0xff]
    %v1622 = vld [vmem:[#allocation8 + $0x440] sm:$0xff]
    %v1623 = vld [vmem:[#allocation8 + $0x448] sm:$0xff]
    %v1624 = vld [vmem:[#allocation8 + $0x450] sm:$0xff]
    %v1625 = vld [vmem:[#allocation8 + $0x458] sm:$0xff]
    %v1626 = vld [vmem:[#allocation8 + $0x460] sm:$0xff]
    %v1627 = vld [vmem:[#allocation8 + $0x468] sm:$0xff]
    %v1628 = vld [vmem:[#allocation8 + $0x470] sm:$0xff]
    %v1629 = vld [vmem:[#allocation8 + $0x478] sm:$0xff]
    %v1630 = vld [vmem:[#allocation8 + $0x480] sm:$0xff]
    %v1631 = vld [vmem:[#allocation8 + $0x488] sm:$0xff]
    %v1632 = vld [vmem:[#allocation8 + $0x490] sm:$0xff]
    %v1633 = vld [vmem:[#allocation8 + $0x498] sm:$0xff]
    %v1634 = vld [vmem:[#allocation8 + $0x4a0] sm:$0xff]
    %v1635 = vld [vmem:[#allocation8 + $0x4a8] sm:$0xff]
    %v1636 = vld [vmem:[#allocation8 + $0x4b0] sm:$0xff]
    %v1637 = vld [vmem:[#allocation8 + $0x4b8] sm:$0xff]
    %v1638 = vld [vmem:[#allocation8 + $0x4c0] sm:$0xff]
    %v1639 = vld [vmem:[#allocation8 + $0x4c8] sm:$0xff]
    %v1640 = vld [vmem:[#allocation8 + $0x4d0] sm:$0xff]
    %v1641 = vld [vmem:[#allocation8 + $0x4d8] sm:$0xff]
    %v1642 = vld [vmem:[#allocation8 + $0x4e0] sm:$0xff]
    %v1643 = vld [vmem:[#allocation8 + $0x4e8] sm:$0xff]
    %v1644 = vld [vmem:[#allocation8 + $0x4f0] sm:$0xff]
    %v1645 = vld [vmem:[#allocation8 + $0x4f8] sm:$0xff]
    %v1646 = vld [vmem:[#allocation8 + $0x500] sm:$0xff]
    %v1647 = vld [vmem:[#allocation8 + $0x508] sm:$0xff]
    %v1648 = vld [vmem:[#allocation8 + $0x510] sm:$0xff]
    %v1649 = vld [vmem:[#allocation8 + $0x518] sm:$0xff]
    %v1650 = vld [vmem:[#allocation8 + $0x520] sm:$0xff]
    %v1651 = vld [vmem:[#allocation8 + $0x528] sm:$0xff]
    %v1652 = vld [vmem:[#allocation8 + $0x530] sm:$0xff]
    %v1653 = vld [vmem:[#allocation8 + $0x538] sm:$0xff]
    %v1654 = vld [vmem:[#allocation8 + $0x540] sm:$0xff]
    %v1655 = vld [vmem:[#allocation8 + $0x548] sm:$0xff]
    %v1656 = vld [vmem:[#allocation8 + $0x550] sm:$0xff]
    %v1657 = vld [vmem:[#allocation8 + $0x558] sm:$0xff]
    %v1658 = vld [vmem:[#allocation8 + $0x560] sm:$0xff]
    %v1659 = vld [vmem:[#allocation8 + $0x568] sm:$0xff]
    %v1660 = vld [vmem:[#allocation8 + $0x570] sm:$0xff]
    %v1661 = vld [vmem:[#allocation8 + $0x578] sm:$0xff]
    %v1662 = vld [vmem:[#allocation8 + $0x580] sm:$0xff]
    %v1663 = vld [vmem:[#allocation8 + $0x588] sm:$0xff]
    %v1664 = vld [vmem:[#allocation8 + $0x590] sm:$0xff]
    %v1665 = vld [vmem:[#allocation8 + $0x598] sm:$0xff]
    %v1666 = vld [vmem:[#allocation8 + $0x5a0] sm:$0xff]
    %v1667 = vld [vmem:[#allocation8 + $0x5a8] sm:$0xff]
    %v1668 = vld [vmem:[#allocation8 + $0x5b0] sm:$0xff]
    %v1669 = vld [vmem:[#allocation8 + $0x5b8] sm:$0xff]
    %v1670 = vld [vmem:[#allocation8 + $0x5c0] sm:$0xff]
    %v1671 = vld [vmem:[#allocation8 + $0x5c8] sm:$0xff]
    %v1672 = vld [vmem:[#allocation8 + $0x5d0] sm:$0xff]
    %v1673 = vld [vmem:[#allocation8 + $0x5d8] sm:$0xff]
    %v1674 = vld [vmem:[#allocation8 + $0x5e0] sm:$0xff]
    %v1675 = vld [vmem:[#allocation8 + $0x5e8] sm:$0xff]
    %v1676 = vld [vmem:[#allocation8 + $0x5f0] sm:$0xff]
    %v1677 = vld [vmem:[#allocation8 + $0x5f8] sm:$0xff]
    %v1678 = vld [vmem:[#allocation8 + $0x600] sm:$0xff]
    %v1679 = vld [vmem:[#allocation8 + $0x608] sm:$0xff]
    %v1680 = vld [vmem:[#allocation8 + $0x610] sm:$0xff]
    %v1681 = vld [vmem:[#allocation8 + $0x618] sm:$0xff]
    %v1682 = vld [vmem:[#allocation8 + $0x620] sm:$0xff]
    %v1683 = vld [vmem:[#allocation8 + $0x628] sm:$0xff]
    %v1684 = vld [vmem:[#allocation8 + $0x630] sm:$0xff]
    %v1685 = vld [vmem:[#allocation8 + $0x638] sm:$0xff]
    %v1686 = vld [vmem:[#allocation8 + $0x640] sm:$0xff]
    %v1687 = vld [vmem:[#allocation8 + $0x648] sm:$0xff]
    %v1688 = vld [vmem:[#allocation8 + $0x650] sm:$0xff]
    %v1689 = vld [vmem:[#allocation8 + $0x658] sm:$0xff]
    %v1690 = vld [vmem:[#allocation8 + $0x660] sm:$0xff]
    %v1691 = vld [vmem:[#allocation8 + $0x668] sm:$0xff]
    %v1692 = vld [vmem:[#allocation8 + $0x670] sm:$0xff]
    %v1693 = vld [vmem:[#allocation8 + $0x678] sm:$0xff]
    %v1694 = vld [vmem:[#allocation8 + $0x680] sm:$0xff]
    %v1695 = vld [vmem:[#allocation8 + $0x688] sm:$0xff]
    %v1696 = vld [vmem:[#allocation8 + $0x690] sm:$0xff]
    %v1697 = vld [vmem:[#allocation8 + $0x698] sm:$0xff]
    %v1698 = vld [vmem:[#allocation8 + $0x6a0] sm:$0xff]
    %v1699 = vld [vmem:[#allocation8 + $0x6a8] sm:$0xff]
    %v1700 = vld [vmem:[#allocation8 + $0x6b0] sm:$0xff]
    %v1701 = vld [vmem:[#allocation8 + $0x6b8] sm:$0xff]
    %v1702 = vld [vmem:[#allocation8 + $0x6c0] sm:$0xff]
    %v1703 = vld [vmem:[#allocation8 + $0x6c8] sm:$0xff]
    %v1704 = vld [vmem:[#allocation8 + $0x6d0] sm:$0xff]
    %v1705 = vld [vmem:[#allocation8 + $0x6d8] sm:$0xff]
    %v1706 = vld [vmem:[#allocation8 + $0x6e0] sm:$0xff]
    %v1707 = vld [vmem:[#allocation8 + $0x6e8] sm:$0xff]
    %v1708 = vld [vmem:[#allocation8 + $0x6f0] sm:$0xff]
    %v1709 = vld [vmem:[#allocation8 + $0x6f8] sm:$0xff]
    %v1710 = vld [vmem:[#allocation8 + $0x700] sm:$0xff]
    %v1711 = vld [vmem:[#allocation8 + $0x708] sm:$0xff]
    %v1712 = vld [vmem:[#allocation8 + $0x710] sm:$0xff]
    %v1713 = vld [vmem:[#allocation8 + $0x718] sm:$0xff]
    %v1714 = vld [vmem:[#allocation8 + $0x720] sm:$0xff]
    %v1715 = vld [vmem:[#allocation8 + $0x728] sm:$0xff]
    %v1716 = vld [vmem:[#allocation8 + $0x730] sm:$0xff]
    %v1717 = vld [vmem:[#allocation8 + $0x738] sm:$0xff]
    %v1718 = vld [vmem:[#allocation8 + $0x740] sm:$0xff]
    %v1719 = vld [vmem:[#allocation8 + $0x748] sm:$0xff]
    %v1720 = vld [vmem:[#allocation8 + $0x750] sm:$0xff]
    %v1721 = vld [vmem:[#allocation8 + $0x758] sm:$0xff]
    %v1722 = vld [vmem:[#allocation8 + $0x760] sm:$0xff]
    %v1723 = vld [vmem:[#allocation8 + $0x768] sm:$0xff]
    %v1724 = vld [vmem:[#allocation8 + $0x770] sm:$0xff]
    %v1725 = vld [vmem:[#allocation8 + $0x778] sm:$0xff]
    %v1726 = vld [vmem:[#allocation8 + $0x780] sm:$0xff]
    %v1727 = vld [vmem:[#allocation8 + $0x788] sm:$0xff]
    %v1728 = vld [vmem:[#allocation8 + $0x790] sm:$0xff]
    %v1729 = vld [vmem:[#allocation8 + $0x798] sm:$0xff]
    %v1730 = vld [vmem:[#allocation8 + $0x7a0] sm:$0xff]
    %v1731 = vld [vmem:[#allocation8 + $0x7a8] sm:$0xff]
    %v1732 = vld [vmem:[#allocation8 + $0x7b0] sm:$0xff]
    %v1733 = vld [vmem:[#allocation8 + $0x7b8] sm:$0xff]
    %v1734 = vld [vmem:[#allocation8 + $0x7c0] sm:$0xff]
    %v1735 = vld [vmem:[#allocation8 + $0x7c8] sm:$0xff]
    %v1736 = vld [vmem:[#allocation8 + $0x7d0] sm:$0xff]
    %v1737 = vld [vmem:[#allocation8 + $0x7d8] sm:$0xff]
    %v1738 = vld [vmem:[#allocation8 + $0x7e0] sm:$0xff]
    %v1739 = vld [vmem:[#allocation8 + $0x7e8] sm:$0xff]
    %v1740 = vld [vmem:[#allocation8 + $0x7f0] sm:$0xff]
    %v1741 = vld [vmem:[#allocation8 + $0x7f8] sm:$0xff]
    %1742 = vmatprep.subr.mxu0 %v1487
    %1743 = vmatpush1.msra.mxu0 %v1486
    %1744 = vmatprep.subr.mxu0 %v1495
    %1745 = vmatpush1.msra.mxu0 %v1494
    %1746 = vmatprep.subr.mxu0 %v1503
    %1747 = vmatpush1.msra.mxu0 %v1502
    %1748 = vmatprep.subr.mxu0 %v1511
    %1749 = vmatpush1.msra.mxu0 %v1510
    %1750 = vmatprep.subr.mxu0 %v1519
    %1751 = vmatpush1.msra.mxu0 %v1518
    %1752 = vmatprep.subr.mxu0 %v1527
    %1753 = vmatpush1.msra.mxu0 %v1526
    %1754 = vmatprep.subr.mxu0 %v1535
    %1755 = vmatpush1.msra.mxu0 %v1534
    %1756 = vmatprep.subr.mxu0 %v1543
    %1757 = vmatpush1.msra.mxu0 %v1542
    %1758 = vmatprep.subr.mxu0 %v1551
    %1759 = vmatpush1.msra.mxu0 %v1550
    %1760 = vmatprep.subr.mxu0 %v1559
    %1761 = vmatpush1.msra.mxu0 %v1558
    %1762 = vmatprep.subr.mxu0 %v1567
    %1763 = vmatpush1.msra.mxu0 %v1566
    %1764 = vmatprep.subr.mxu0 %v1575
    %1765 = vmatpush1.msra.mxu0 %v1574
    %1766 = vmatprep.subr.mxu0 %v1583
    %1767 = vmatpush1.msra.mxu0 %v1582
    %1768 = vmatprep.subr.mxu0 %v1591
    %1769 = vmatpush1.msra.mxu0 %v1590
    %1770 = vmatprep.subr.mxu0 %v1599
    %1771 = vmatpush1.msra.mxu0 %v1598
    %1772 = vmatprep.subr.mxu0 %v1607
    %1773 = vmatpush1.msra.mxu0 %v1606
    %1774 = vmatprep.subr.mxu0 %v1615
    %1775 = vmatpush1.msra.mxu0 %v1614
    %1776 = vmatprep.subr.mxu0 %v1623
    %1777 = vmatpush1.msra.mxu0 %v1622
    %1778 = vmatprep.subr.mxu0 %v1631
    %1779 = vmatpush1.msra.mxu0 %v1630
    %1780 = vmatprep.subr.mxu0 %v1639
    %1781 = vmatpush1.msra.mxu0 %v1638
    %1782 = vmatprep.subr.mxu0 %v1647
    %1783 = vmatpush1.msra.mxu0 %v1646
    %1784 = vmatprep.subr.mxu0 %v1655
    %1785 = vmatpush1.msra.mxu0 %v1654
    %1786 = vmatprep.subr.mxu0 %v1663
    %1787 = vmatpush1.msra.mxu0 %v1662
    %1788 = vmatprep.subr.mxu0 %v1671
    %1789 = vmatpush1.msra.mxu0 %v1670
    %1790 = vmatprep.subr.mxu0 %v1679
    %1791 = vmatpush1.msra.mxu0 %v1678
    %1792 = vmatprep.subr.mxu0 %v1687
    %1793 = vmatpush1.msra.mxu0 %v1686
    %1794 = vmatprep.subr.mxu0 %v1695
    %1795 = vmatpush1.msra.mxu0 %v1694
    %1796 = vmatprep.subr.mxu0 %v1703
    %1797 = vmatpush1.msra.mxu0 %v1702
    %1798 = vmatprep.subr.mxu0 %v1711
    %1799 = vmatpush1.msra.mxu0 %v1710
    %1800 = vmatprep.subr.mxu0 %v1719
    %1801 = vmatpush1.msra.mxu0 %v1718
    %1802 = vmatprep.subr.mxu0 %v1727
    %1803 = vmatpush1.msra.mxu0 %v1726
    %1804 = vmatprep.subr.mxu0 %v1735
    %1805 = vmatpush1.msra.mxu0 %v1734
    %1806 = vmatprep.mubr.f32.mxu0 0.0
    %1807 = vmatmul.mubr.f32.gmra.mrb[0].mxu0 0.0
    %v1808 = vpop.f32.mrb[0].mxu0
    %v1809 = vadd.f32 0.0, %v1808
    %v1810 = vpop.f32.mrb[0].mxu0
    %v1811 = vadd.f32 0.0, %v1810
    %1812 = vdwg.mxu0
    %1813 = vmatprep.subr.mxu0 %v1489
    %1814 = vmatpush1.msra.mxu0 %v1488
    %1815 = vmatprep.subr.mxu0 %v1497
    %1816 = vmatpush1.msra.mxu0 %v1496
    %1817 = vmatprep.subr.mxu0 %v1505
    %1818 = vmatpush1.msra.mxu0 %v1504
    %1819 = vmatprep.subr.mxu0 %v1513
    %1820 = vmatpush1.msra.mxu0 %v1512
    %1821 = vmatprep.subr.mxu0 %v1521
    %1822 = vmatpush1.msra.mxu0 %v1520
    %1823 = vmatprep.subr.mxu0 %v1529
    %1824 = vmatpush1.msra.mxu0 %v1528
    %1825 = vmatprep.subr.mxu0 %v1537
    %1826 = vmatpush1.msra.mxu0 %v1536
    %1827 = vmatprep.subr.mxu0 %v1545
    %1828 = vmatpush1.msra.mxu0 %v1544
    %1829 = vmatprep.subr.mxu0 %v1553
    %1830 = vmatpush1.msra.mxu0 %v1552
    %1831 = vmatprep.subr.mxu0 %v1561
    %1832 = vmatpush1.msra.mxu0 %v1560
    %1833 = vmatprep.subr.mxu0 %v1569
    %1834 = vmatpush1.msra.mxu0 %v1568
    %1835 = vmatprep.subr.mxu0 %v1577
    %1836 = vmatpush1.msra.mxu0 %v1576
    %1837 = vmatprep.subr.mxu0 %v1585
    %1838 = vmatpush1.msra.mxu0 %v1584
    %1839 = vmatprep.subr.mxu0 %v1593
    %1840 = vmatpush1.msra.mxu0 %v1592
    %1841 = vmatprep.subr.mxu0 %v1601
    %1842 = vmatpush1.msra.mxu0 %v1600
    %1843 = vmatprep.subr.mxu0 %v1609
    %1844 = vmatpush1.msra.mxu0 %v1608
    %1845 = vmatprep.subr.mxu0 %v1617
    %1846 = vmatpush1.msra.mxu0 %v1616
    %1847 = vmatprep.subr.mxu0 %v1625
    %1848 = vmatpush1.msra.mxu0 %v1624
    %1849 = vmatprep.subr.mxu0 %v1633
    %1850 = vmatpush1.msra.mxu0 %v1632
    %1851 = vmatprep.subr.mxu0 %v1641
    %1852 = vmatpush1.msra.mxu0 %v1640
    %1853 = vmatprep.subr.mxu0 %v1649
    %1854 = vmatpush1.msra.mxu0 %v1648
    %1855 = vmatprep.subr.mxu0 %v1657
    %1856 = vmatpush1.msra.mxu0 %v1656
    %1857 = vmatprep.subr.mxu0 %v1665
    %1858 = vmatpush1.msra.mxu0 %v1664
    %1859 = vmatprep.subr.mxu0 %v1673
    %1860 = vmatpush1.msra.mxu0 %v1672
    %1861 = vmatprep.subr.mxu0 %v1681
    %1862 = vmatpush1.msra.mxu0 %v1680
    %1863 = vmatprep.subr.mxu0 %v1689
    %1864 = vmatpush1.msra.mxu0 %v1688
    %1865 = vmatprep.subr.mxu0 %v1697
    %1866 = vmatpush1.msra.mxu0 %v1696
    %1867 = vmatprep.subr.mxu0 %v1705
    %1868 = vmatpush1.msra.mxu0 %v1704
    %1869 = vmatprep.subr.mxu0 %v1713
    %1870 = vmatpush1.msra.mxu0 %v1712
    %1871 = vmatprep.subr.mxu0 %v1721
    %1872 = vmatpush1.msra.mxu0 %v1720
    %1873 = vmatprep.subr.mxu0 %v1729
    %1874 = vmatpush1.msra.mxu0 %v1728
    %1875 = vmatprep.subr.mxu0 %v1737
    %1876 = vmatpush1.msra.mxu0 %v1736
    %1877 = vmatprep.mubr.f32.mxu0 0.0
    %1878 = vmatmul.mubr.f32.gmra.mrb[0].mxu0 0.0
    %v1879 = vpop.f32.mrb[0].mxu0
    %v1880 = vadd.f32 0.0, %v1879
    %v1881 = vpop.f32.mrb[0].mxu0
    %v1882 = vadd.f32 0.0, %v1881
    %1883 = vdwg.mxu0
    %1884 = vmatprep.subr.mxu0 %v1491
    %1885 = vmatpush1.msra.mxu0 %v1490
    %1886 = vmatprep.subr.mxu0 %v1499
    %1887 = vmatpush1.msra.mxu0 %v1498
    %1888 = vmatprep.subr.mxu0 %v1507
    %1889 = vmatpush1.msra.mxu0 %v1506
    %1890 = vmatprep.subr.mxu0 %v1515
    %1891 = vmatpush1.msra.mxu0 %v1514
    %1892 = vmatprep.subr.mxu0 %v1523
    %1893 = vmatpush1.msra.mxu0 %v1522
    %1894 = vmatprep.subr.mxu0 %v1531
    %1895 = vmatpush1.msra.mxu0 %v1530
    %1896 = vmatprep.subr.mxu0 %v1539
    %1897 = vmatpush1.msra.mxu0 %v1538
    %1898 = vmatprep.subr.mxu0 %v1547
    %1899 = vmatpush1.msra.mxu0 %v1546
    %1900 = vmatprep.subr.mxu0 %v1555
    %1901 = vmatpush1.msra.mxu0 %v1554
    %1902 = vmatprep.subr.mxu0 %v1563
    %1903 = vmatpush1.msra.mxu0 %v1562
    %1904 = vmatprep.subr.mxu0 %v1571
    %1905 = vmatpush1.msra.mxu0 %v1570
    %1906 = vmatprep.subr.mxu0 %v1579
    %1907 = vmatpush1.msra.mxu0 %v1578
    %1908 = vmatprep.subr.mxu0 %v1587
    %1909 = vmatpush1.msra.mxu0 %v1586
    %1910 = vmatprep.subr.mxu0 %v1595
    %1911 = vmatpush1.msra.mxu0 %v1594
    %1912 = vmatprep.subr.mxu0 %v1603
    %1913 = vmatpush1.msra.mxu0 %v1602
    %1914 = vmatprep.subr.mxu0 %v1611
    %1915 = vmatpush1.msra.mxu0 %v1610
    %1916 = vmatprep.subr.mxu0 %v1619
    %1917 = vmatpush1.msra.mxu0 %v1618
    %1918 = vmatprep.subr.mxu0 %v1627
    %1919 = vmatpush1.msra.mxu0 %v1626
    %1920 = vmatprep.subr.mxu0 %v1635
    %1921 = vmatpush1.msra.mxu0 %v1634
    %1922 = vmatprep.subr.mxu0 %v1643
    %1923 = vmatpush1.msra.mxu0 %v1642
    %1924 = vmatprep.subr.mxu0 %v1651
    %1925 = vmatpush1.msra.mxu0 %v1650
    %1926 = vmatprep.subr.mxu0 %v1659
    %1927 = vmatpush1.msra.mxu0 %v1658
    %1928 = vmatprep.subr.mxu0 %v1667
    %1929 = vmatpush1.msra.mxu0 %v1666
    %1930 = vmatprep.subr.mxu0 %v1675
    %1931 = vmatpush1.msra.mxu0 %v1674
    %1932 = vmatprep.subr.mxu0 %v1683
    %1933 = vmatpush1.msra.mxu0 %v1682
    %1934 = vmatprep.subr.mxu0 %v1691
    %1935 = vmatpush1.msra.mxu0 %v1690
    %1936 = vmatprep.subr.mxu0 %v1699
    %1937 = vmatpush1.msra.mxu0 %v1698
    %1938 = vmatprep.subr.mxu0 %v1707
    %1939 = vmatpush1.msra.mxu0 %v1706
    %1940 = vmatprep.subr.mxu0 %v1715
    %1941 = vmatpush1.msra.mxu0 %v1714
    %1942 = vmatprep.subr.mxu0 %v1723
    %1943 = vmatpush1.msra.mxu0 %v1722
    %1944 = vmatprep.subr.mxu0 %v1731
    %1945 = vmatpush1.msra.mxu0 %v1730
    %1946 = vmatprep.subr.mxu0 %v1739
    %1947 = vmatpush1.msra.mxu0 %v1738
    %1948 = vmatprep.mubr.f32.mxu0 0.0
    %1949 = vmatmul.mubr.f32.gmra.mrb[0].mxu0 0.0
    %v1950 = vpop.f32.mrb[0].mxu0
    %v1951 = vadd.f32 0.0, %v1950
    %v1952 = vpop.f32.mrb[0].mxu0
    %v1953 = vadd.f32 0.0, %v1952
    %1954 = vdwg.mxu0
    %1955 = vmatprep.subr.mxu0 %v1493
    %1956 = vmatpush1.msra.mxu0 %v1492
    %1957 = vmatprep.subr.mxu0 %v1501
    %1958 = vmatpush1.msra.mxu0 %v1500
    %1959 = vmatprep.subr.mxu0 %v1509
    %1960 = vmatpush1.msra.mxu0 %v1508
    %1961 = vmatprep.subr.mxu0 %v1517
    %1962 = vmatpush1.msra.mxu0 %v1516
    %1963 = vmatprep.subr.mxu0 %v1525
    %1964 = vmatpush1.msra.mxu0 %v1524
    %1965 = vmatprep.subr.mxu0 %v1533
    %1966 = vmatpush1.msra.mxu0 %v1532
    %1967 = vmatprep.subr.mxu0 %v1541
    %1968 = vmatpush1.msra.mxu0 %v1540
    %1969 = vmatprep.subr.mxu0 %v1549
    %1970 = vmatpush1.msra.mxu0 %v1548
    %1971 = vmatprep.subr.mxu0 %v1557
    %1972 = vmatpush1.msra.mxu0 %v1556
    %1973 = vmatprep.subr.mxu0 %v1565
    %1974 = vmatpush1.msra.mxu0 %v1564
    %1975 = vmatprep.subr.mxu0 %v1573
    %1976 = vmatpush1.msra.mxu0 %v1572
    %1977 = vmatprep.subr.mxu0 %v1581
    %1978 = vmatpush1.msra.mxu0 %v1580
    %1979 = vmatprep.subr.mxu0 %v1589
    %1980 = vmatpush1.msra.mxu0 %v1588
    %1981 = vmatprep.subr.mxu0 %v1597
    %1982 = vmatpush1.msra.mxu0 %v1596
    %1983 = vmatprep.subr.mxu0 %v1605
    %1984 = vmatpush1.msra.mxu0 %v1604
    %1985 = vmatprep.subr.mxu0 %v1613
    %1986 = vmatpush1.msra.mxu0 %v1612
    %1987 = vmatprep.subr.mxu0 %v1621
    %1988 = vmatpush1.msra.mxu0 %v1620
    %1989 = vmatprep.subr.mxu0 %v1629
    %1990 = vmatpush1.msra.mxu0 %v1628
    %1991 = vmatprep.subr.mxu0 %v1637
    %1992 = vmatpush1.msra.mxu0 %v1636
    %1993 = vmatprep.subr.mxu0 %v1645
    %1994 = vmatpush1.msra.mxu0 %v1644
    %1995 = vmatprep.subr.mxu0 %v1653
    %1996 = vmatpush1.msra.mxu0 %v1652
    %1997 = vmatprep.subr.mxu0 %v1661
    %1998 = vmatpush1.msra.mxu0 %v1660
    %1999 = vmatprep.subr.mxu0 %v1669
    %2000 = vmatpush1.msra.mxu0 %v1668
    %2001 = vmatprep.subr.mxu0 %v1677
    %2002 = vmatpush1.msra.mxu0 %v1676
    %2003 = vmatprep.subr.mxu0 %v1685
    %2004 = vmatpush1.msra.mxu0 %v1684
    %2005 = vmatprep.subr.mxu0 %v1693
    %2006 = vmatpush1.msra.mxu0 %v1692
    %2007 = vmatprep.subr.mxu0 %v1701
    %2008 = vmatpush1.msra.mxu0 %v1700
    %2009 = vmatprep.subr.mxu0 %v1709
    %2010 = vmatpush1.msra.mxu0 %v1708
    %2011 = vmatprep.subr.mxu0 %v1717
    %2012 = vmatpush1.msra.mxu0 %v1716
    %2013 = vmatprep.subr.mxu0 %v1725
    %2014 = vmatpush1.msra.mxu0 %v1724
    %2015 = vmatprep.subr.mxu0 %v1733
    %2016 = vmatpush1.msra.mxu0 %v1732
    %2017 = vmatprep.subr.mxu0 %v1741
    %2018 = vmatpush1.msra.mxu0 %v1740
    %2019 = vmatprep.mubr.f32.mxu0 0.0
    %2020 = vmatmul.mubr.f32.gmra.mrb[0].mxu0 0.0
    %v2021 = vpop.f32.mrb[0].mxu0
    %v2022 = vadd.f32 0.0, %v2021
    %v2023 = vpop.f32.mrb[0].mxu0
    %v2024 = vadd.f32 0.0, %v2023
    %2025 = vdwg.mxu0
    %v2034 = vrot.slane %v1809, 2
    %v2035 = vrot.slane %v1811, 2
    %v2036 = vrot.slane %v1880, 2
    %v2037 = vrot.slane %v1882, 2
    %v2038 = vrot.slane %v1951, 2
    %v2039 = vrot.slane %v1953, 2
    %v2040 = vrot.slane %v2022, 2
    %v2041 = vrot.slane %v2024, 2
    %v2050 = vadd.f32 %v882, %v2034
    %v2051 = vadd.f32 %v883, %v2035
    %v2052 = vadd.f32 %v884, %v2036
    %v2053 = vadd.f32 %v885, %v2037
    %v2054 = vadd.f32 %v886, %v2038
    %v2055 = vadd.f32 %v887, %v2039
    %v2056 = vadd.f32 %v888, %v2040
    %v2057 = vadd.f32 %v889, %v2041
    %v2058 = vxor.u32 %v2050, 2147483648
    %v2059 = vxor.u32 %v2051, 2147483648
    %v2060 = vmul.f32 %v2058, 1.442695
    %v2061 = vpow.pop %v2060
    %v2062 = vmul.f32 %v2059, 1.442695
    %v2063 = vpow.pop %v2062
    %v2064 = vadd.f32 %v2061, 1.0
    %v2065 = vadd.f32 %v2063, 1.0
    %v2066 = vrcp.pop %v2064
    %v2067 = vmul.f32 1.0, %v2066
    %v2068 = vrcp.pop %v2065
    %v2069 = vmul.f32 1.0, %v2068
    %v2070 = vxor.u32 %v2052, 2147483648
    %v2071 = vxor.u32 %v2053, 2147483648
    %v2072 = vmul.f32 %v2070, 1.442695
    %v2073 = vpow.pop %v2072
    %v2074 = vmul.f32 %v2071, 1.442695
    %v2075 = vpow.pop %v2074
    %v2076 = vadd.f32 %v2073, 1.0
    %v2077 = vadd.f32 %v2075, 1.0
    %v2078 = vrcp.pop %v2076
    %v2079 = vmul.f32 1.0, %v2078
    %v2080 = vrcp.pop %v2077
    %v2081 = vmul.f32 1.0, %v2080
    %v2082 = vtanh.pop %v2054
    %v2083 = vtanh.pop %v2055
    %v2084 = vxor.u32 %v2056, 2147483648
    %v2085 = vxor.u32 %v2057, 2147483648
    %v2086 = vmul.f32 %v2084, 1.442695
    %v2087 = vpow.pop %v2086
    %v2088 = vmul.f32 %v2085, 1.442695
    %v2089 = vpow.pop %v2088
    %v2090 = vadd.f32 %v2087, 1.0
    %v2091 = vadd.f32 %v2089, 1.0
    %v2092 = vrcp.pop %v2090
    %v2093 = vmul.f32 1.0, %v2092
    %v2094 = vrcp.pop %v2091
    %v2095 = vmul.f32 1.0, %v2094
    %v2096 = vmul.f32 %v2079, 0.0
    %v2097 = vmul.f32 %v2081, 0.0
    %v2098 = vmul.f32 %v2067, %v2082
    %v2099 = vmul.f32 %v2069, %v2083
    %v2100 = vadd.f32 %v2096, %v2098
    %v2101 = vadd.f32 %v2097, %v2099
    %v2102 = vtanh.pop %v2100
    %v2103 = vtanh.pop %v2101
    %v2104 = vmul.f32 %v2093, %v2102
    %v2105 = vmul.f32 %v2095, %v2103
    %v2106 = vld [vmem:[#allocation2] sm:$0xc]
    %v2107 = vld [vmem:[#allocation2 + $0x8] sm:$0xc]
    %v2108 = vld [vmem:[#allocation2 + $0x10] sm:$0xc]
    %v2109 = vld [vmem:[#allocation2 + $0x18] sm:$0xc]
    %v2110 = vld [vmem:[#allocation2 + $0x20] sm:$0xc]
    %v2111 = vld [vmem:[#allocation2 + $0x28] sm:$0xc]
    %v2112 = vld [vmem:[#allocation2 + $0x30] sm:$0xc]
    %v2113 = vld [vmem:[#allocation2 + $0x38] sm:$0xc]
    %2114 = vmatprep.subr.mxu0 %v891
    %2115 = vmatpush1.msra.mxu0 %v890
    %2116 = vmatprep.subr.mxu0 %v899
    %2117 = vmatpush1.msra.mxu0 %v898
    %2118 = vmatprep.subr.mxu0 %v907
    %2119 = vmatpush1.msra.mxu0 %v906
    %2120 = vmatprep.subr.mxu0 %v915
    %2121 = vmatpush1.msra.mxu0 %v914
    %2122 = vmatprep.subr.mxu0 %v923
    %2123 = vmatpush1.msra.mxu0 %v922
    %2124 = vmatprep.subr.mxu0 %v931
    %2125 = vmatpush1.msra.mxu0 %v930
    %2126 = vmatprep.subr.mxu0 %v939
    %2127 = vmatpush1.msra.mxu0 %v938
    %2128 = vmatprep.subr.mxu0 %v947
    %2129 = vmatpush1.msra.mxu0 %v946
    %2130 = vmatprep.subr.mxu0 %v955
    %2131 = vmatpush1.msra.mxu0 %v954
    %2132 = vmatprep.subr.mxu0 %v963
    %2133 = vmatpush1.msra.mxu0 %v962
    %2134 = vmatprep.subr.mxu0 %v971
    %2135 = vmatpush1.msra.mxu0 %v970
    %2136 = vmatprep.subr.mxu0 %v979
    %2137 = vmatpush1.msra.mxu0 %v978
    %2138 = vmatprep.subr.mxu0 %v987
    %2139 = vmatpush1.msra.mxu0 %v986
    %2140 = vmatprep.subr.mxu0 %v995
    %2141 = vmatpush1.msra.mxu0 %v994
    %2142 = vmatprep.subr.mxu0 %v1003
    %2143 = vmatpush1.msra.mxu0 %v1002
    %2144 = vmatprep.subr.mxu0 %v1011
    %2145 = vmatpush1.msra.mxu0 %v1010
    %2146 = vmatprep.subr.mxu0 %v1019
    %2147 = vmatpush1.msra.mxu0 %v1018
    %2148 = vmatprep.subr.mxu0 %v1027
    %2149 = vmatpush1.msra.mxu0 %v1026
    %2150 = vmatprep.subr.mxu0 %v1035
    %2151 = vmatpush1.msra.mxu0 %v1034
    %2152 = vmatprep.subr.mxu0 %v1043
    %2153 = vmatpush1.msra.mxu0 %v1042
    %2154 = vmatprep.subr.mxu0 %v1051
    %2155 = vmatpush1.msra.mxu0 %v1050
    %2156 = vmatprep.subr.mxu0 %v1059
    %2157 = vmatpush1.msra.mxu0 %v1058
    %2158 = vmatprep.subr.mxu0 %v1067
    %2159 = vmatpush1.msra.mxu0 %v1066
    %2160 = vmatprep.subr.mxu0 %v1075
    %2161 = vmatpush1.msra.mxu0 %v1074
    %2162 = vmatprep.subr.mxu0 %v1083
    %2163 = vmatpush1.msra.mxu0 %v1082
    %2164 = vmatprep.subr.mxu0 %v1091
    %2165 = vmatpush1.msra.mxu0 %v1090
    %2166 = vmatprep.subr.mxu0 %v1099
    %2167 = vmatpush1.msra.mxu0 %v1098
    %2168 = vmatprep.subr.mxu0 %v1107
    %2169 = vmatpush1.msra.mxu0 %v1106
    %2170 = vmatprep.subr.mxu0 %v1115
    %2171 = vmatpush1.msra.mxu0 %v1114
    %2172 = vmatprep.subr.mxu0 %v1123
    %2173 = vmatpush1.msra.mxu0 %v1122
    %2174 = vmatprep.subr.mxu0 %v1131
    %2175 = vmatpush1.msra.mxu0 %v1130
    %2176 = vmatprep.subr.mxu0 %v1139
    %2177 = vmatpush1.msra.mxu0 %v1138
    %2178 = vmatprep.mubr.f32.mxu0 %v1485
    %2179 = vmatmul.mubr.f32.gmra.mrb[0].mxu0 %v1484
    %v2180 = vpop.f32.mrb[0].mxu0
    %v2181 = vadd.f32 0.0, %v2180
    %v2182 = vpop.f32.mrb[0].mxu0
    %v2183 = vadd.f32 0.0, %v2182
    %2184 = vdwg.mxu0
    %2185 = vmatprep.subr.mxu0 %v893
    %2186 = vmatpush1.msra.mxu0 %v892
    %2187 = vmatprep.subr.mxu0 %v901
    %2188 = vmatpush1.msra.mxu0 %v900
    %2189 = vmatprep.subr.mxu0 %v909
    %2190 = vmatpush1.msra.mxu0 %v908
    %2191 = vmatprep.subr.mxu0 %v917
    %2192 = vmatpush1.msra.mxu0 %v916
    %2193 = vmatprep.subr.mxu0 %v925
    %2194 = vmatpush1.msra.mxu0 %v924
    %2195 = vmatprep.subr.mxu0 %v933
    %2196 = vmatpush1.msra.mxu0 %v932
    %2197 = vmatprep.subr.mxu0 %v941
    %2198 = vmatpush1.msra.mxu0 %v940
    %2199 = vmatprep.subr.mxu0 %v949
    %2200 = vmatpush1.msra.mxu0 %v948
    %2201 = vmatprep.subr.mxu0 %v957
    %2202 = vmatpush1.msra.mxu0 %v956
    %2203 = vmatprep.subr.mxu0 %v965
    %2204 = vmatpush1.msra.mxu0 %v964
    %2205 = vmatprep.subr.mxu0 %v973
    %2206 = vmatpush1.msra.mxu0 %v972
    %2207 = vmatprep.subr.mxu0 %v981
    %2208 = vmatpush1.msra.mxu0 %v980
    %2209 = vmatprep.subr.mxu0 %v989
    %2210 = vmatpush1.msra.mxu0 %v988
    %2211 = vmatprep.subr.mxu0 %v997
    %2212 = vmatpush1.msra.mxu0 %v996
    %2213 = vmatprep.subr.mxu0 %v1005
    %2214 = vmatpush1.msra.mxu0 %v1004
    %2215 = vmatprep.subr.mxu0 %v1013
    %2216 = vmatpush1.msra.mxu0 %v1012
    %2217 = vmatprep.subr.mxu0 %v1021
    %2218 = vmatpush1.msra.mxu0 %v1020
    %2219 = vmatprep.subr.mxu0 %v1029
    %2220 = vmatpush1.msra.mxu0 %v1028
    %2221 = vmatprep.subr.mxu0 %v1037
    %2222 = vmatpush1.msra.mxu0 %v1036
    %2223 = vmatprep.subr.mxu0 %v1045
    %2224 = vmatpush1.msra.mxu0 %v1044
    %2225 = vmatprep.subr.mxu0 %v1053
    %2226 = vmatpush1.msra.mxu0 %v1052
    %2227 = vmatprep.subr.mxu0 %v1061
    %2228 = vmatpush1.msra.mxu0 %v1060
    %2229 = vmatprep.subr.mxu0 %v1069
    %2230 = vmatpush1.msra.mxu0 %v1068
    %2231 = vmatprep.subr.mxu0 %v1077
    %2232 = vmatpush1.msra.mxu0 %v1076
    %2233 = vmatprep.subr.mxu0 %v1085
    %2234 = vmatpush1.msra.mxu0 %v1084
    %2235 = vmatprep.subr.mxu0 %v1093
    %2236 = vmatpush1.msra.mxu0 %v1092
    %2237 = vmatprep.subr.mxu0 %v1101
    %2238 = vmatpush1.msra.mxu0 %v1100
    %2239 = vmatprep.subr.mxu0 %v1109
    %2240 = vmatpush1.msra.mxu0 %v1108
    %2241 = vmatprep.subr.mxu0 %v1117
    %2242 = vmatpush1.msra.mxu0 %v1116
    %2243 = vmatprep.subr.mxu0 %v1125
    %2244 = vmatpush1.msra.mxu0 %v1124
    %2245 = vmatprep.subr.mxu0 %v1133
    %2246 = vmatpush1.msra.mxu0 %v1132
    %2247 = vmatprep.subr.mxu0 %v1141
    %2248 = vmatpush1.msra.mxu0 %v1140
    %2249 = vmatprep.mubr.f32.mxu0 %v1485
    %2250 = vmatmul.mubr.f32.gmra.mrb[0].mxu0 %v1484
    %v2251 = vpop.f32.mrb[0].mxu0
    %v2252 = vadd.f32 0.0, %v2251
    %v2253 = vpop.f32.mrb[0].mxu0
    %v2254 = vadd.f32 0.0, %v2253
    %2255 = vdwg.mxu0
    %2256 = vmatprep.subr.mxu0 %v895
    %2257 = vmatpush1.msra.mxu0 %v894
    %2258 = vmatprep.subr.mxu0 %v903
    %2259 = vmatpush1.msra.mxu0 %v902
    %2260 = vmatprep.subr.mxu0 %v911
    %2261 = vmatpush1.msra.mxu0 %v910
    %2262 = vmatprep.subr.mxu0 %v919
    %2263 = vmatpush1.msra.mxu0 %v918
    %2264 = vmatprep.subr.mxu0 %v927
    %2265 = vmatpush1.msra.mxu0 %v926
    %2266 = vmatprep.subr.mxu0 %v935
    %2267 = vmatpush1.msra.mxu0 %v934
    %2268 = vmatprep.subr.mxu0 %v943
    %2269 = vmatpush1.msra.mxu0 %v942
    %2270 = vmatprep.subr.mxu0 %v951
    %2271 = vmatpush1.msra.mxu0 %v950
    %2272 = vmatprep.subr.mxu0 %v959
    %2273 = vmatpush1.msra.mxu0 %v958
    %2274 = vmatprep.subr.mxu0 %v967
    %2275 = vmatpush1.msra.mxu0 %v966
    %2276 = vmatprep.subr.mxu0 %v975
    %2277 = vmatpush1.msra.mxu0 %v974
    %2278 = vmatprep.subr.mxu0 %v983
    %2279 = vmatpush1.msra.mxu0 %v982
    %2280 = vmatprep.subr.mxu0 %v991
    %2281 = vmatpush1.msra.mxu0 %v990
    %2282 = vmatprep.subr.mxu0 %v999
    %2283 = vmatpush1.msra.mxu0 %v998
    %2284 = vmatprep.subr.mxu0 %v1007
    %2285 = vmatpush1.msra.mxu0 %v1006
    %2286 = vmatprep.subr.mxu0 %v1015
    %2287 = vmatpush1.msra.mxu0 %v1014
    %2288 = vmatprep.subr.mxu0 %v1023
    %2289 = vmatpush1.msra.mxu0 %v1022
    %2290 = vmatprep.subr.mxu0 %v1031
    %2291 = vmatpush1.msra.mxu0 %v1030
    %2292 = vmatprep.subr.mxu0 %v1039
    %2293 = vmatpush1.msra.mxu0 %v1038
    %2294 = vmatprep.subr.mxu0 %v1047
    %2295 = vmatpush1.msra.mxu0 %v1046
    %2296 = vmatprep.subr.mxu0 %v1055
    %2297 = vmatpush1.msra.mxu0 %v1054
    %2298 = vmatprep.subr.mxu0 %v1063
    %2299 = vmatpush1.msra.mxu0 %v1062
    %2300 = vmatprep.subr.mxu0 %v1071
    %2301 = vmatpush1.msra.mxu0 %v1070
    %2302 = vmatprep.subr.mxu0 %v1079
    %2303 = vmatpush1.msra.mxu0 %v1078
    %2304 = vmatprep.subr.mxu0 %v1087
    %2305 = vmatpush1.msra.mxu0 %v1086
    %2306 = vmatprep.subr.mxu0 %v1095
    %2307 = vmatpush1.msra.mxu0 %v1094
    %2308 = vmatprep.subr.mxu0 %v1103
    %2309 = vmatpush1.msra.mxu0 %v1102
    %2310 = vmatprep.subr.mxu0 %v1111
    %2311 = vmatpush1.msra.mxu0 %v1110
    %2312 = vmatprep.subr.mxu0 %v1119
    %2313 = vmatpush1.msra.mxu0 %v1118
    %2314 = vmatprep.subr.mxu0 %v1127
    %2315 = vmatpush1.msra.mxu0 %v1126
    %2316 = vmatprep.subr.mxu0 %v1135
    %2317 = vmatpush1.msra.mxu0 %v1134
    %2318 = vmatprep.subr.mxu0 %v1143
    %2319 = vmatpush1.msra.mxu0 %v1142
    %2320 = vmatprep.mubr.f32.mxu0 %v1485
    %2321 = vmatmul.mubr.f32.gmra.mrb[0].mxu0 %v1484
    %v2322 = vpop.f32.mrb[0].mxu0
    %v2323 = vadd.f32 0.0, %v2322
    %v2324 = vpop.f32.mrb[0].mxu0
    %v2325 = vadd.f32 0.0, %v2324
    %2326 = vdwg.mxu0
    %2327 = vmatprep.subr.mxu0 %v897
    %2328 = vmatpush1.msra.mxu0 %v896
    %2329 = vmatprep.subr.mxu0 %v905
    %2330 = vmatpush1.msra.mxu0 %v904
    %2331 = vmatprep.subr.mxu0 %v913
    %2332 = vmatpush1.msra.mxu0 %v912
    %2333 = vmatprep.subr.mxu0 %v921
    %2334 = vmatpush1.msra.mxu0 %v920
    %2335 = vmatprep.subr.mxu0 %v929
    %2336 = vmatpush1.msra.mxu0 %v928
    %2337 = vmatprep.subr.mxu0 %v937
    %2338 = vmatpush1.msra.mxu0 %v936
    %2339 = vmatprep.subr.mxu0 %v945
    %2340 = vmatpush1.msra.mxu0 %v944
    %2341 = vmatprep.subr.mxu0 %v953
    %2342 = vmatpush1.msra.mxu0 %v952
    %2343 = vmatprep.subr.mxu0 %v961
    %2344 = vmatpush1.msra.mxu0 %v960
    %2345 = vmatprep.subr.mxu0 %v969
    %2346 = vmatpush1.msra.mxu0 %v968
    %2347 = vmatprep.subr.mxu0 %v977
    %2348 = vmatpush1.msra.mxu0 %v976
    %2349 = vmatprep.subr.mxu0 %v985
    %2350 = vmatpush1.msra.mxu0 %v984
    %2351 = vmatprep.subr.mxu0 %v993
    %2352 = vmatpush1.msra.mxu0 %v992
    %2353 = vmatprep.subr.mxu0 %v1001
    %2354 = vmatpush1.msra.mxu0 %v1000
    %2355 = vmatprep.subr.mxu0 %v1009
    %2356 = vmatpush1.msra.mxu0 %v1008
    %2357 = vmatprep.subr.mxu0 %v1017
    %2358 = vmatpush1.msra.mxu0 %v1016
    %2359 = vmatprep.subr.mxu0 %v1025
    %2360 = vmatpush1.msra.mxu0 %v1024
    %2361 = vmatprep.subr.mxu0 %v1033
    %2362 = vmatpush1.msra.mxu0 %v1032
    %2363 = vmatprep.subr.mxu0 %v1041
    %2364 = vmatpush1.msra.mxu0 %v1040
    %2365 = vmatprep.subr.mxu0 %v1049
    %2366 = vmatpush1.msra.mxu0 %v1048
    %2367 = vmatprep.subr.mxu0 %v1057
    %2368 = vmatpush1.msra.mxu0 %v1056
    %2369 = vmatprep.subr.mxu0 %v1065
    %2370 = vmatpush1.msra.mxu0 %v1064
    %2371 = vmatprep.subr.mxu0 %v1073
    %2372 = vmatpush1.msra.mxu0 %v1072
    %2373 = vmatprep.subr.mxu0 %v1081
    %2374 = vmatpush1.msra.mxu0 %v1080
    %2375 = vmatprep.subr.mxu0 %v1089
    %2376 = vmatpush1.msra.mxu0 %v1088
    %2377 = vmatprep.subr.mxu0 %v1097
    %2378 = vmatpush1.msra.mxu0 %v1096
    %2379 = vmatprep.subr.mxu0 %v1105
    %2380 = vmatpush1.msra.mxu0 %v1104
    %2381 = vmatprep.subr.mxu0 %v1113
    %2382 = vmatpush1.msra.mxu0 %v1112
    %2383 = vmatprep.subr.mxu0 %v1121
    %2384 = vmatpush1.msra.mxu0 %v1120
    %2385 = vmatprep.subr.mxu0 %v1129
    %2386 = vmatpush1.msra.mxu0 %v1128
    %2387 = vmatprep.subr.mxu0 %v1137
    %2388 = vmatpush1.msra.mxu0 %v1136
    %2389 = vmatprep.subr.mxu0 %v1145
    %2390 = vmatpush1.msra.mxu0 %v1144
    %2391 = vmatprep.mubr.f32.mxu0 %v1485
    %2392 = vmatmul.mubr.f32.gmra.mrb[0].mxu0 %v1484
    %v2393 = vpop.f32.mrb[0].mxu0
    %v2394 = vadd.f32 0.0, %v2393
    %v2395 = vpop.f32.mrb[0].mxu0
    %v2396 = vadd.f32 0.0, %v2395
    %2397 = vdwg.mxu0
    %v2406 = vrot.slane %v2181, 6
    %v2407 = vrot.slane %v2183, 6
    %v2408 = vrot.slane %v2252, 6
    %v2409 = vrot.slane %v2254, 6
    %v2410 = vrot.slane %v2323, 6
    %v2411 = vrot.slane %v2325, 6
    %v2412 = vrot.slane %v2394, 6
    %v2413 = vrot.slane %v2396, 6
    %v2422 = vadd.f32 %v2106, %v2406
    %v2423 = vadd.f32 %v2107, %v2407
    %v2424 = vadd.f32 %v2108, %v2408
    %v2425 = vadd.f32 %v2109, %v2409
    %v2426 = vadd.f32 %v2110, %v2410
    %v2427 = vadd.f32 %v2111, %v2411
    %v2428 = vadd.f32 %v2112, %v2412
    %v2429 = vadd.f32 %v2113, %v2413
    %v2430 = vxor.u32 %v2422, 2147483648
    %v2431 = vxor.u32 %v2423, 2147483648
    %v2432 = vmul.f32 %v2430, 1.442695
    %v2433 = vpow.pop %v2432
    %v2434 = vmul.f32 %v2431, 1.442695
    %v2435 = vpow.pop %v2434
    %v2436 = vadd.f32 %v2433, 1.0
    %v2437 = vadd.f32 %v2435, 1.0
    %v2438 = vrcp.pop %v2436
    %v2439 = vmul.f32 1.0, %v2438
    %v2440 = vrcp.pop %v2437
    %v2441 = vmul.f32 1.0, %v2440
    %v2442 = vxor.u32 %v2424, 2147483648
    %v2443 = vxor.u32 %v2425, 2147483648
    %v2444 = vmul.f32 %v2442, 1.442695
    %v2445 = vpow.pop %v2444
    %v2446 = vmul.f32 %v2443, 1.442695
    %v2447 = vpow.pop %v2446
    %v2448 = vadd.f32 %v2445, 1.0
    %v2449 = vadd.f32 %v2447, 1.0
    %v2450 = vrcp.pop %v2448
    %v2451 = vmul.f32 1.0, %v2450
    %v2452 = vrcp.pop %v2449
    %v2453 = vmul.f32 1.0, %v2452
    %v2454 = vtanh.pop %v2426
    %v2455 = vtanh.pop %v2427
    %v2456 = vxor.u32 %v2428, 2147483648
    %v2457 = vxor.u32 %v2429, 2147483648
    %v2458 = vmul.f32 %v2456, 1.442695
    %v2459 = vpow.pop %v2458
    %v2460 = vmul.f32 %v2457, 1.442695
    %v2461 = vpow.pop %v2460
    %v2462 = vadd.f32 %v2459, 1.0
    %v2463 = vadd.f32 %v2461, 1.0
    %v2464 = vrcp.pop %v2462
    %v2465 = vmul.f32 1.0, %v2464
    %v2466 = vrcp.pop %v2463
    %v2467 = vmul.f32 1.0, %v2466
    %v2470 = vrot.slane %v1480, 6
    %v2471 = vrot.slane %v1481, 6
    %v2474 = vmul.f32 %v2451, %v2470
    %v2475 = vmul.f32 %v2453, %v2471
    %v2476 = vmul.f32 %v2439, %v2454
    %v2477 = vmul.f32 %v2441, %v2455
    %v2478 = vadd.f32 %v2474, %v2476
    %v2479 = vadd.f32 %v2475, %v2477
    %v2480 = vtanh.pop %v2478
    %v2481 = vtanh.pop %v2479
    %v2482 = vmul.f32 %v2465, %v2480
    %v2483 = vmul.f32 %v2467, %v2481
    %v2484 = vld [vmem:[#allocation2] sm:$0x30]
    %v2485 = vld [vmem:[#allocation2 + $0x8] sm:$0x30]
    %v2486 = vld [vmem:[#allocation2 + $0x10] sm:$0x30]
    %v2487 = vld [vmem:[#allocation2 + $0x18] sm:$0x30]
    %v2488 = vld [vmem:[#allocation2 + $0x20] sm:$0x30]
    %v2489 = vld [vmem:[#allocation2 + $0x28] sm:$0x30]
    %v2490 = vld [vmem:[#allocation2 + $0x30] sm:$0x30]
    %v2491 = vld [vmem:[#allocation2 + $0x38] sm:$0x30]
    %v2494 = vrot.slane %v2482, 2
    %v2495 = vrot.slane %v2483, 2
    %2498 = vmatprep.subr.mxu0 %v891
    %2499 = vmatpush1.msra.mxu0 %v890
    %2500 = vmatprep.subr.mxu0 %v899
    %2501 = vmatpush1.msra.mxu0 %v898
    %2502 = vmatprep.subr.mxu0 %v907
    %2503 = vmatpush1.msra.mxu0 %v906
    %2504 = vmatprep.subr.mxu0 %v915
    %2505 = vmatpush1.msra.mxu0 %v914
    %2506 = vmatprep.subr.mxu0 %v923
    %2507 = vmatpush1.msra.mxu0 %v922
    %2508 = vmatprep.subr.mxu0 %v931
    %2509 = vmatpush1.msra.mxu0 %v930
    %2510 = vmatprep.subr.mxu0 %v939
    %2511 = vmatpush1.msra.mxu0 %v938
    %2512 = vmatprep.subr.mxu0 %v947
    %2513 = vmatpush1.msra.mxu0 %v946
    %2514 = vmatprep.subr.mxu0 %v955
    %2515 = vmatpush1.msra.mxu0 %v954
    %2516 = vmatprep.subr.mxu0 %v963
    %2517 = vmatpush1.msra.mxu0 %v962
    %2518 = vmatprep.subr.mxu0 %v971
    %2519 = vmatpush1.msra.mxu0 %v970
    %2520 = vmatprep.subr.mxu0 %v979
    %2521 = vmatpush1.msra.mxu0 %v978
    %2522 = vmatprep.subr.mxu0 %v987
    %2523 = vmatpush1.msra.mxu0 %v986
    %2524 = vmatprep.subr.mxu0 %v995
    %2525 = vmatpush1.msra.mxu0 %v994
    %2526 = vmatprep.subr.mxu0 %v1003
    %2527 = vmatpush1.msra.mxu0 %v1002
    %2528 = vmatprep.subr.mxu0 %v1011
    %2529 = vmatpush1.msra.mxu0 %v1010
    %2530 = vmatprep.subr.mxu0 %v1019
    %2531 = vmatpush1.msra.mxu0 %v1018
    %2532 = vmatprep.subr.mxu0 %v1027
    %2533 = vmatpush1.msra.mxu0 %v1026
    %2534 = vmatprep.subr.mxu0 %v1035
    %2535 = vmatpush1.msra.mxu0 %v1034
    %2536 = vmatprep.subr.mxu0 %v1043
    %2537 = vmatpush1.msra.mxu0 %v1042
    %2538 = vmatprep.subr.mxu0 %v1051
    %2539 = vmatpush1.msra.mxu0 %v1050
    %2540 = vmatprep.subr.mxu0 %v1059
    %2541 = vmatpush1.msra.mxu0 %v1058
    %2542 = vmatprep.subr.mxu0 %v1067
    %2543 = vmatpush1.msra.mxu0 %v1066
    %2544 = vmatprep.subr.mxu0 %v1075
    %2545 = vmatpush1.msra.mxu0 %v1074
    %2546 = vmatprep.subr.mxu0 %v1083
    %2547 = vmatpush1.msra.mxu0 %v1082
    %2548 = vmatprep.subr.mxu0 %v1091
    %2549 = vmatpush1.msra.mxu0 %v1090
    %2550 = vmatprep.subr.mxu0 %v1099
    %2551 = vmatpush1.msra.mxu0 %v1098
    %2552 = vmatprep.subr.mxu0 %v1107
    %2553 = vmatpush1.msra.mxu0 %v1106
    %2554 = vmatprep.subr.mxu0 %v1115
    %2555 = vmatpush1.msra.mxu0 %v1114
    %2556 = vmatprep.subr.mxu0 %v1123
    %2557 = vmatpush1.msra.mxu0 %v1122
    %2558 = vmatprep.subr.mxu0 %v1131
    %2559 = vmatpush1.msra.mxu0 %v1130
    %2560 = vmatprep.subr.mxu0 %v1139
    %2561 = vmatpush1.msra.mxu0 %v1138
    %2562 = vmatprep.mubr.f32.mxu0 %v2495
    %2563 = vmatmul.mubr.f32.gmra.mrb[0].mxu0 %v2494
    %v2564 = vpop.f32.mrb[0].mxu0
    %v2565 = vadd.f32 0.0, %v2564
    %v2566 = vpop.f32.mrb[0].mxu0
    %v2567 = vadd.f32 0.0, %v2566
    %2568 = vdwg.mxu0
    %2569 = vmatprep.subr.mxu0 %v893
    %2570 = vmatpush1.msra.mxu0 %v892
    %2571 = vmatprep.subr.mxu0 %v901
    %2572 = vmatpush1.msra.mxu0 %v900
    %2573 = vmatprep.subr.mxu0 %v909
    %2574 = vmatpush1.msra.mxu0 %v908
    %2575 = vmatprep.subr.mxu0 %v917
    %2576 = vmatpush1.msra.mxu0 %v916
    %2577 = vmatprep.subr.mxu0 %v925
    %2578 = vmatpush1.msra.mxu0 %v924
    %2579 = vmatprep.subr.mxu0 %v933
    %2580 = vmatpush1.msra.mxu0 %v932
    %2581 = vmatprep.subr.mxu0 %v941
    %2582 = vmatpush1.msra.mxu0 %v940
    %2583 = vmatprep.subr.mxu0 %v949
    %2584 = vmatpush1.msra.mxu0 %v948
    %2585 = vmatprep.subr.mxu0 %v957
    %2586 = vmatpush1.msra.mxu0 %v956
    %2587 = vmatprep.subr.mxu0 %v965
    %2588 = vmatpush1.msra.mxu0 %v964
    %2589 = vmatprep.subr.mxu0 %v973
    %2590 = vmatpush1.msra.mxu0 %v972
    %2591 = vmatprep.subr.mxu0 %v981
    %2592 = vmatpush1.msra.mxu0 %v980
    %2593 = vmatprep.subr.mxu0 %v989
    %2594 = vmatpush1.msra.mxu0 %v988
    %2595 = vmatprep.subr.mxu0 %v997
    %2596 = vmatpush1.msra.mxu0 %v996
    %2597 = vmatprep.subr.mxu0 %v1005
    %2598 = vmatpush1.msra.mxu0 %v1004
    %2599 = vmatprep.subr.mxu0 %v1013
    %2600 = vmatpush1.msra.mxu0 %v1012
    %2601 = vmatprep.subr.mxu0 %v1021
    %2602 = vmatpush1.msra.mxu0 %v1020
    %2603 = vmatprep.subr.mxu0 %v1029
    %2604 = vmatpush1.msra.mxu0 %v1028
    %2605 = vmatprep.subr.mxu0 %v1037
    %2606 = vmatpush1.msra.mxu0 %v1036
    %2607 = vmatprep.subr.mxu0 %v1045
    %2608 = vmatpush1.msra.mxu0 %v1044
    %2609 = vmatprep.subr.mxu0 %v1053
    %2610 = vmatpush1.msra.mxu0 %v1052
    %2611 = vmatprep.subr.mxu0 %v1061
    %2612 = vmatpush1.msra.mxu0 %v1060
    %2613 = vmatprep.subr.mxu0 %v1069
    %2614 = vmatpush1.msra.mxu0 %v1068
    %2615 = vmatprep.subr.mxu0 %v1077
    %2616 = vmatpush1.msra.mxu0 %v1076
    %2617 = vmatprep.subr.mxu0 %v1085
    %2618 = vmatpush1.msra.mxu0 %v1084
    %2619 = vmatprep.subr.mxu0 %v1093
    %2620 = vmatpush1.msra.mxu0 %v1092
    %2621 = vmatprep.subr.mxu0 %v1101
    %2622 = vmatpush1.msra.mxu0 %v1100
    %2623 = vmatprep.subr.mxu0 %v1109
    %2624 = vmatpush1.msra.mxu0 %v1108
    %2625 = vmatprep.subr.mxu0 %v1117
    %2626 = vmatpush1.msra.mxu0 %v1116
    %2627 = vmatprep.subr.mxu0 %v1125
    %2628 = vmatpush1.msra.mxu0 %v1124
    %2629 = vmatprep.subr.mxu0 %v1133
    %2630 = vmatpush1.msra.mxu0 %v1132
    %2631 = vmatprep.subr.mxu0 %v1141
    %2632 = vmatpush1.msra.mxu0 %v1140
    %2633 = vmatprep.mubr.f32.mxu0 %v2495
    %2634 = vmatmul.mubr.f32.gmra.mrb[0].mxu0 %v2494
    %v2635 = vpop.f32.mrb[0].mxu0
    %v2636 = vadd.f32 0.0, %v2635
    %v2637 = vpop.f32.mrb[0].mxu0
    %v2638 = vadd.f32 0.0, %v2637
    %2639 = vdwg.mxu0
    %2640 = vmatprep.subr.mxu0 %v895
    %2641 = vmatpush1.msra.mxu0 %v894
    %2642 = vmatprep.subr.mxu0 %v903
    %2643 = vmatpush1.msra.mxu0 %v902
    %2644 = vmatprep.subr.mxu0 %v911
    %2645 = vmatpush1.msra.mxu0 %v910
    %2646 = vmatprep.subr.mxu0 %v919
    %2647 = vmatpush1.msra.mxu0 %v918
    %2648 = vmatprep.subr.mxu0 %v927
    %2649 = vmatpush1.msra.mxu0 %v926
    %2650 = vmatprep.subr.mxu0 %v935
    %2651 = vmatpush1.msra.mxu0 %v934
    %2652 = vmatprep.subr.mxu0 %v943
    %2653 = vmatpush1.msra.mxu0 %v942
    %2654 = vmatprep.subr.mxu0 %v951
    %2655 = vmatpush1.msra.mxu0 %v950
    %2656 = vmatprep.subr.mxu0 %v959
    %2657 = vmatpush1.msra.mxu0 %v958
    %2658 = vmatprep.subr.mxu0 %v967
    %2659 = vmatpush1.msra.mxu0 %v966
    %2660 = vmatprep.subr.mxu0 %v975
    %2661 = vmatpush1.msra.mxu0 %v974
    %2662 = vmatprep.subr.mxu0 %v983
    %2663 = vmatpush1.msra.mxu0 %v982
    %2664 = vmatprep.subr.mxu0 %v991
    %2665 = vmatpush1.msra.mxu0 %v990
    %2666 = vmatprep.subr.mxu0 %v999
    %2667 = vmatpush1.msra.mxu0 %v998
    %2668 = vmatprep.subr.mxu0 %v1007
    %2669 = vmatpush1.msra.mxu0 %v1006
    %2670 = vmatprep.subr.mxu0 %v1015
    %2671 = vmatpush1.msra.mxu0 %v1014
    %2672 = vmatprep.subr.mxu0 %v1023
    %2673 = vmatpush1.msra.mxu0 %v1022
    %2674 = vmatprep.subr.mxu0 %v1031
    %2675 = vmatpush1.msra.mxu0 %v1030
    %2676 = vmatprep.subr.mxu0 %v1039
    %2677 = vmatpush1.msra.mxu0 %v1038
    %2678 = vmatprep.subr.mxu0 %v1047
    %2679 = vmatpush1.msra.mxu0 %v1046
    %2680 = vmatprep.subr.mxu0 %v1055
    %2681 = vmatpush1.msra.mxu0 %v1054
    %2682 = vmatprep.subr.mxu0 %v1063
    %2683 = vmatpush1.msra.mxu0 %v1062
    %2684 = vmatprep.subr.mxu0 %v1071
    %2685 = vmatpush1.msra.mxu0 %v1070
    %2686 = vmatprep.subr.mxu0 %v1079
    %2687 = vmatpush1.msra.mxu0 %v1078
    %2688 = vmatprep.subr.mxu0 %v1087
    %2689 = vmatpush1.msra.mxu0 %v1086
    %2690 = vmatprep.subr.mxu0 %v1095
    %2691 = vmatpush1.msra.mxu0 %v1094
    %2692 = vmatprep.subr.mxu0 %v1103
    %2693 = vmatpush1.msra.mxu0 %v1102
    %2694 = vmatprep.subr.mxu0 %v1111
    %2695 = vmatpush1.msra.mxu0 %v1110
    %2696 = vmatprep.subr.mxu0 %v1119
    %2697 = vmatpush1.msra.mxu0 %v1118
    %2698 = vmatprep.subr.mxu0 %v1127
    %2699 = vmatpush1.msra.mxu0 %v1126
    %2700 = vmatprep.subr.mxu0 %v1135
    %2701 = vmatpush1.msra.mxu0 %v1134
    %2702 = vmatprep.subr.mxu0 %v1143
    %2703 = vmatpush1.msra.mxu0 %v1142
    %2704 = vmatprep.mubr.f32.mxu0 %v2495
    %2705 = vmatmul.mubr.f32.gmra.mrb[0].mxu0 %v2494
    %v2706 = vpop.f32.mrb[0].mxu0
    %v2707 = vadd.f32 0.0, %v2706
    %v2708 = vpop.f32.mrb[0].mxu0
    %v2709 = vadd.f32 0.0, %v2708
    %2710 = vdwg.mxu0
    %2711 = vmatprep.subr.mxu0 %v897
    %2712 = vmatpush1.msra.mxu0 %v896
    %2713 = vmatprep.subr.mxu0 %v905
    %2714 = vmatpush1.msra.mxu0 %v904
    %2715 = vmatprep.subr.mxu0 %v913
    %2716 = vmatpush1.msra.mxu0 %v912
    %2717 = vmatprep.subr.mxu0 %v921
    %2718 = vmatpush1.msra.mxu0 %v920
    %2719 = vmatprep.subr.mxu0 %v929
    %2720 = vmatpush1.msra.mxu0 %v928
    %2721 = vmatprep.subr.mxu0 %v937
    %2722 = vmatpush1.msra.mxu0 %v936
    %2723 = vmatprep.subr.mxu0 %v945
    %2724 = vmatpush1.msra.mxu0 %v944
    %2725 = vmatprep.subr.mxu0 %v953
    %2726 = vmatpush1.msra.mxu0 %v952
    %2727 = vmatprep.subr.mxu0 %v961
    %2728 = vmatpush1.msra.mxu0 %v960
    %2729 = vmatprep.subr.mxu0 %v969
    %2730 = vmatpush1.msra.mxu0 %v968
    %2731 = vmatprep.subr.mxu0 %v977
    %2732 = vmatpush1.msra.mxu0 %v976
    %2733 = vmatprep.subr.mxu0 %v985
    %2734 = vmatpush1.msra.mxu0 %v984
    %2735 = vmatprep.subr.mxu0 %v993
    %2736 = vmatpush1.msra.mxu0 %v992
    %2737 = vmatprep.subr.mxu0 %v1001
    %2738 = vmatpush1.msra.mxu0 %v1000
    %2739 = vmatprep.subr.mxu0 %v1009
    %2740 = vmatpush1.msra.mxu0 %v1008
    %2741 = vmatprep.subr.mxu0 %v1017
    %2742 = vmatpush1.msra.mxu0 %v1016
    %2743 = vmatprep.subr.mxu0 %v1025
    %2744 = vmatpush1.msra.mxu0 %v1024
    %2745 = vmatprep.subr.mxu0 %v1033
    %2746 = vmatpush1.msra.mxu0 %v1032
    %2747 = vmatprep.subr.mxu0 %v1041
    %2748 = vmatpush1.msra.mxu0 %v1040
    %2749 = vmatprep.subr.mxu0 %v1049
    %2750 = vmatpush1.msra.mxu0 %v1048
    %2751 = vmatprep.subr.mxu0 %v1057
    %2752 = vmatpush1.msra.mxu0 %v1056
    %2753 = vmatprep.subr.mxu0 %v1065
    %2754 = vmatpush1.msra.mxu0 %v1064
    %2755 = vmatprep.subr.mxu0 %v1073
    %2756 = vmatpush1.msra.mxu0 %v1072
    %2757 = vmatprep.subr.mxu0 %v1081
    %2758 = vmatpush1.msra.mxu0 %v1080
    %2759 = vmatprep.subr.mxu0 %v1089
    %2760 = vmatpush1.msra.mxu0 %v1088
    %2761 = vmatprep.subr.mxu0 %v1097
    %2762 = vmatpush1.msra.mxu0 %v1096
    %2763 = vmatprep.subr.mxu0 %v1105
    %2764 = vmatpush1.msra.mxu0 %v1104
    %2765 = vmatprep.subr.mxu0 %v1113
    %2766 = vmatpush1.msra.mxu0 %v1112
    %2767 = vmatprep.subr.mxu0 %v1121
    %2768 = vmatpush1.msra.mxu0 %v1120
    %2769 = vmatprep.subr.mxu0 %v1129
    %2770 = vmatpush1.msra.mxu0 %v1128
    %2771 = vmatprep.subr.mxu0 %v1137
    %2772 = vmatpush1.msra.mxu0 %v1136
    %2773 = vmatprep.subr.mxu0 %v1145
    %2774 = vmatpush1.msra.mxu0 %v1144
    %2775 = vmatprep.mubr.f32.mxu0 %v2495
    %2776 = vmatmul.mubr.f32.gmra.mrb[0].mxu0 %v2494
    %v2777 = vpop.f32.mrb[0].mxu0
    %v2778 = vadd.f32 0.0, %v2777
    %v2779 = vpop.f32.mrb[0].mxu0
    %v2780 = vadd.f32 0.0, %v2779
    %2781 = vdwg.mxu0
    %v2790 = vrot.slane %v2565, 4
    %v2791 = vrot.slane %v2567, 4
    %v2792 = vrot.slane %v2636, 4
    %v2793 = vrot.slane %v2638, 4
    %v2794 = vrot.slane %v2707, 4
    %v2795 = vrot.slane %v2709, 4
    %v2796 = vrot.slane %v2778, 4
    %v2797 = vrot.slane %v2780, 4
    %v2806 = vadd.f32 %v2484, %v2790
    %v2807 = vadd.f32 %v2485, %v2791
    %v2808 = vadd.f32 %v2486, %v2792
    %v2809 = vadd.f32 %v2487, %v2793
    %v2810 = vadd.f32 %v2488, %v2794
    %v2811 = vadd.f32 %v2489, %v2795
    %v2812 = vadd.f32 %v2490, %v2796
    %v2813 = vadd.f32 %v2491, %v2797
    %v2814 = vxor.u32 %v2806, 2147483648
    %v2815 = vxor.u32 %v2807, 2147483648
    %v2816 = vmul.f32 %v2814, 1.442695
    %v2817 = vpow.pop %v2816
    %v2818 = vmul.f32 %v2815, 1.442695
    %v2819 = vpow.pop %v2818
    %v2820 = vadd.f32 %v2817, 1.0
    %v2821 = vadd.f32 %v2819, 1.0
    %v2822 = vrcp.pop %v2820
    %v2823 = vmul.f32 1.0, %v2822
    %v2824 = vrcp.pop %v2821
    %v2825 = vmul.f32 1.0, %v2824
    %v2826 = vxor.u32 %v2808, 2147483648
    %v2827 = vxor.u32 %v2809, 2147483648
    %v2828 = vmul.f32 %v2826, 1.442695
    %v2829 = vpow.pop %v2828
    %v2830 = vmul.f32 %v2827, 1.442695
    %v2831 = vpow.pop %v2830
    %v2832 = vadd.f32 %v2829, 1.0
    %v2833 = vadd.f32 %v2831, 1.0
    %v2834 = vrcp.pop %v2832
    %v2835 = vmul.f32 1.0, %v2834
    %v2836 = vrcp.pop %v2833
    %v2837 = vmul.f32 1.0, %v2836
    %v2838 = vtanh.pop %v2810
    %v2839 = vtanh.pop %v2811
    %v2840 = vxor.u32 %v2812, 2147483648
    %v2841 = vxor.u32 %v2813, 2147483648
    %v2842 = vmul.f32 %v2840, 1.442695
    %v2843 = vpow.pop %v2842
    %v2844 = vmul.f32 %v2841, 1.442695
    %v2845 = vpow.pop %v2844
    %v2846 = vadd.f32 %v2843, 1.0
    %v2847 = vadd.f32 %v2845, 1.0
    %v2848 = vrcp.pop %v2846
    %v2849 = vmul.f32 1.0, %v2848
    %v2850 = vrcp.pop %v2847
    %v2851 = vmul.f32 1.0, %v2850
    %v2854 = vrot.slane %v2478, 6
    %v2855 = vrot.slane %v2479, 6
    %v2858 = vmul.f32 %v2835, %v2854
    %v2859 = vmul.f32 %v2837, %v2855
    %v2860 = vmul.f32 %v2823, %v2838
    %v2861 = vmul.f32 %v2825, %v2839
    %v2862 = vadd.f32 %v2858, %v2860
    %v2863 = vadd.f32 %v2859, %v2861
    %v2864 = vtanh.pop %v2862
    %v2865 = vtanh.pop %v2863
    %v2866 = vmul.f32 %v2849, %v2864
    %v2867 = vmul.f32 %v2851, %v2865
    %v2868 = vld [vmem:[#allocation2] sm:$0xc0]
    %v2869 = vld [vmem:[#allocation2 + $0x8] sm:$0xc0]
    %v2870 = vld [vmem:[#allocation2 + $0x10] sm:$0xc0]
    %v2871 = vld [vmem:[#allocation2 + $0x18] sm:$0xc0]
    %v2872 = vld [vmem:[#allocation2 + $0x20] sm:$0xc0]
    %v2873 = vld [vmem:[#allocation2 + $0x28] sm:$0xc0]
    %v2874 = vld [vmem:[#allocation2 + $0x30] sm:$0xc0]
    %v2875 = vld [vmem:[#allocation2 + $0x38] sm:$0xc0]
    %v2878 = vrot.slane %v2866, 4
    %v2879 = vrot.slane %v2867, 4
    %2882 = vmatprep.subr.mxu0 %v891
    %2883 = vmatpush1.msra.mxu0 %v890
    %2884 = vmatprep.subr.mxu0 %v899
    %2885 = vmatpush1.msra.mxu0 %v898
    %2886 = vmatprep.subr.mxu0 %v907
    %2887 = vmatpush1.msra.mxu0 %v906
    %2888 = vmatprep.subr.mxu0 %v915
    %2889 = vmatpush1.msra.mxu0 %v914
    %2890 = vmatprep.subr.mxu0 %v923
    %2891 = vmatpush1.msra.mxu0 %v922
    %2892 = vmatprep.subr.mxu0 %v931
    %2893 = vmatpush1.msra.mxu0 %v930
    %2894 = vmatprep.subr.mxu0 %v939
    %2895 = vmatpush1.msra.mxu0 %v938
    %2896 = vmatprep.subr.mxu0 %v947
    %2897 = vmatpush1.msra.mxu0 %v946
    %2898 = vmatprep.subr.mxu0 %v955
    %2899 = vmatpush1.msra.mxu0 %v954
    %2900 = vmatprep.subr.mxu0 %v963
    %2901 = vmatpush1.msra.mxu0 %v962
    %2902 = vmatprep.subr.mxu0 %v971
    %2903 = vmatpush1.msra.mxu0 %v970
    %2904 = vmatprep.subr.mxu0 %v979
    %2905 = vmatpush1.msra.mxu0 %v978
    %2906 = vmatprep.subr.mxu0 %v987
    %2907 = vmatpush1.msra.mxu0 %v986
    %2908 = vmatprep.subr.mxu0 %v995
    %2909 = vmatpush1.msra.mxu0 %v994
    %2910 = vmatprep.subr.mxu0 %v1003
    %2911 = vmatpush1.msra.mxu0 %v1002
    %2912 = vmatprep.subr.mxu0 %v1011
    %2913 = vmatpush1.msra.mxu0 %v1010
    %2914 = vmatprep.subr.mxu0 %v1019
    %2915 = vmatpush1.msra.mxu0 %v1018
    %2916 = vmatprep.subr.mxu0 %v1027
    %2917 = vmatpush1.msra.mxu0 %v1026
    %2918 = vmatprep.subr.mxu0 %v1035
    %2919 = vmatpush1.msra.mxu0 %v1034
    %2920 = vmatprep.subr.mxu0 %v1043
    %2921 = vmatpush1.msra.mxu0 %v1042
    %2922 = vmatprep.subr.mxu0 %v1051
    %2923 = vmatpush1.msra.mxu0 %v1050
    %2924 = vmatprep.subr.mxu0 %v1059
    %2925 = vmatpush1.msra.mxu0 %v1058
    %2926 = vmatprep.subr.mxu0 %v1067
    %2927 = vmatpush1.msra.mxu0 %v1066
    %2928 = vmatprep.subr.mxu0 %v1075
    %2929 = vmatpush1.msra.mxu0 %v1074
    %2930 = vmatprep.subr.mxu0 %v1083
    %2931 = vmatpush1.msra.mxu0 %v1082
    %2932 = vmatprep.subr.mxu0 %v1091
    %2933 = vmatpush1.msra.mxu0 %v1090
    %2934 = vmatprep.subr.mxu0 %v1099
    %2935 = vmatpush1.msra.mxu0 %v1098
    %2936 = vmatprep.subr.mxu0 %v1107
    %2937 = vmatpush1.msra.mxu0 %v1106
    %2938 = vmatprep.subr.mxu0 %v1115
    %2939 = vmatpush1.msra.mxu0 %v1114
    %2940 = vmatprep.subr.mxu0 %v1123
    %2941 = vmatpush1.msra.mxu0 %v1122
    %2942 = vmatprep.subr.mxu0 %v1131
    %2943 = vmatpush1.msra.mxu0 %v1130
    %2944 = vmatprep.subr.mxu0 %v1139
    %2945 = vmatpush1.msra.mxu0 %v1138
    %2946 = vmatprep.mubr.f32.mxu0 %v2879
    %2947 = vmatmul.mubr.f32.gmra.mrb[0].mxu0 %v2878
    %v2948 = vpop.f32.mrb[0].mxu0
    %v2949 = vadd.f32 0.0, %v2948
    %v2950 = vpop.f32.mrb[0].mxu0
    %v2951 = vadd.f32 0.0, %v2950
    %2952 = vdwg.mxu0
    %2953 = vmatprep.subr.mxu0 %v893
    %2954 = vmatpush1.msra.mxu0 %v892
    %2955 = vmatprep.subr.mxu0 %v901
    %2956 = vmatpush1.msra.mxu0 %v900
    %2957 = vmatprep.subr.mxu0 %v909
    %2958 = vmatpush1.msra.mxu0 %v908
    %2959 = vmatprep.subr.mxu0 %v917
    %2960 = vmatpush1.msra.mxu0 %v916
    %2961 = vmatprep.subr.mxu0 %v925
    %2962 = vmatpush1.msra.mxu0 %v924
    %2963 = vmatprep.subr.mxu0 %v933
    %2964 = vmatpush1.msra.mxu0 %v932
    %2965 = vmatprep.subr.mxu0 %v941
    %2966 = vmatpush1.msra.mxu0 %v940
    %2967 = vmatprep.subr.mxu0 %v949
    %2968 = vmatpush1.msra.mxu0 %v948
    %2969 = vmatprep.subr.mxu0 %v957
    %2970 = vmatpush1.msra.mxu0 %v956
    %2971 = vmatprep.subr.mxu0 %v965
    %2972 = vmatpush1.msra.mxu0 %v964
    %2973 = vmatprep.subr.mxu0 %v973
    %2974 = vmatpush1.msra.mxu0 %v972
    %2975 = vmatprep.subr.mxu0 %v981
    %2976 = vmatpush1.msra.mxu0 %v980
    %2977 = vmatprep.subr.mxu0 %v989
    %2978 = vmatpush1.msra.mxu0 %v988
    %2979 = vmatprep.subr.mxu0 %v997
    %2980 = vmatpush1.msra.mxu0 %v996
    %2981 = vmatprep.subr.mxu0 %v1005
    %2982 = vmatpush1.msra.mxu0 %v1004
    %2983 = vmatprep.subr.mxu0 %v1013
    %2984 = vmatpush1.msra.mxu0 %v1012
    %2985 = vmatprep.subr.mxu0 %v1021
    %2986 = vmatpush1.msra.mxu0 %v1020
    %2987 = vmatprep.subr.mxu0 %v1029
    %2988 = vmatpush1.msra.mxu0 %v1028
    %2989 = vmatprep.subr.mxu0 %v1037
    %2990 = vmatpush1.msra.mxu0 %v1036
    %2991 = vmatprep.subr.mxu0 %v1045
    %2992 = vmatpush1.msra.mxu0 %v1044
    %2993 = vmatprep.subr.mxu0 %v1053
    %2994 = vmatpush1.msra.mxu0 %v1052
    %2995 = vmatprep.subr.mxu0 %v1061
    %2996 = vmatpush1.msra.mxu0 %v1060
    %2997 = vmatprep.subr.mxu0 %v1069
    %2998 = vmatpush1.msra.mxu0 %v1068
    %2999 = vmatprep.subr.mxu0 %v1077
    %3000 = vmatpush1.msra.mxu0 %v1076
    %3001 = vmatprep.subr.mxu0 %v1085
    %3002 = vmatpush1.msra.mxu0 %v1084
    %3003 = vmatprep.subr.mxu0 %v1093
    %3004 = vmatpush1.msra.mxu0 %v1092
    %3005 = vmatprep.subr.mxu0 %v1101
    %3006 = vmatpush1.msra.mxu0 %v1100
    %3007 = vmatprep.subr.mxu0 %v1109
    %3008 = vmatpush1.msra.mxu0 %v1108
    %3009 = vmatprep.subr.mxu0 %v1117
    %3010 = vmatpush1.msra.mxu0 %v1116
    %3011 = vmatprep.subr.mxu0 %v1125
    %3012 = vmatpush1.msra.mxu0 %v1124
    %3013 = vmatprep.subr.mxu0 %v1133
    %3014 = vmatpush1.msra.mxu0 %v1132
    %3015 = vmatprep.subr.mxu0 %v1141
    %3016 = vmatpush1.msra.mxu0 %v1140
    %3017 = vmatprep.mubr.f32.mxu0 %v2879
    %3018 = vmatmul.mubr.f32.gmra.mrb[0].mxu0 %v2878
    %v3019 = vpop.f32.mrb[0].mxu0
    %v3020 = vadd.f32 0.0, %v3019
    %v3021 = vpop.f32.mrb[0].mxu0
    %v3022 = vadd.f32 0.0, %v3021
    %3023 = vdwg.mxu0
    %3024 = vmatprep.subr.mxu0 %v895
    %3025 = vmatpush1.msra.mxu0 %v894
    %3026 = vmatprep.subr.mxu0 %v903
    %3027 = vmatpush1.msra.mxu0 %v902
    %3028 = vmatprep.subr.mxu0 %v911
    %3029 = vmatpush1.msra.mxu0 %v910
    %3030 = vmatprep.subr.mxu0 %v919
    %3031 = vmatpush1.msra.mxu0 %v918
    %3032 = vmatprep.subr.mxu0 %v927
    %3033 = vmatpush1.msra.mxu0 %v926
    %3034 = vmatprep.subr.mxu0 %v935
    %3035 = vmatpush1.msra.mxu0 %v934
    %3036 = vmatprep.subr.mxu0 %v943
    %3037 = vmatpush1.msra.mxu0 %v942
    %3038 = vmatprep.subr.mxu0 %v951
    %3039 = vmatpush1.msra.mxu0 %v950
    %3040 = vmatprep.subr.mxu0 %v959
    %3041 = vmatpush1.msra.mxu0 %v958
    %3042 = vmatprep.subr.mxu0 %v967
    %3043 = vmatpush1.msra.mxu0 %v966
    %3044 = vmatprep.subr.mxu0 %v975
    %3045 = vmatpush1.msra.mxu0 %v974
    %3046 = vmatprep.subr.mxu0 %v983
    %3047 = vmatpush1.msra.mxu0 %v982
    %3048 = vmatprep.subr.mxu0 %v991
    %3049 = vmatpush1.msra.mxu0 %v990
    %3050 = vmatprep.subr.mxu0 %v999
    %3051 = vmatpush1.msra.mxu0 %v998
    %3052 = vmatprep.subr.mxu0 %v1007
    %3053 = vmatpush1.msra.mxu0 %v1006
    %3054 = vmatprep.subr.mxu0 %v1015
    %3055 = vmatpush1.msra.mxu0 %v1014
    %3056 = vmatprep.subr.mxu0 %v1023
    %3057 = vmatpush1.msra.mxu0 %v1022
    %3058 = vmatprep.subr.mxu0 %v1031
    %3059 = vmatpush1.msra.mxu0 %v1030
    %3060 = vmatprep.subr.mxu0 %v1039
    %3061 = vmatpush1.msra.mxu0 %v1038
    %3062 = vmatprep.subr.mxu0 %v1047
    %3063 = vmatpush1.msra.mxu0 %v1046
    %3064 = vmatprep.subr.mxu0 %v1055
    %3065 = vmatpush1.msra.mxu0 %v1054
    %3066 = vmatprep.subr.mxu0 %v1063
    %3067 = vmatpush1.msra.mxu0 %v1062
    %3068 = vmatprep.subr.mxu0 %v1071
    %3069 = vmatpush1.msra.mxu0 %v1070
    %3070 = vmatprep.subr.mxu0 %v1079
    %3071 = vmatpush1.msra.mxu0 %v1078
    %3072 = vmatprep.subr.mxu0 %v1087
    %3073 = vmatpush1.msra.mxu0 %v1086
    %3074 = vmatprep.subr.mxu0 %v1095
    %3075 = vmatpush1.msra.mxu0 %v1094
    %3076 = vmatprep.subr.mxu0 %v1103
    %3077 = vmatpush1.msra.mxu0 %v1102
    %3078 = vmatprep.subr.mxu0 %v1111
    %3079 = vmatpush1.msra.mxu0 %v1110
    %3080 = vmatprep.subr.mxu0 %v1119
    %3081 = vmatpush1.msra.mxu0 %v1118
    %3082 = vmatprep.subr.mxu0 %v1127
    %3083 = vmatpush1.msra.mxu0 %v1126
    %3084 = vmatprep.subr.mxu0 %v1135
    %3085 = vmatpush1.msra.mxu0 %v1134
    %3086 = vmatprep.subr.mxu0 %v1143
    %3087 = vmatpush1.msra.mxu0 %v1142
    %3088 = vmatprep.mubr.f32.mxu0 %v2879
    %3089 = vmatmul.mubr.f32.gmra.mrb[0].mxu0 %v2878
    %v3090 = vpop.f32.mrb[0].mxu0
    %v3091 = vadd.f32 0.0, %v3090
    %v3092 = vpop.f32.mrb[0].mxu0
    %v3093 = vadd.f32 0.0, %v3092
    %3094 = vdwg.mxu0
    %3095 = vmatprep.subr.mxu0 %v897
    %3096 = vmatpush1.msra.mxu0 %v896
    %3097 = vmatprep.subr.mxu0 %v905
    %3098 = vmatpush1.msra.mxu0 %v904
    %3099 = vmatprep.subr.mxu0 %v913
    %3100 = vmatpush1.msra.mxu0 %v912
    %3101 = vmatprep.subr.mxu0 %v921
    %3102 = vmatpush1.msra.mxu0 %v920
    %3103 = vmatprep.subr.mxu0 %v929
    %3104 = vmatpush1.msra.mxu0 %v928
    %3105 = vmatprep.subr.mxu0 %v937
    %3106 = vmatpush1.msra.mxu0 %v936
    %3107 = vmatprep.subr.mxu0 %v945
    %3108 = vmatpush1.msra.mxu0 %v944
    %3109 = vmatprep.subr.mxu0 %v953
    %3110 = vmatpush1.msra.mxu0 %v952
    %3111 = vmatprep.subr.mxu0 %v961
    %3112 = vmatpush1.msra.mxu0 %v960
    %3113 = vmatprep.subr.mxu0 %v969
    %3114 = vmatpush1.msra.mxu0 %v968
    %3115 = vmatprep.subr.mxu0 %v977
    %3116 = vmatpush1.msra.mxu0 %v976
    %3117 = vmatprep.subr.mxu0 %v985
    %3118 = vmatpush1.msra.mxu0 %v984
    %3119 = vmatprep.subr.mxu0 %v993
    %3120 = vmatpush1.msra.mxu0 %v992
    %3121 = vmatprep.subr.mxu0 %v1001
    %3122 = vmatpush1.msra.mxu0 %v1000
    %3123 = vmatprep.subr.mxu0 %v1009
    %3124 = vmatpush1.msra.mxu0 %v1008
    %3125 = vmatprep.subr.mxu0 %v1017
    %3126 = vmatpush1.msra.mxu0 %v1016
    %3127 = vmatprep.subr.mxu0 %v1025
    %3128 = vmatpush1.msra.mxu0 %v1024
    %3129 = vmatprep.subr.mxu0 %v1033
    %3130 = vmatpush1.msra.mxu0 %v1032
    %3131 = vmatprep.subr.mxu0 %v1041
    %3132 = vmatpush1.msra.mxu0 %v1040
    %3133 = vmatprep.subr.mxu0 %v1049
    %3134 = vmatpush1.msra.mxu0 %v1048
    %3135 = vmatprep.subr.mxu0 %v1057
    %3136 = vmatpush1.msra.mxu0 %v1056
    %3137 = vmatprep.subr.mxu0 %v1065
    %3138 = vmatpush1.msra.mxu0 %v1064
    %3139 = vmatprep.subr.mxu0 %v1073
    %3140 = vmatpush1.msra.mxu0 %v1072
    %3141 = vmatprep.subr.mxu0 %v1081
    %3142 = vmatpush1.msra.mxu0 %v1080
    %3143 = vmatprep.subr.mxu0 %v1089
    %3144 = vmatpush1.msra.mxu0 %v1088
    %3145 = vmatprep.subr.mxu0 %v1097
    %3146 = vmatpush1.msra.mxu0 %v1096
    %3147 = vmatprep.subr.mxu0 %v1105
    %3148 = vmatpush1.msra.mxu0 %v1104
    %3149 = vmatprep.subr.mxu0 %v1113
    %3150 = vmatpush1.msra.mxu0 %v1112
    %3151 = vmatprep.subr.mxu0 %v1121
    %3152 = vmatpush1.msra.mxu0 %v1120
    %3153 = vmatprep.subr.mxu0 %v1129
    %3154 = vmatpush1.msra.mxu0 %v1128
    %3155 = vmatprep.subr.mxu0 %v1137
    %3156 = vmatpush1.msra.mxu0 %v1136
    %3157 = vmatprep.subr.mxu0 %v1145
    %3158 = vmatpush1.msra.mxu0 %v1144
    %3159 = vmatprep.mubr.f32.mxu0 %v2879
    %3160 = vmatmul.mubr.f32.gmra.mrb[0].mxu0 %v2878
    %v3161 = vpop.f32.mrb[0].mxu0
    %v3162 = vadd.f32 0.0, %v3161
    %v3163 = vpop.f32.mrb[0].mxu0
    %v3164 = vadd.f32 0.0, %v3163
    %3165 = vdwg.mxu0
    %v3174 = vrot.slane %v2949, 2
    %v3175 = vrot.slane %v2951, 2
    %v3176 = vrot.slane %v3020, 2
    %v3177 = vrot.slane %v3022, 2
    %v3178 = vrot.slane %v3091, 2
    %v3179 = vrot.slane %v3093, 2
    %v3180 = vrot.slane %v3162, 2
    %v3181 = vrot.slane %v3164, 2
    %v3190 = vadd.f32 %v2868, %v3174
    %v3191 = vadd.f32 %v2869, %v3175
    %v3192 = vadd.f32 %v2870, %v3176
    %v3193 = vadd.f32 %v2871, %v3177
    %v3194 = vadd.f32 %v2872, %v3178
    %v3195 = vadd.f32 %v2873, %v3179
    %v3196 = vadd.f32 %v2874, %v3180
    %v3197 = vadd.f32 %v2875, %v3181
    %v3198 = vxor.u32 %v3190, 2147483648
    %v3199 = vxor.u32 %v3191, 2147483648
    %v3200 = vmul.f32 %v3198, 1.442695
    %v3201 = vpow.pop %v3200
    %v3202 = vmul.f32 %v3199, 1.442695
    %v3203 = vpow.pop %v3202
    %v3204 = vadd.f32 %v3201, 1.0
    %v3205 = vadd.f32 %v3203, 1.0
    %v3206 = vrcp.pop %v3204
    %v3207 = vmul.f32 1.0, %v3206
    %v3208 = vrcp.pop %v3205
    %v3209 = vmul.f32 1.0, %v3208
    %v3210 = vxor.u32 %v3192, 2147483648
    %v3211 = vxor.u32 %v3193, 2147483648
    %v3212 = vmul.f32 %v3210, 1.442695
    %v3213 = vpow.pop %v3212
    %v3214 = vmul.f32 %v3211, 1.442695
    %v3215 = vpow.pop %v3214
    %v3216 = vadd.f32 %v3213, 1.0
    %v3217 = vadd.f32 %v3215, 1.0
    %v3218 = vrcp.pop %v3216
    %v3219 = vmul.f32 1.0, %v3218
    %v3220 = vrcp.pop %v3217
    %v3221 = vmul.f32 1.0, %v3220
    %v3222 = vtanh.pop %v3194
    %v3223 = vtanh.pop %v3195
    %v3224 = vxor.u32 %v3196, 2147483648
    %v3225 = vxor.u32 %v3197, 2147483648
    %v3226 = vmul.f32 %v3224, 1.442695
    %v3227 = vpow.pop %v3226
    %v3228 = vmul.f32 %v3225, 1.442695
    %v3229 = vpow.pop %v3228
    %v3230 = vadd.f32 %v3227, 1.0
    %v3231 = vadd.f32 %v3229, 1.0
    %v3232 = vrcp.pop %v3230
    %v3233 = vmul.f32 1.0, %v3232
    %v3234 = vrcp.pop %v3231
    %v3235 = vmul.f32 1.0, %v3234
    %v3238 = vrot.slane %v2862, 6
    %v3239 = vrot.slane %v2863, 6
    %v3242 = vmul.f32 %v3219, %v3238
    %v3243 = vmul.f32 %v3221, %v3239
    %v3244 = vmul.f32 %v3207, %v3222
    %v3245 = vmul.f32 %v3209, %v3223
    %v3246 = vadd.f32 %v3242, %v3244
    %v3247 = vadd.f32 %v3243, %v3245
    %v3248 = vtanh.pop %v3246
    %v3249 = vtanh.pop %v3247
    %v3250 = vmul.f32 %v3233, %v3248
    %v3251 = vmul.f32 %v3235, %v3249
    %v3252 = vld [vmem:[#allocation2 + $0x80] sm:$0x3]
    %v3253 = vld [vmem:[#allocation2 + $0x88] sm:$0x3]
    %v3254 = vld [vmem:[#allocation2 + $0x90] sm:$0x3]
    %v3255 = vld [vmem:[#allocation2 + $0x98] sm:$0x3]
    %v3256 = vld [vmem:[#allocation2 + $0xa0] sm:$0x3]
    %v3257 = vld [vmem:[#allocation2 + $0xa8] sm:$0x3]
    %v3258 = vld [vmem:[#allocation2 + $0xb0] sm:$0x3]
    %v3259 = vld [vmem:[#allocation2 + $0xb8] sm:$0x3]
    %v3262 = vrot.slane %v3250, 6
    %v3263 = vrot.slane %v3251, 6
    %3266 = vmatprep.subr.mxu0 %v891
    %3267 = vmatpush1.msra.mxu0 %v890
    %3268 = vmatprep.subr.mxu0 %v899
    %3269 = vmatpush1.msra.mxu0 %v898
    %3270 = vmatprep.subr.mxu0 %v907
    %3271 = vmatpush1.msra.mxu0 %v906
    %3272 = vmatprep.subr.mxu0 %v915
    %3273 = vmatpush1.msra.mxu0 %v914
    %3274 = vmatprep.subr.mxu0 %v923
    %3275 = vmatpush1.msra.mxu0 %v922
    %3276 = vmatprep.subr.mxu0 %v931
    %3277 = vmatpush1.msra.mxu0 %v930
    %3278 = vmatprep.subr.mxu0 %v939
    %3279 = vmatpush1.msra.mxu0 %v938
    %3280 = vmatprep.subr.mxu0 %v947
    %3281 = vmatpush1.msra.mxu0 %v946
    %3282 = vmatprep.subr.mxu0 %v955
    %3283 = vmatpush1.msra.mxu0 %v954
    %3284 = vmatprep.subr.mxu0 %v963
    %3285 = vmatpush1.msra.mxu0 %v962
    %3286 = vmatprep.subr.mxu0 %v971
    %3287 = vmatpush1.msra.mxu0 %v970
    %3288 = vmatprep.subr.mxu0 %v979
    %3289 = vmatpush1.msra.mxu0 %v978
    %3290 = vmatprep.subr.mxu0 %v987
    %3291 = vmatpush1.msra.mxu0 %v986
    %3292 = vmatprep.subr.mxu0 %v995
    %3293 = vmatpush1.msra.mxu0 %v994
    %3294 = vmatprep.subr.mxu0 %v1003
    %3295 = vmatpush1.msra.mxu0 %v1002
    %3296 = vmatprep.subr.mxu0 %v1011
    %3297 = vmatpush1.msra.mxu0 %v1010
    %3298 = vmatprep.subr.mxu0 %v1019
    %3299 = vmatpush1.msra.mxu0 %v1018
    %3300 = vmatprep.subr.mxu0 %v1027
    %3301 = vmatpush1.msra.mxu0 %v1026
    %3302 = vmatprep.subr.mxu0 %v1035
    %3303 = vmatpush1.msra.mxu0 %v1034
    %3304 = vmatprep.subr.mxu0 %v1043
    %3305 = vmatpush1.msra.mxu0 %v1042
    %3306 = vmatprep.subr.mxu0 %v1051
    %3307 = vmatpush1.msra.mxu0 %v1050
    %3308 = vmatprep.subr.mxu0 %v1059
    %3309 = vmatpush1.msra.mxu0 %v1058
    %3310 = vmatprep.subr.mxu0 %v1067
    %3311 = vmatpush1.msra.mxu0 %v1066
    %3312 = vmatprep.subr.mxu0 %v1075
    %3313 = vmatpush1.msra.mxu0 %v1074
    %3314 = vmatprep.subr.mxu0 %v1083
    %3315 = vmatpush1.msra.mxu0 %v1082
    %3316 = vmatprep.subr.mxu0 %v1091
    %3317 = vmatpush1.msra.mxu0 %v1090
    %3318 = vmatprep.subr.mxu0 %v1099
    %3319 = vmatpush1.msra.mxu0 %v1098
    %3320 = vmatprep.subr.mxu0 %v1107
    %3321 = vmatpush1.msra.mxu0 %v1106
    %3322 = vmatprep.subr.mxu0 %v1115
    %3323 = vmatpush1.msra.mxu0 %v1114
    %3324 = vmatprep.subr.mxu0 %v1123
    %3325 = vmatpush1.msra.mxu0 %v1122
    %3326 = vmatprep.subr.mxu0 %v1131
    %3327 = vmatpush1.msra.mxu0 %v1130
    %3328 = vmatprep.subr.mxu0 %v1139
    %3329 = vmatpush1.msra.mxu0 %v1138
    %3330 = vmatprep.mubr.f32.mxu0 %v3263
    %3331 = vmatmul.mubr.f32.gmra.mrb[0].mxu0 %v3262
    %v3332 = vpop.f32.mrb[0].mxu0
    %v3333 = vadd.f32 0.0, %v3332
    %v3334 = vpop.f32.mrb[0].mxu0
    %v3335 = vadd.f32 0.0, %v3334
    %3336 = vdwg.mxu0
    %3337 = vmatprep.subr.mxu0 %v893
    %3338 = vmatpush1.msra.mxu0 %v892
    %3339 = vmatprep.subr.mxu0 %v901
    %3340 = vmatpush1.msra.mxu0 %v900
    %3341 = vmatprep.subr.mxu0 %v909
    %3342 = vmatpush1.msra.mxu0 %v908
    %3343 = vmatprep.subr.mxu0 %v917
    %3344 = vmatpush1.msra.mxu0 %v916
    %3345 = vmatprep.subr.mxu0 %v925
    %3346 = vmatpush1.msra.mxu0 %v924
    %3347 = vmatprep.subr.mxu0 %v933
    %3348 = vmatpush1.msra.mxu0 %v932
    %3349 = vmatprep.subr.mxu0 %v941
    %3350 = vmatpush1.msra.mxu0 %v940
    %3351 = vmatprep.subr.mxu0 %v949
    %3352 = vmatpush1.msra.mxu0 %v948
    %3353 = vmatprep.subr.mxu0 %v957
    %3354 = vmatpush1.msra.mxu0 %v956
    %3355 = vmatprep.subr.mxu0 %v965
    %3356 = vmatpush1.msra.mxu0 %v964
    %3357 = vmatprep.subr.mxu0 %v973
    %3358 = vmatpush1.msra.mxu0 %v972
    %3359 = vmatprep.subr.mxu0 %v981
    %3360 = vmatpush1.msra.mxu0 %v980
    %3361 = vmatprep.subr.mxu0 %v989
    %3362 = vmatpush1.msra.mxu0 %v988
    %3363 = vmatprep.subr.mxu0 %v997
    %3364 = vmatpush1.msra.mxu0 %v996
    %3365 = vmatprep.subr.mxu0 %v1005
    %3366 = vmatpush1.msra.mxu0 %v1004
    %3367 = vmatprep.subr.mxu0 %v1013
    %3368 = vmatpush1.msra.mxu0 %v1012
    %3369 = vmatprep.subr.mxu0 %v1021
    %3370 = vmatpush1.msra.mxu0 %v1020
    %3371 = vmatprep.subr.mxu0 %v1029
    %3372 = vmatpush1.msra.mxu0 %v1028
    %3373 = vmatprep.subr.mxu0 %v1037
    %3374 = vmatpush1.msra.mxu0 %v1036
    %3375 = vmatprep.subr.mxu0 %v1045
    %3376 = vmatpush1.msra.mxu0 %v1044
    %3377 = vmatprep.subr.mxu0 %v1053
    %3378 = vmatpush1.msra.mxu0 %v1052
    %3379 = vmatprep.subr.mxu0 %v1061
    %3380 = vmatpush1.msra.mxu0 %v1060
    %3381 = vmatprep.subr.mxu0 %v1069
    %3382 = vmatpush1.msra.mxu0 %v1068
    %3383 = vmatprep.subr.mxu0 %v1077
    %3384 = vmatpush1.msra.mxu0 %v1076
    %3385 = vmatprep.subr.mxu0 %v1085
    %3386 = vmatpush1.msra.mxu0 %v1084
    %3387 = vmatprep.subr.mxu0 %v1093
    %3388 = vmatpush1.msra.mxu0 %v1092
    %3389 = vmatprep.subr.mxu0 %v1101
    %3390 = vmatpush1.msra.mxu0 %v1100
    %3391 = vmatprep.subr.mxu0 %v1109
    %3392 = vmatpush1.msra.mxu0 %v1108
    %3393 = vmatprep.subr.mxu0 %v1117
    %3394 = vmatpush1.msra.mxu0 %v1116
    %3395 = vmatprep.subr.mxu0 %v1125
    %3396 = vmatpush1.msra.mxu0 %v1124
    %3397 = vmatprep.subr.mxu0 %v1133
    %3398 = vmatpush1.msra.mxu0 %v1132
    %3399 = vmatprep.subr.mxu0 %v1141
    %3400 = vmatpush1.msra.mxu0 %v1140
    %3401 = vmatprep.mubr.f32.mxu0 %v3263
    %3402 = vmatmul.mubr.f32.gmra.mrb[0].mxu0 %v3262
    %v3403 = vpop.f32.mrb[0].mxu0
    %v3404 = vadd.f32 0.0, %v3403
    %v3405 = vpop.f32.mrb[0].mxu0
    %v3406 = vadd.f32 0.0, %v3405
    %3407 = vdwg.mxu0
    %3408 = vmatprep.subr.mxu0 %v895
    %3409 = vmatpush1.msra.mxu0 %v894
    %3410 = vmatprep.subr.mxu0 %v903
    %3411 = vmatpush1.msra.mxu0 %v902
    %3412 = vmatprep.subr.mxu0 %v911
    %3413 = vmatpush1.msra.mxu0 %v910
    %3414 = vmatprep.subr.mxu0 %v919
    %3415 = vmatpush1.msra.mxu0 %v918
    %3416 = vmatprep.subr.mxu0 %v927
    %3417 = vmatpush1.msra.mxu0 %v926
    %3418 = vmatprep.subr.mxu0 %v935
    %3419 = vmatpush1.msra.mxu0 %v934
    %3420 = vmatprep.subr.mxu0 %v943
    %3421 = vmatpush1.msra.mxu0 %v942
    %3422 = vmatprep.subr.mxu0 %v951
    %3423 = vmatpush1.msra.mxu0 %v950
    %3424 = vmatprep.subr.mxu0 %v959
    %3425 = vmatpush1.msra.mxu0 %v958
    %3426 = vmatprep.subr.mxu0 %v967
    %3427 = vmatpush1.msra.mxu0 %v966
    %3428 = vmatprep.subr.mxu0 %v975
    %3429 = vmatpush1.msra.mxu0 %v974
    %3430 = vmatprep.subr.mxu0 %v983
    %3431 = vmatpush1.msra.mxu0 %v982
    %3432 = vmatprep.subr.mxu0 %v991
    %3433 = vmatpush1.msra.mxu0 %v990
    %3434 = vmatprep.subr.mxu0 %v999
    %3435 = vmatpush1.msra.mxu0 %v998
    %3436 = vmatprep.subr.mxu0 %v1007
    %3437 = vmatpush1.msra.mxu0 %v1006
    %3438 = vmatprep.subr.mxu0 %v1015
    %3439 = vmatpush1.msra.mxu0 %v1014
    %3440 = vmatprep.subr.mxu0 %v1023
    %3441 = vmatpush1.msra.mxu0 %v1022
    %3442 = vmatprep.subr.mxu0 %v1031
    %3443 = vmatpush1.msra.mxu0 %v1030
    %3444 = vmatprep.subr.mxu0 %v1039
    %3445 = vmatpush1.msra.mxu0 %v1038
    %3446 = vmatprep.subr.mxu0 %v1047
    %3447 = vmatpush1.msra.mxu0 %v1046
    %3448 = vmatprep.subr.mxu0 %v1055
    %3449 = vmatpush1.msra.mxu0 %v1054
    %3450 = vmatprep.subr.mxu0 %v1063
    %3451 = vmatpush1.msra.mxu0 %v1062
    %3452 = vmatprep.subr.mxu0 %v1071
    %3453 = vmatpush1.msra.mxu0 %v1070
    %3454 = vmatprep.subr.mxu0 %v1079
    %3455 = vmatpush1.msra.mxu0 %v1078
    %3456 = vmatprep.subr.mxu0 %v1087
    %3457 = vmatpush1.msra.mxu0 %v1086
    %3458 = vmatprep.subr.mxu0 %v1095
    %3459 = vmatpush1.msra.mxu0 %v1094
    %3460 = vmatprep.subr.mxu0 %v1103
    %3461 = vmatpush1.msra.mxu0 %v1102
    %3462 = vmatprep.subr.mxu0 %v1111
    %3463 = vmatpush1.msra.mxu0 %v1110
    %3464 = vmatprep.subr.mxu0 %v1119
    %3465 = vmatpush1.msra.mxu0 %v1118
    %3466 = vmatprep.subr.mxu0 %v1127
    %3467 = vmatpush1.msra.mxu0 %v1126
    %3468 = vmatprep.subr.mxu0 %v1135
    %3469 = vmatpush1.msra.mxu0 %v1134
    %3470 = vmatprep.subr.mxu0 %v1143
    %3471 = vmatpush1.msra.mxu0 %v1142
    %3472 = vmatprep.mubr.f32.mxu0 %v3263
    %3473 = vmatmul.mubr.f32.gmra.mrb[0].mxu0 %v3262
    %v3474 = vpop.f32.mrb[0].mxu0
    %v3475 = vadd.f32 0.0, %v3474
    %v3476 = vpop.f32.mrb[0].mxu0
    %v3477 = vadd.f32 0.0, %v3476
    %3478 = vdwg.mxu0
    %3479 = vmatprep.subr.mxu0 %v897
    %3480 = vmatpush1.msra.mxu0 %v896
    %3481 = vmatprep.subr.mxu0 %v905
    %3482 = vmatpush1.msra.mxu0 %v904
    %3483 = vmatprep.subr.mxu0 %v913
    %3484 = vmatpush1.msra.mxu0 %v912
    %3485 = vmatprep.subr.mxu0 %v921
    %3486 = vmatpush1.msra.mxu0 %v920
    %3487 = vmatprep.subr.mxu0 %v929
    %3488 = vmatpush1.msra.mxu0 %v928
    %3489 = vmatprep.subr.mxu0 %v937
    %3490 = vmatpush1.msra.mxu0 %v936
    %3491 = vmatprep.subr.mxu0 %v945
    %3492 = vmatpush1.msra.mxu0 %v944
    %3493 = vmatprep.subr.mxu0 %v953
    %3494 = vmatpush1.msra.mxu0 %v952
    %3495 = vmatprep.subr.mxu0 %v961
    %3496 = vmatpush1.msra.mxu0 %v960
    %3497 = vmatprep.subr.mxu0 %v969
    %3498 = vmatpush1.msra.mxu0 %v968
    %3499 = vmatprep.subr.mxu0 %v977
    %3500 = vmatpush1.msra.mxu0 %v976
    %3501 = vmatprep.subr.mxu0 %v985
    %3502 = vmatpush1.msra.mxu0 %v984
    %3503 = vmatprep.subr.mxu0 %v993
    %3504 = vmatpush1.msra.mxu0 %v992
    %3505 = vmatprep.subr.mxu0 %v1001
    %3506 = vmatpush1.msra.mxu0 %v1000
    %3507 = vmatprep.subr.mxu0 %v1009
    %3508 = vmatpush1.msra.mxu0 %v1008
    %3509 = vmatprep.subr.mxu0 %v1017
    %3510 = vmatpush1.msra.mxu0 %v1016
    %3511 = vmatprep.subr.mxu0 %v1025
    %3512 = vmatpush1.msra.mxu0 %v1024
    %3513 = vmatprep.subr.mxu0 %v1033
    %3514 = vmatpush1.msra.mxu0 %v1032
    %3515 = vmatprep.subr.mxu0 %v1041
    %3516 = vmatpush1.msra.mxu0 %v1040
    %3517 = vmatprep.subr.mxu0 %v1049
    %3518 = vmatpush1.msra.mxu0 %v1048
    %3519 = vmatprep.subr.mxu0 %v1057
    %3520 = vmatpush1.msra.mxu0 %v1056
    %3521 = vmatprep.subr.mxu0 %v1065
    %3522 = vmatpush1.msra.mxu0 %v1064
    %3523 = vmatprep.subr.mxu0 %v1073
    %3524 = vmatpush1.msra.mxu0 %v1072
    %3525 = vmatprep.subr.mxu0 %v1081
    %3526 = vmatpush1.msra.mxu0 %v1080
    %3527 = vmatprep.subr.mxu0 %v1089
    %3528 = vmatpush1.msra.mxu0 %v1088
    %3529 = vmatprep.subr.mxu0 %v1097
    %3530 = vmatpush1.msra.mxu0 %v1096
    %3531 = vmatprep.subr.mxu0 %v1105
    %3532 = vmatpush1.msra.mxu0 %v1104
    %3533 = vmatprep.subr.mxu0 %v1113
    %3534 = vmatpush1.msra.mxu0 %v1112
    %3535 = vmatprep.subr.mxu0 %v1121
    %3536 = vmatpush1.msra.mxu0 %v1120
    %3537 = vmatprep.subr.mxu0 %v1129
    %3538 = vmatpush1.msra.mxu0 %v1128
    %3539 = vmatprep.subr.mxu0 %v1137
    %3540 = vmatpush1.msra.mxu0 %v1136
    %3541 = vmatprep.subr.mxu0 %v1145
    %3542 = vmatpush1.msra.mxu0 %v1144
    %3543 = vmatprep.mubr.f32.mxu0 %v3263
    %3544 = vmatmul.mubr.f32.gmra.mrb[0].mxu0 %v3262
    %v3545 = vpop.f32.mrb[0].mxu0
    %v3546 = vadd.f32 0.0, %v3545
    %v3547 = vpop.f32.mrb[0].mxu0
    %v3548 = vadd.f32 0.0, %v3547
    %3549 = vdwg.mxu0
    %v3550 = vadd.f32 %v3252, %v3333
    %v3551 = vadd.f32 %v3253, %v3335
    %v3552 = vadd.f32 %v3254, %v3404
    %v3553 = vadd.f32 %v3255, %v3406
    %v3554 = vadd.f32 %v3256, %v3475
    %v3555 = vadd.f32 %v3257, %v3477
    %v3556 = vadd.f32 %v3258, %v3546
    %v3557 = vadd.f32 %v3259, %v3548
    %v3558 = vxor.u32 %v3550, 2147483648
    %v3559 = vxor.u32 %v3551, 2147483648
    %v3560 = vmul.f32 %v3558, 1.442695
    %v3561 = vpow.pop %v3560
    %v3562 = vmul.f32 %v3559, 1.442695
    %v3563 = vpow.pop %v3562
    %v3564 = vadd.f32 %v3561, 1.0
    %v3565 = vadd.f32 %v3563, 1.0
    %v3566 = vrcp.pop %v3564
    %v3567 = vmul.f32 1.0, %v3566
    %v3568 = vrcp.pop %v3565
    %v3569 = vmul.f32 1.0, %v3568
    %v3570 = vxor.u32 %v3552, 2147483648
    %v3571 = vxor.u32 %v3553, 2147483648
    %v3572 = vmul.f32 %v3570, 1.442695
    %v3573 = vpow.pop %v3572
    %v3574 = vmul.f32 %v3571, 1.442695
    %v3575 = vpow.pop %v3574
    %v3576 = vadd.f32 %v3573, 1.0
    %v3577 = vadd.f32 %v3575, 1.0
    %v3578 = vrcp.pop %v3576
    %v3579 = vmul.f32 1.0, %v3578
    %v3580 = vrcp.pop %v3577
    %v3581 = vmul.f32 1.0, %v3580
    %v3582 = vtanh.pop %v3554
    %v3583 = vtanh.pop %v3555
    %v3584 = vxor.u32 %v3556, 2147483648
    %v3585 = vxor.u32 %v3557, 2147483648
    %v3586 = vmul.f32 %v3584, 1.442695
    %v3587 = vpow.pop %v3586
    %v3588 = vmul.f32 %v3585, 1.442695
    %v3589 = vpow.pop %v3588
    %v3590 = vadd.f32 %v3587, 1.0
    %v3591 = vadd.f32 %v3589, 1.0
    %v3592 = vrcp.pop %v3590
    %v3593 = vmul.f32 1.0, %v3592
    %v3594 = vrcp.pop %v3591
    %v3595 = vmul.f32 1.0, %v3594
    %v3598 = vrot.slane %v3246, 6
    %v3599 = vrot.slane %v3247, 6
    %v3602 = vmul.f32 %v3579, %v3598
    %v3603 = vmul.f32 %v3581, %v3599
    %v3604 = vmul.f32 %v3567, %v3582
    %v3605 = vmul.f32 %v3569, %v3583
    %v3606 = vadd.f32 %v3602, %v3604
    %v3607 = vadd.f32 %v3603, %v3605
    %v3608 = vtanh.pop %v3606
    %v3609 = vtanh.pop %v3607
    %v3610 = vmul.f32 %v3593, %v3608
    %v3611 = vmul.f32 %v3595, %v3609
    %v3612 = vld [vmem:[#allocation2 + $0x80] sm:$0xc]
    %v3613 = vld [vmem:[#allocation2 + $0x88] sm:$0xc]
    %v3614 = vld [vmem:[#allocation2 + $0x90] sm:$0xc]
    %v3615 = vld [vmem:[#allocation2 + $0x98] sm:$0xc]
    %v3616 = vld [vmem:[#allocation2 + $0xa0] sm:$0xc]
    %v3617 = vld [vmem:[#allocation2 + $0xa8] sm:$0xc]
    %v3618 = vld [vmem:[#allocation2 + $0xb0] sm:$0xc]
    %v3619 = vld [vmem:[#allocation2 + $0xb8] sm:$0xc]
    %3620 = vmatprep.subr.mxu0 %v891
    %3621 = vmatpush1.msra.mxu0 %v890
    %3622 = vmatprep.subr.mxu0 %v899
    %3623 = vmatpush1.msra.mxu0 %v898
    %3624 = vmatprep.subr.mxu0 %v907
    %3625 = vmatpush1.msra.mxu0 %v906
    %3626 = vmatprep.subr.mxu0 %v915
    %3627 = vmatpush1.msra.mxu0 %v914
    %3628 = vmatprep.subr.mxu0 %v923
    %3629 = vmatpush1.msra.mxu0 %v922
    %3630 = vmatprep.subr.mxu0 %v931
    %3631 = vmatpush1.msra.mxu0 %v930
    %3632 = vmatprep.subr.mxu0 %v939
    %3633 = vmatpush1.msra.mxu0 %v938
    %3634 = vmatprep.subr.mxu0 %v947
    %3635 = vmatpush1.msra.mxu0 %v946
    %3636 = vmatprep.subr.mxu0 %v955
    %3637 = vmatpush1.msra.mxu0 %v954
    %3638 = vmatprep.subr.mxu0 %v963
    %3639 = vmatpush1.msra.mxu0 %v962
    %3640 = vmatprep.subr.mxu0 %v971
    %3641 = vmatpush1.msra.mxu0 %v970
    %3642 = vmatprep.subr.mxu0 %v979
    %3643 = vmatpush1.msra.mxu0 %v978
    %3644 = vmatprep.subr.mxu0 %v987
    %3645 = vmatpush1.msra.mxu0 %v986
    %3646 = vmatprep.subr.mxu0 %v995
    %3647 = vmatpush1.msra.mxu0 %v994
    %3648 = vmatprep.subr.mxu0 %v1003
    %3649 = vmatpush1.msra.mxu0 %v1002
    %3650 = vmatprep.subr.mxu0 %v1011
    %3651 = vmatpush1.msra.mxu0 %v1010
    %3652 = vmatprep.subr.mxu0 %v1019
    %3653 = vmatpush1.msra.mxu0 %v1018
    %3654 = vmatprep.subr.mxu0 %v1027
    %3655 = vmatpush1.msra.mxu0 %v1026
    %3656 = vmatprep.subr.mxu0 %v1035
    %3657 = vmatpush1.msra.mxu0 %v1034
    %3658 = vmatprep.subr.mxu0 %v1043
    %3659 = vmatpush1.msra.mxu0 %v1042
    %3660 = vmatprep.subr.mxu0 %v1051
    %3661 = vmatpush1.msra.mxu0 %v1050
    %3662 = vmatprep.subr.mxu0 %v1059
    %3663 = vmatpush1.msra.mxu0 %v1058
    %3664 = vmatprep.subr.mxu0 %v1067
    %3665 = vmatpush1.msra.mxu0 %v1066
    %3666 = vmatprep.subr.mxu0 %v1075
    %3667 = vmatpush1.msra.mxu0 %v1074
    %3668 = vmatprep.subr.mxu0 %v1083
    %3669 = vmatpush1.msra.mxu0 %v1082
    %3670 = vmatprep.subr.mxu0 %v1091
    %3671 = vmatpush1.msra.mxu0 %v1090
    %3672 = vmatprep.subr.mxu0 %v1099
    %3673 = vmatpush1.msra.mxu0 %v1098
    %3674 = vmatprep.subr.mxu0 %v1107
    %3675 = vmatpush1.msra.mxu0 %v1106
    %3676 = vmatprep.subr.mxu0 %v1115
    %3677 = vmatpush1.msra.mxu0 %v1114
    %3678 = vmatprep.subr.mxu0 %v1123
    %3679 = vmatpush1.msra.mxu0 %v1122
    %3680 = vmatprep.subr.mxu0 %v1131
    %3681 = vmatpush1.msra.mxu0 %v1130
    %3682 = vmatprep.subr.mxu0 %v1139
    %3683 = vmatpush1.msra.mxu0 %v1138
    %3684 = vmatprep.mubr.f32.mxu0 %v3611
    %3685 = vmatmul.mubr.f32.gmra.mrb[0].mxu0 %v3610
    %v3686 = vpop.f32.mrb[0].mxu0
    %v3687 = vadd.f32 0.0, %v3686
    %v3688 = vpop.f32.mrb[0].mxu0
    %v3689 = vadd.f32 0.0, %v3688
    %3690 = vdwg.mxu0
    %3691 = vmatprep.subr.mxu0 %v893
    %3692 = vmatpush1.msra.mxu0 %v892
    %3693 = vmatprep.subr.mxu0 %v901
    %3694 = vmatpush1.msra.mxu0 %v900
    %3695 = vmatprep.subr.mxu0 %v909
    %3696 = vmatpush1.msra.mxu0 %v908
    %3697 = vmatprep.subr.mxu0 %v917
    %3698 = vmatpush1.msra.mxu0 %v916
    %3699 = vmatprep.subr.mxu0 %v925
    %3700 = vmatpush1.msra.mxu0 %v924
    %3701 = vmatprep.subr.mxu0 %v933
    %3702 = vmatpush1.msra.mxu0 %v932
    %3703 = vmatprep.subr.mxu0 %v941
    %3704 = vmatpush1.msra.mxu0 %v940
    %3705 = vmatprep.subr.mxu0 %v949
    %3706 = vmatpush1.msra.mxu0 %v948
    %3707 = vmatprep.subr.mxu0 %v957
    %3708 = vmatpush1.msra.mxu0 %v956
    %3709 = vmatprep.subr.mxu0 %v965
    %3710 = vmatpush1.msra.mxu0 %v964
    %3711 = vmatprep.subr.mxu0 %v973
    %3712 = vmatpush1.msra.mxu0 %v972
    %3713 = vmatprep.subr.mxu0 %v981
    %3714 = vmatpush1.msra.mxu0 %v980
    %3715 = vmatprep.subr.mxu0 %v989
    %3716 = vmatpush1.msra.mxu0 %v988
    %3717 = vmatprep.subr.mxu0 %v997
    %3718 = vmatpush1.msra.mxu0 %v996
    %3719 = vmatprep.subr.mxu0 %v1005
    %3720 = vmatpush1.msra.mxu0 %v1004
    %3721 = vmatprep.subr.mxu0 %v1013
    %3722 = vmatpush1.msra.mxu0 %v1012
    %3723 = vmatprep.subr.mxu0 %v1021
    %3724 = vmatpush1.msra.mxu0 %v1020
    %3725 = vmatprep.subr.mxu0 %v1029
    %3726 = vmatpush1.msra.mxu0 %v1028
    %3727 = vmatprep.subr.mxu0 %v1037
    %3728 = vmatpush1.msra.mxu0 %v1036
    %3729 = vmatprep.subr.mxu0 %v1045
    %3730 = vmatpush1.msra.mxu0 %v1044
    %3731 = vmatprep.subr.mxu0 %v1053
    %3732 = vmatpush1.msra.mxu0 %v1052
    %3733 = vmatprep.subr.mxu0 %v1061
    %3734 = vmatpush1.msra.mxu0 %v1060
    %3735 = vmatprep.subr.mxu0 %v1069
    %3736 = vmatpush1.msra.mxu0 %v1068
    %3737 = vmatprep.subr.mxu0 %v1077
    %3738 = vmatpush1.msra.mxu0 %v1076
    %3739 = vmatprep.subr.mxu0 %v1085
    %3740 = vmatpush1.msra.mxu0 %v1084
    %3741 = vmatprep.subr.mxu0 %v1093
    %3742 = vmatpush1.msra.mxu0 %v1092
    %3743 = vmatprep.subr.mxu0 %v1101
    %3744 = vmatpush1.msra.mxu0 %v1100
    %3745 = vmatprep.subr.mxu0 %v1109
    %3746 = vmatpush1.msra.mxu0 %v1108
    %3747 = vmatprep.subr.mxu0 %v1117
    %3748 = vmatpush1.msra.mxu0 %v1116
    %3749 = vmatprep.subr.mxu0 %v1125
    %3750 = vmatpush1.msra.mxu0 %v1124
    %3751 = vmatprep.subr.mxu0 %v1133
    %3752 = vmatpush1.msra.mxu0 %v1132
    %3753 = vmatprep.subr.mxu0 %v1141
    %3754 = vmatpush1.msra.mxu0 %v1140
    %3755 = vmatprep.mubr.f32.mxu0 %v3611
    %3756 = vmatmul.mubr.f32.gmra.mrb[0].mxu0 %v3610
    %v3757 = vpop.f32.mrb[0].mxu0
    %v3758 = vadd.f32 0.0, %v3757
    %v3759 = vpop.f32.mrb[0].mxu0
    %v3760 = vadd.f32 0.0, %v3759
    %3761 = vdwg.mxu0
    %3762 = vmatprep.subr.mxu0 %v895
    %3763 = vmatpush1.msra.mxu0 %v894
    %3764 = vmatprep.subr.mxu0 %v903
    %3765 = vmatpush1.msra.mxu0 %v902
    %3766 = vmatprep.subr.mxu0 %v911
    %3767 = vmatpush1.msra.mxu0 %v910
    %3768 = vmatprep.subr.mxu0 %v919
    %3769 = vmatpush1.msra.mxu0 %v918
    %3770 = vmatprep.subr.mxu0 %v927
    %3771 = vmatpush1.msra.mxu0 %v926
    %3772 = vmatprep.subr.mxu0 %v935
    %3773 = vmatpush1.msra.mxu0 %v934
    %3774 = vmatprep.subr.mxu0 %v943
    %3775 = vmatpush1.msra.mxu0 %v942
    %3776 = vmatprep.subr.mxu0 %v951
    %3777 = vmatpush1.msra.mxu0 %v950
    %3778 = vmatprep.subr.mxu0 %v959
    %3779 = vmatpush1.msra.mxu0 %v958
    %3780 = vmatprep.subr.mxu0 %v967
    %3781 = vmatpush1.msra.mxu0 %v966
    %3782 = vmatprep.subr.mxu0 %v975
    %3783 = vmatpush1.msra.mxu0 %v974
    %3784 = vmatprep.subr.mxu0 %v983
    %3785 = vmatpush1.msra.mxu0 %v982
    %3786 = vmatprep.subr.mxu0 %v991
    %3787 = vmatpush1.msra.mxu0 %v990
    %3788 = vmatprep.subr.mxu0 %v999
    %3789 = vmatpush1.msra.mxu0 %v998
    %3790 = vmatprep.subr.mxu0 %v1007
    %3791 = vmatpush1.msra.mxu0 %v1006
    %3792 = vmatprep.subr.mxu0 %v1015
    %3793 = vmatpush1.msra.mxu0 %v1014
    %3794 = vmatprep.subr.mxu0 %v1023
    %3795 = vmatpush1.msra.mxu0 %v1022
    %3796 = vmatprep.subr.mxu0 %v1031
    %3797 = vmatpush1.msra.mxu0 %v1030
    %3798 = vmatprep.subr.mxu0 %v1039
    %3799 = vmatpush1.msra.mxu0 %v1038
    %3800 = vmatprep.subr.mxu0 %v1047
    %3801 = vmatpush1.msra.mxu0 %v1046
    %3802 = vmatprep.subr.mxu0 %v1055
    %3803 = vmatpush1.msra.mxu0 %v1054
    %3804 = vmatprep.subr.mxu0 %v1063
    %3805 = vmatpush1.msra.mxu0 %v1062
    %3806 = vmatprep.subr.mxu0 %v1071
    %3807 = vmatpush1.msra.mxu0 %v1070
    %3808 = vmatprep.subr.mxu0 %v1079
    %3809 = vmatpush1.msra.mxu0 %v1078
    %3810 = vmatprep.subr.mxu0 %v1087
    %3811 = vmatpush1.msra.mxu0 %v1086
    %3812 = vmatprep.subr.mxu0 %v1095
    %3813 = vmatpush1.msra.mxu0 %v1094
    %3814 = vmatprep.subr.mxu0 %v1103
    %3815 = vmatpush1.msra.mxu0 %v1102
    %3816 = vmatprep.subr.mxu0 %v1111
    %3817 = vmatpush1.msra.mxu0 %v1110
    %3818 = vmatprep.subr.mxu0 %v1119
    %3819 = vmatpush1.msra.mxu0 %v1118
    %3820 = vmatprep.subr.mxu0 %v1127
    %3821 = vmatpush1.msra.mxu0 %v1126
    %3822 = vmatprep.subr.mxu0 %v1135
    %3823 = vmatpush1.msra.mxu0 %v1134
    %3824 = vmatprep.subr.mxu0 %v1143
    %3825 = vmatpush1.msra.mxu0 %v1142
    %3826 = vmatprep.mubr.f32.mxu0 %v3611
    %3827 = vmatmul.mubr.f32.gmra.mrb[0].mxu0 %v3610
    %v3828 = vpop.f32.mrb[0].mxu0
    %v3829 = vadd.f32 0.0, %v3828
    %v3830 = vpop.f32.mrb[0].mxu0
    %v3831 = vadd.f32 0.0, %v3830
    %3832 = vdwg.mxu0
    %3833 = vmatprep.subr.mxu0 %v897
    %3834 = vmatpush1.msra.mxu0 %v896
    %3835 = vmatprep.subr.mxu0 %v905
    %3836 = vmatpush1.msra.mxu0 %v904
    %3837 = vmatprep.subr.mxu0 %v913
    %3838 = vmatpush1.msra.mxu0 %v912
    %3839 = vmatprep.subr.mxu0 %v921
    %3840 = vmatpush1.msra.mxu0 %v920
    %3841 = vmatprep.subr.mxu0 %v929
    %3842 = vmatpush1.msra.mxu0 %v928
    %3843 = vmatprep.subr.mxu0 %v937
    %3844 = vmatpush1.msra.mxu0 %v936
    %3845 = vmatprep.subr.mxu0 %v945
    %3846 = vmatpush1.msra.mxu0 %v944
    %3847 = vmatprep.subr.mxu0 %v953
    %3848 = vmatpush1.msra.mxu0 %v952
    %3849 = vmatprep.subr.mxu0 %v961
    %3850 = vmatpush1.msra.mxu0 %v960
    %3851 = vmatprep.subr.mxu0 %v969
    %3852 = vmatpush1.msra.mxu0 %v968
    %3853 = vmatprep.subr.mxu0 %v977
    %3854 = vmatpush1.msra.mxu0 %v976
    %3855 = vmatprep.subr.mxu0 %v985
    %3856 = vmatpush1.msra.mxu0 %v984
    %3857 = vmatprep.subr.mxu0 %v993
    %3858 = vmatpush1.msra.mxu0 %v992
    %3859 = vmatprep.subr.mxu0 %v1001
    %3860 = vmatpush1.msra.mxu0 %v1000
    %3861 = vmatprep.subr.mxu0 %v1009
    %3862 = vmatpush1.msra.mxu0 %v1008
    %3863 = vmatprep.subr.mxu0 %v1017
    %3864 = vmatpush1.msra.mxu0 %v1016
    %3865 = vmatprep.subr.mxu0 %v1025
    %3866 = vmatpush1.msra.mxu0 %v1024
    %3867 = vmatprep.subr.mxu0 %v1033
    %3868 = vmatpush1.msra.mxu0 %v1032
    %3869 = vmatprep.subr.mxu0 %v1041
    %3870 = vmatpush1.msra.mxu0 %v1040
    %3871 = vmatprep.subr.mxu0 %v1049
    %3872 = vmatpush1.msra.mxu0 %v1048
    %3873 = vmatprep.subr.mxu0 %v1057
    %3874 = vmatpush1.msra.mxu0 %v1056
    %3875 = vmatprep.subr.mxu0 %v1065
    %3876 = vmatpush1.msra.mxu0 %v1064
    %3877 = vmatprep.subr.mxu0 %v1073
    %3878 = vmatpush1.msra.mxu0 %v1072
    %3879 = vmatprep.subr.mxu0 %v1081
    %3880 = vmatpush1.msra.mxu0 %v1080
    %3881 = vmatprep.subr.mxu0 %v1089
    %3882 = vmatpush1.msra.mxu0 %v1088
    %3883 = vmatprep.subr.mxu0 %v1097
    %3884 = vmatpush1.msra.mxu0 %v1096
    %3885 = vmatprep.subr.mxu0 %v1105
    %3886 = vmatpush1.msra.mxu0 %v1104
    %3887 = vmatprep.subr.mxu0 %v1113
    %3888 = vmatpush1.msra.mxu0 %v1112
    %3889 = vmatprep.subr.mxu0 %v1121
    %3890 = vmatpush1.msra.mxu0 %v1120
    %3891 = vmatprep.subr.mxu0 %v1129
    %3892 = vmatpush1.msra.mxu0 %v1128
    %3893 = vmatprep.subr.mxu0 %v1137
    %3894 = vmatpush1.msra.mxu0 %v1136
    %3895 = vmatprep.subr.mxu0 %v1145
    %3896 = vmatpush1.msra.mxu0 %v1144
    %3897 = vmatprep.mubr.f32.mxu0 %v3611
    %3898 = vmatmul.mubr.f32.gmra.mrb[0].mxu0 %v3610
    %v3899 = vpop.f32.mrb[0].mxu0
    %v3900 = vadd.f32 0.0, %v3899
    %v3901 = vpop.f32.mrb[0].mxu0
    %v3902 = vadd.f32 0.0, %v3901
    %3903 = vdwg.mxu0
    %v3912 = vrot.slane %v3687, 6
    %v3913 = vrot.slane %v3689, 6
    %v3914 = vrot.slane %v3758, 6
    %v3915 = vrot.slane %v3760, 6
    %v3916 = vrot.slane %v3829, 6
    %v3917 = vrot.slane %v3831, 6
    %v3918 = vrot.slane %v3900, 6
    %v3919 = vrot.slane %v3902, 6
    %v3928 = vadd.f32 %v3612, %v3912
    %v3929 = vadd.f32 %v3613, %v3913
    %v3930 = vadd.f32 %v3614, %v3914
    %v3931 = vadd.f32 %v3615, %v3915
    %v3932 = vadd.f32 %v3616, %v3916
    %v3933 = vadd.f32 %v3617, %v3917
    %v3934 = vadd.f32 %v3618, %v3918
    %v3935 = vadd.f32 %v3619, %v3919
    %v3936 = vxor.u32 %v3928, 2147483648
    %v3937 = vxor.u32 %v3929, 2147483648
    %v3938 = vmul.f32 %v3936, 1.442695
    %v3939 = vpow.pop %v3938
    %v3940 = vmul.f32 %v3937, 1.442695
    %v3941 = vpow.pop %v3940
    %v3942 = vadd.f32 %v3939, 1.0
    %v3943 = vadd.f32 %v3941, 1.0
    %v3944 = vrcp.pop %v3942
    %v3945 = vmul.f32 1.0, %v3944
    %v3946 = vrcp.pop %v3943
    %v3947 = vmul.f32 1.0, %v3946
    %v3948 = vxor.u32 %v3930, 2147483648
    %v3949 = vxor.u32 %v3931, 2147483648
    %v3950 = vmul.f32 %v3948, 1.442695
    %v3951 = vpow.pop %v3950
    %v3952 = vmul.f32 %v3949, 1.442695
    %v3953 = vpow.pop %v3952
    %v3954 = vadd.f32 %v3951, 1.0
    %v3955 = vadd.f32 %v3953, 1.0
    %v3956 = vrcp.pop %v3954
    %v3957 = vmul.f32 1.0, %v3956
    %v3958 = vrcp.pop %v3955
    %v3959 = vmul.f32 1.0, %v3958
    %v3960 = vtanh.pop %v3932
    %v3961 = vtanh.pop %v3933
    %v3962 = vxor.u32 %v3934, 2147483648
    %v3963 = vxor.u32 %v3935, 2147483648
    %v3964 = vmul.f32 %v3962, 1.442695
    %v3965 = vpow.pop %v3964
    %v3966 = vmul.f32 %v3963, 1.442695
    %v3967 = vpow.pop %v3966
    %v3968 = vadd.f32 %v3965, 1.0
    %v3969 = vadd.f32 %v3967, 1.0
    %v3970 = vrcp.pop %v3968
    %v3971 = vmul.f32 1.0, %v3970
    %v3972 = vrcp.pop %v3969
    %v3973 = vmul.f32 1.0, %v3972
    %v3976 = vrot.slane %v3606, 6
    %v3977 = vrot.slane %v3607, 6
    %v3980 = vmul.f32 %v3957, %v3976
    %v3981 = vmul.f32 %v3959, %v3977
    %v3982 = vmul.f32 %v3945, %v3960
    %v3983 = vmul.f32 %v3947, %v3961
    %v3984 = vadd.f32 %v3980, %v3982
    %v3985 = vadd.f32 %v3981, %v3983
    %v3986 = vtanh.pop %v3984
    %v3987 = vtanh.pop %v3985
    %v3988 = vmul.f32 %v3971, %v3986
    %v3989 = vmul.f32 %v3973, %v3987
    %v3990 = vld [vmem:[#allocation2 + $0x80] sm:$0x30]
    %v3991 = vld [vmem:[#allocation2 + $0x88] sm:$0x30]
    %v3992 = vld [vmem:[#allocation2 + $0x90] sm:$0x30]
    %v3993 = vld [vmem:[#allocation2 + $0x98] sm:$0x30]
    %v3994 = vld [vmem:[#allocation2 + $0xa0] sm:$0x30]
    %v3995 = vld [vmem:[#allocation2 + $0xa8] sm:$0x30]
    %v3996 = vld [vmem:[#allocation2 + $0xb0] sm:$0x30]
    %v3997 = vld [vmem:[#allocation2 + $0xb8] sm:$0x30]
    %v4000 = vrot.slane %v3988, 2
    %v4001 = vrot.slane %v3989, 2
    %4004 = vmatprep.subr.mxu0 %v891
    %4005 = vmatpush1.msra.mxu0 %v890
    %4006 = vmatprep.subr.mxu0 %v899
    %4007 = vmatpush1.msra.mxu0 %v898
    %4008 = vmatprep.subr.mxu0 %v907
    %4009 = vmatpush1.msra.mxu0 %v906
    %4010 = vmatprep.subr.mxu0 %v915
    %4011 = vmatpush1.msra.mxu0 %v914
    %4012 = vmatprep.subr.mxu0 %v923
    %4013 = vmatpush1.msra.mxu0 %v922
    %4014 = vmatprep.subr.mxu0 %v931
    %4015 = vmatpush1.msra.mxu0 %v930
    %4016 = vmatprep.subr.mxu0 %v939
    %4017 = vmatpush1.msra.mxu0 %v938
    %4018 = vmatprep.subr.mxu0 %v947
    %4019 = vmatpush1.msra.mxu0 %v946
    %4020 = vmatprep.subr.mxu0 %v955
    %4021 = vmatpush1.msra.mxu0 %v954
    %4022 = vmatprep.subr.mxu0 %v963
    %4023 = vmatpush1.msra.mxu0 %v962
    %4024 = vmatprep.subr.mxu0 %v971
    %4025 = vmatpush1.msra.mxu0 %v970
    %4026 = vmatprep.subr.mxu0 %v979
    %4027 = vmatpush1.msra.mxu0 %v978
    %4028 = vmatprep.subr.mxu0 %v987
    %4029 = vmatpush1.msra.mxu0 %v986
    %4030 = vmatprep.subr.mxu0 %v995
    %4031 = vmatpush1.msra.mxu0 %v994
    %4032 = vmatprep.subr.mxu0 %v1003
    %4033 = vmatpush1.msra.mxu0 %v1002
    %4034 = vmatprep.subr.mxu0 %v1011
    %4035 = vmatpush1.msra.mxu0 %v1010
    %4036 = vmatprep.subr.mxu0 %v1019
    %4037 = vmatpush1.msra.mxu0 %v1018
    %4038 = vmatprep.subr.mxu0 %v1027
    %4039 = vmatpush1.msra.mxu0 %v1026
    %4040 = vmatprep.subr.mxu0 %v1035
    %4041 = vmatpush1.msra.mxu0 %v1034
    %4042 = vmatprep.subr.mxu0 %v1043
    %4043 = vmatpush1.msra.mxu0 %v1042
    %4044 = vmatprep.subr.mxu0 %v1051
    %4045 = vmatpush1.msra.mxu0 %v1050
    %4046 = vmatprep.subr.mxu0 %v1059
    %4047 = vmatpush1.msra.mxu0 %v1058
    %4048 = vmatprep.subr.mxu0 %v1067
    %4049 = vmatpush1.msra.mxu0 %v1066
    %4050 = vmatprep.subr.mxu0 %v1075
    %4051 = vmatpush1.msra.mxu0 %v1074
    %4052 = vmatprep.subr.mxu0 %v1083
    %4053 = vmatpush1.msra.mxu0 %v1082
    %4054 = vmatprep.subr.mxu0 %v1091
    %4055 = vmatpush1.msra.mxu0 %v1090
    %4056 = vmatprep.subr.mxu0 %v1099
    %4057 = vmatpush1.msra.mxu0 %v1098
    %4058 = vmatprep.subr.mxu0 %v1107
    %4059 = vmatpush1.msra.mxu0 %v1106
    %4060 = vmatprep.subr.mxu0 %v1115
    %4061 = vmatpush1.msra.mxu0 %v1114
    %4062 = vmatprep.subr.mxu0 %v1123
    %4063 = vmatpush1.msra.mxu0 %v1122
    %4064 = vmatprep.subr.mxu0 %v1131
    %4065 = vmatpush1.msra.mxu0 %v1130
    %4066 = vmatprep.subr.mxu0 %v1139
    %4067 = vmatpush1.msra.mxu0 %v1138
    %4068 = vmatprep.mubr.f32.mxu0 %v4001
    %4069 = vmatmul.mubr.f32.gmra.mrb[0].mxu0 %v4000
    %v4070 = vpop.f32.mrb[0].mxu0
    %v4071 = vadd.f32 0.0, %v4070
    %v4072 = vpop.f32.mrb[0].mxu0
    %v4073 = vadd.f32 0.0, %v4072
    %4074 = vdwg.mxu0
    %4075 = vmatprep.subr.mxu0 %v893
    %4076 = vmatpush1.msra.mxu0 %v892
    %4077 = vmatprep.subr.mxu0 %v901
    %4078 = vmatpush1.msra.mxu0 %v900
    %4079 = vmatprep.subr.mxu0 %v909
    %4080 = vmatpush1.msra.mxu0 %v908
    %4081 = vmatprep.subr.mxu0 %v917
    %4082 = vmatpush1.msra.mxu0 %v916
    %4083 = vmatprep.subr.mxu0 %v925
    %4084 = vmatpush1.msra.mxu0 %v924
    %4085 = vmatprep.subr.mxu0 %v933
    %4086 = vmatpush1.msra.mxu0 %v932
    %4087 = vmatprep.subr.mxu0 %v941
    %4088 = vmatpush1.msra.mxu0 %v940
    %4089 = vmatprep.subr.mxu0 %v949
    %4090 = vmatpush1.msra.mxu0 %v948
    %4091 = vmatprep.subr.mxu0 %v957
    %4092 = vmatpush1.msra.mxu0 %v956
    %4093 = vmatprep.subr.mxu0 %v965
    %4094 = vmatpush1.msra.mxu0 %v964
    %4095 = vmatprep.subr.mxu0 %v973
    %4096 = vmatpush1.msra.mxu0 %v972
    %4097 = vmatprep.subr.mxu0 %v981
    %4098 = vmatpush1.msra.mxu0 %v980
    %4099 = vmatprep.subr.mxu0 %v989
    %4100 = vmatpush1.msra.mxu0 %v988
    %4101 = vmatprep.subr.mxu0 %v997
    %4102 = vmatpush1.msra.mxu0 %v996
    %4103 = vmatprep.subr.mxu0 %v1005
    %4104 = vmatpush1.msra.mxu0 %v1004
    %4105 = vmatprep.subr.mxu0 %v1013
    %4106 = vmatpush1.msra.mxu0 %v1012
    %4107 = vmatprep.subr.mxu0 %v1021
    %4108 = vmatpush1.msra.mxu0 %v1020
    %4109 = vmatprep.subr.mxu0 %v1029
    %4110 = vmatpush1.msra.mxu0 %v1028
    %4111 = vmatprep.subr.mxu0 %v1037
    %4112 = vmatpush1.msra.mxu0 %v1036
    %4113 = vmatprep.subr.mxu0 %v1045
    %4114 = vmatpush1.msra.mxu0 %v1044
    %4115 = vmatprep.subr.mxu0 %v1053
    %4116 = vmatpush1.msra.mxu0 %v1052
    %4117 = vmatprep.subr.mxu0 %v1061
    %4118 = vmatpush1.msra.mxu0 %v1060
    %4119 = vmatprep.subr.mxu0 %v1069
    %4120 = vmatpush1.msra.mxu0 %v1068
    %4121 = vmatprep.subr.mxu0 %v1077
    %4122 = vmatpush1.msra.mxu0 %v1076
    %4123 = vmatprep.subr.mxu0 %v1085
    %4124 = vmatpush1.msra.mxu0 %v1084
    %4125 = vmatprep.subr.mxu0 %v1093
    %4126 = vmatpush1.msra.mxu0 %v1092
    %4127 = vmatprep.subr.mxu0 %v1101
    %4128 = vmatpush1.msra.mxu0 %v1100
    %4129 = vmatprep.subr.mxu0 %v1109
    %4130 = vmatpush1.msra.mxu0 %v1108
    %4131 = vmatprep.subr.mxu0 %v1117
    %4132 = vmatpush1.msra.mxu0 %v1116
    %4133 = vmatprep.subr.mxu0 %v1125
    %4134 = vmatpush1.msra.mxu0 %v1124
    %4135 = vmatprep.subr.mxu0 %v1133
    %4136 = vmatpush1.msra.mxu0 %v1132
    %4137 = vmatprep.subr.mxu0 %v1141
    %4138 = vmatpush1.msra.mxu0 %v1140
    %4139 = vmatprep.mubr.f32.mxu0 %v4001
    %4140 = vmatmul.mubr.f32.gmra.mrb[0].mxu0 %v4000
    %v4141 = vpop.f32.mrb[0].mxu0
    %v4142 = vadd.f32 0.0, %v4141
    %v4143 = vpop.f32.mrb[0].mxu0
    %v4144 = vadd.f32 0.0, %v4143
    %4145 = vdwg.mxu0
    %4146 = vmatprep.subr.mxu0 %v895
    %4147 = vmatpush1.msra.mxu0 %v894
    %4148 = vmatprep.subr.mxu0 %v903
    %4149 = vmatpush1.msra.mxu0 %v902
    %4150 = vmatprep.subr.mxu0 %v911
    %4151 = vmatpush1.msra.mxu0 %v910
    %4152 = vmatprep.subr.mxu0 %v919
    %4153 = vmatpush1.msra.mxu0 %v918
    %4154 = vmatprep.subr.mxu0 %v927
    %4155 = vmatpush1.msra.mxu0 %v926
    %4156 = vmatprep.subr.mxu0 %v935
    %4157 = vmatpush1.msra.mxu0 %v934
    %4158 = vmatprep.subr.mxu0 %v943
    %4159 = vmatpush1.msra.mxu0 %v942
    %4160 = vmatprep.subr.mxu0 %v951
    %4161 = vmatpush1.msra.mxu0 %v950
    %4162 = vmatprep.subr.mxu0 %v959
    %4163 = vmatpush1.msra.mxu0 %v958
    %4164 = vmatprep.subr.mxu0 %v967
    %4165 = vmatpush1.msra.mxu0 %v966
    %4166 = vmatprep.subr.mxu0 %v975
    %4167 = vmatpush1.msra.mxu0 %v974
    %4168 = vmatprep.subr.mxu0 %v983
    %4169 = vmatpush1.msra.mxu0 %v982
    %4170 = vmatprep.subr.mxu0 %v991
    %4171 = vmatpush1.msra.mxu0 %v990
    %4172 = vmatprep.subr.mxu0 %v999
    %4173 = vmatpush1.msra.mxu0 %v998
    %4174 = vmatprep.subr.mxu0 %v1007
    %4175 = vmatpush1.msra.mxu0 %v1006
    %4176 = vmatprep.subr.mxu0 %v1015
    %4177 = vmatpush1.msra.mxu0 %v1014
    %4178 = vmatprep.subr.mxu0 %v1023
    %4179 = vmatpush1.msra.mxu0 %v1022
    %4180 = vmatprep.subr.mxu0 %v1031
    %4181 = vmatpush1.msra.mxu0 %v1030
    %4182 = vmatprep.subr.mxu0 %v1039
    %4183 = vmatpush1.msra.mxu0 %v1038
    %4184 = vmatprep.subr.mxu0 %v1047
    %4185 = vmatpush1.msra.mxu0 %v1046
    %4186 = vmatprep.subr.mxu0 %v1055
    %4187 = vmatpush1.msra.mxu0 %v1054
    %4188 = vmatprep.subr.mxu0 %v1063
    %4189 = vmatpush1.msra.mxu0 %v1062
    %4190 = vmatprep.subr.mxu0 %v1071
    %4191 = vmatpush1.msra.mxu0 %v1070
    %4192 = vmatprep.subr.mxu0 %v1079
    %4193 = vmatpush1.msra.mxu0 %v1078
    %4194 = vmatprep.subr.mxu0 %v1087
    %4195 = vmatpush1.msra.mxu0 %v1086
    %4196 = vmatprep.subr.mxu0 %v1095
    %4197 = vmatpush1.msra.mxu0 %v1094
    %4198 = vmatprep.subr.mxu0 %v1103
    %4199 = vmatpush1.msra.mxu0 %v1102
    %4200 = vmatprep.subr.mxu0 %v1111
    %4201 = vmatpush1.msra.mxu0 %v1110
    %4202 = vmatprep.subr.mxu0 %v1119
    %4203 = vmatpush1.msra.mxu0 %v1118
    %4204 = vmatprep.subr.mxu0 %v1127
    %4205 = vmatpush1.msra.mxu0 %v1126
    %4206 = vmatprep.subr.mxu0 %v1135
    %4207 = vmatpush1.msra.mxu0 %v1134
    %4208 = vmatprep.subr.mxu0 %v1143
    %4209 = vmatpush1.msra.mxu0 %v1142
    %4210 = vmatprep.mubr.f32.mxu0 %v4001
    %4211 = vmatmul.mubr.f32.gmra.mrb[0].mxu0 %v4000
    %v4212 = vpop.f32.mrb[0].mxu0
    %v4213 = vadd.f32 0.0, %v4212
    %v4214 = vpop.f32.mrb[0].mxu0
    %v4215 = vadd.f32 0.0, %v4214
    %4216 = vdwg.mxu0
    %4217 = vmatprep.subr.mxu0 %v897
    %4218 = vmatpush1.msra.mxu0 %v896
    %4219 = vmatprep.subr.mxu0 %v905
    %4220 = vmatpush1.msra.mxu0 %v904
    %4221 = vmatprep.subr.mxu0 %v913
    %4222 = vmatpush1.msra.mxu0 %v912
    %4223 = vmatprep.subr.mxu0 %v921
    %4224 = vmatpush1.msra.mxu0 %v920
    %4225 = vmatprep.subr.mxu0 %v929
    %4226 = vmatpush1.msra.mxu0 %v928
    %4227 = vmatprep.subr.mxu0 %v937
    %4228 = vmatpush1.msra.mxu0 %v936
    %4229 = vmatprep.subr.mxu0 %v945
    %4230 = vmatpush1.msra.mxu0 %v944
    %4231 = vmatprep.subr.mxu0 %v953
    %4232 = vmatpush1.msra.mxu0 %v952
    %4233 = vmatprep.subr.mxu0 %v961
    %4234 = vmatpush1.msra.mxu0 %v960
    %4235 = vmatprep.subr.mxu0 %v969
    %4236 = vmatpush1.msra.mxu0 %v968
    %4237 = vmatprep.subr.mxu0 %v977
    %4238 = vmatpush1.msra.mxu0 %v976
    %4239 = vmatprep.subr.mxu0 %v985
    %4240 = vmatpush1.msra.mxu0 %v984
    %4241 = vmatprep.subr.mxu0 %v993
    %4242 = vmatpush1.msra.mxu0 %v992
    %4243 = vmatprep.subr.mxu0 %v1001
    %4244 = vmatpush1.msra.mxu0 %v1000
    %4245 = vmatprep.subr.mxu0 %v1009
    %4246 = vmatpush1.msra.mxu0 %v1008
    %4247 = vmatprep.subr.mxu0 %v1017
    %4248 = vmatpush1.msra.mxu0 %v1016
    %4249 = vmatprep.subr.mxu0 %v1025
    %4250 = vmatpush1.msra.mxu0 %v1024
    %4251 = vmatprep.subr.mxu0 %v1033
    %4252 = vmatpush1.msra.mxu0 %v1032
    %4253 = vmatprep.subr.mxu0 %v1041
    %4254 = vmatpush1.msra.mxu0 %v1040
    %4255 = vmatprep.subr.mxu0 %v1049
    %4256 = vmatpush1.msra.mxu0 %v1048
    %4257 = vmatprep.subr.mxu0 %v1057
    %4258 = vmatpush1.msra.mxu0 %v1056
    %4259 = vmatprep.subr.mxu0 %v1065
    %4260 = vmatpush1.msra.mxu0 %v1064
    %4261 = vmatprep.subr.mxu0 %v1073
    %4262 = vmatpush1.msra.mxu0 %v1072
    %4263 = vmatprep.subr.mxu0 %v1081
    %4264 = vmatpush1.msra.mxu0 %v1080
    %4265 = vmatprep.subr.mxu0 %v1089
    %4266 = vmatpush1.msra.mxu0 %v1088
    %4267 = vmatprep.subr.mxu0 %v1097
    %4268 = vmatpush1.msra.mxu0 %v1096
    %4269 = vmatprep.subr.mxu0 %v1105
    %4270 = vmatpush1.msra.mxu0 %v1104
    %4271 = vmatprep.subr.mxu0 %v1113
    %4272 = vmatpush1.msra.mxu0 %v1112
    %4273 = vmatprep.subr.mxu0 %v1121
    %4274 = vmatpush1.msra.mxu0 %v1120
    %4275 = vmatprep.subr.mxu0 %v1129
    %4276 = vmatpush1.msra.mxu0 %v1128
    %4277 = vmatprep.subr.mxu0 %v1137
    %4278 = vmatpush1.msra.mxu0 %v1136
    %4279 = vmatprep.subr.mxu0 %v1145
    %4280 = vmatpush1.msra.mxu0 %v1144
    %4281 = vmatprep.mubr.f32.mxu0 %v4001
    %4282 = vmatmul.mubr.f32.gmra.mrb[0].mxu0 %v4000
    %v4283 = vpop.f32.mrb[0].mxu0
    %v4284 = vadd.f32 0.0, %v4283
    %v4285 = vpop.f32.mrb[0].mxu0
    %v4286 = vadd.f32 0.0, %v4285
    %4287 = vdwg.mxu0
    %v4296 = vrot.slane %v4071, 4
    %v4297 = vrot.slane %v4073, 4
    %v4298 = vrot.slane %v4142, 4
    %v4299 = vrot.slane %v4144, 4
    %v4300 = vrot.slane %v4213, 4
    %v4301 = vrot.slane %v4215, 4
    %v4302 = vrot.slane %v4284, 4
    %v4303 = vrot.slane %v4286, 4
    %v4312 = vadd.f32 %v3990, %v4296
    %v4313 = vadd.f32 %v3991, %v4297
    %v4314 = vadd.f32 %v3992, %v4298
    %v4315 = vadd.f32 %v3993, %v4299
    %v4316 = vadd.f32 %v3994, %v4300
    %v4317 = vadd.f32 %v3995, %v4301
    %v4318 = vadd.f32 %v3996, %v4302
    %v4319 = vadd.f32 %v3997, %v4303
    %v4320 = vxor.u32 %v4312, 2147483648
    %v4321 = vxor.u32 %v4313, 2147483648
    %v4322 = vmul.f32 %v4320, 1.442695
    %v4323 = vpow.pop %v4322
    %v4324 = vmul.f32 %v4321, 1.442695
    %v4325 = vpow.pop %v4324
    %v4326 = vadd.f32 %v4323, 1.0
    %v4327 = vadd.f32 %v4325, 1.0
    %v4328 = vrcp.pop %v4326
    %v4329 = vmul.f32 1.0, %v4328
    %v4330 = vrcp.pop %v4327
    %v4331 = vmul.f32 1.0, %v4330
    %v4332 = vxor.u32 %v4314, 2147483648
    %v4333 = vxor.u32 %v4315, 2147483648
    %v4334 = vmul.f32 %v4332, 1.442695
    %v4335 = vpow.pop %v4334
    %v4336 = vmul.f32 %v4333, 1.442695
    %v4337 = vpow.pop %v4336
    %v4338 = vadd.f32 %v4335, 1.0
    %v4339 = vadd.f32 %v4337, 1.0
    %v4340 = vrcp.pop %v4338
    %v4341 = vmul.f32 1.0, %v4340
    %v4342 = vrcp.pop %v4339
    %v4343 = vmul.f32 1.0, %v4342
    %v4344 = vtanh.pop %v4316
    %v4345 = vtanh.pop %v4317
    %v4346 = vxor.u32 %v4318, 2147483648
    %v4347 = vxor.u32 %v4319, 2147483648
    %v4348 = vmul.f32 %v4346, 1.442695
    %v4349 = vpow.pop %v4348
    %v4350 = vmul.f32 %v4347, 1.442695
    %v4351 = vpow.pop %v4350
    %v4352 = vadd.f32 %v4349, 1.0
    %v4353 = vadd.f32 %v4351, 1.0
    %v4354 = vrcp.pop %v4352
    %v4355 = vmul.f32 1.0, %v4354
    %v4356 = vrcp.pop %v4353
    %v4357 = vmul.f32 1.0, %v4356
    %v4360 = vrot.slane %v3984, 6
    %v4361 = vrot.slane %v3985, 6
    %v4364 = vmul.f32 %v4341, %v4360
    %v4365 = vmul.f32 %v4343, %v4361
    %v4366 = vmul.f32 %v4329, %v4344
    %v4367 = vmul.f32 %v4331, %v4345
    %v4368 = vadd.f32 %v4364, %v4366
    %v4369 = vadd.f32 %v4365, %v4367
    %v4370 = vtanh.pop %v4368
    %v4371 = vtanh.pop %v4369
    %v4372 = vmul.f32 %v4355, %v4370
    %v4373 = vmul.f32 %v4357, %v4371
    %v4374 = vld [vmem:[#allocation2 + $0x80] sm:$0xc0]
    %v4375 = vld [vmem:[#allocation2 + $0x88] sm:$0xc0]
    %v4376 = vld [vmem:[#allocation2 + $0x90] sm:$0xc0]
    %v4377 = vld [vmem:[#allocation2 + $0x98] sm:$0xc0]
    %v4378 = vld [vmem:[#allocation2 + $0xa0] sm:$0xc0]
    %v4379 = vld [vmem:[#allocation2 + $0xa8] sm:$0xc0]
    %v4380 = vld [vmem:[#allocation2 + $0xb0] sm:$0xc0]
    %v4381 = vld [vmem:[#allocation2 + $0xb8] sm:$0xc0]
    %v4384 = vrot.slane %v4372, 4
    %v4385 = vrot.slane %v4373, 4
    %4388 = vmatprep.subr.mxu0 %v891
    %4389 = vmatpush1.msra.mxu0 %v890
    %4390 = vmatprep.subr.mxu0 %v899
    %4391 = vmatpush1.msra.mxu0 %v898
    %4392 = vmatprep.subr.mxu0 %v907
    %4393 = vmatpush1.msra.mxu0 %v906
    %4394 = vmatprep.subr.mxu0 %v915
    %4395 = vmatpush1.msra.mxu0 %v914
    %4396 = vmatprep.subr.mxu0 %v923
    %4397 = vmatpush1.msra.mxu0 %v922
    %4398 = vmatprep.subr.mxu0 %v931
    %4399 = vmatpush1.msra.mxu0 %v930
    %4400 = vmatprep.subr.mxu0 %v939
    %4401 = vmatpush1.msra.mxu0 %v938
    %4402 = vmatprep.subr.mxu0 %v947
    %4403 = vmatpush1.msra.mxu0 %v946
    %4404 = vmatprep.subr.mxu0 %v955
    %4405 = vmatpush1.msra.mxu0 %v954
    %4406 = vmatprep.subr.mxu0 %v963
    %4407 = vmatpush1.msra.mxu0 %v962
    %4408 = vmatprep.subr.mxu0 %v971
    %4409 = vmatpush1.msra.mxu0 %v970
    %4410 = vmatprep.subr.mxu0 %v979
    %4411 = vmatpush1.msra.mxu0 %v978
    %4412 = vmatprep.subr.mxu0 %v987
    %4413 = vmatpush1.msra.mxu0 %v986
    %4414 = vmatprep.subr.mxu0 %v995
    %4415 = vmatpush1.msra.mxu0 %v994
    %4416 = vmatprep.subr.mxu0 %v1003
    %4417 = vmatpush1.msra.mxu0 %v1002
    %4418 = vmatprep.subr.mxu0 %v1011
    %4419 = vmatpush1.msra.mxu0 %v1010
    %4420 = vmatprep.subr.mxu0 %v1019
    %4421 = vmatpush1.msra.mxu0 %v1018
    %4422 = vmatprep.subr.mxu0 %v1027
    %4423 = vmatpush1.msra.mxu0 %v1026
    %4424 = vmatprep.subr.mxu0 %v1035
    %4425 = vmatpush1.msra.mxu0 %v1034
    %4426 = vmatprep.subr.mxu0 %v1043
    %4427 = vmatpush1.msra.mxu0 %v1042
    %4428 = vmatprep.subr.mxu0 %v1051
    %4429 = vmatpush1.msra.mxu0 %v1050
    %4430 = vmatprep.subr.mxu0 %v1059
    %4431 = vmatpush1.msra.mxu0 %v1058
    %4432 = vmatprep.subr.mxu0 %v1067
    %4433 = vmatpush1.msra.mxu0 %v1066
    %4434 = vmatprep.subr.mxu0 %v1075
    %4435 = vmatpush1.msra.mxu0 %v1074
    %4436 = vmatprep.subr.mxu0 %v1083
    %4437 = vmatpush1.msra.mxu0 %v1082
    %4438 = vmatprep.subr.mxu0 %v1091
    %4439 = vmatpush1.msra.mxu0 %v1090
    %4440 = vmatprep.subr.mxu0 %v1099
    %4441 = vmatpush1.msra.mxu0 %v1098
    %4442 = vmatprep.subr.mxu0 %v1107
    %4443 = vmatpush1.msra.mxu0 %v1106
    %4444 = vmatprep.subr.mxu0 %v1115
    %4445 = vmatpush1.msra.mxu0 %v1114
    %4446 = vmatprep.subr.mxu0 %v1123
    %4447 = vmatpush1.msra.mxu0 %v1122
    %4448 = vmatprep.subr.mxu0 %v1131
    %4449 = vmatpush1.msra.mxu0 %v1130
    %4450 = vmatprep.subr.mxu0 %v1139
    %4451 = vmatpush1.msra.mxu0 %v1138
    %4452 = vmatprep.mubr.f32.mxu0 %v4385
    %4453 = vmatmul.mubr.f32.gmra.mrb[0].mxu0 %v4384
    %v4454 = vpop.f32.mrb[0].mxu0
    %v4455 = vadd.f32 0.0, %v4454
    %v4456 = vpop.f32.mrb[0].mxu0
    %v4457 = vadd.f32 0.0, %v4456
    %4458 = vdwg.mxu0
    %4459 = vmatprep.subr.mxu0 %v893
    %4460 = vmatpush1.msra.mxu0 %v892
    %4461 = vmatprep.subr.mxu0 %v901
    %4462 = vmatpush1.msra.mxu0 %v900
    %4463 = vmatprep.subr.mxu0 %v909
    %4464 = vmatpush1.msra.mxu0 %v908
    %4465 = vmatprep.subr.mxu0 %v917
    %4466 = vmatpush1.msra.mxu0 %v916
    %4467 = vmatprep.subr.mxu0 %v925
    %4468 = vmatpush1.msra.mxu0 %v924
    %4469 = vmatprep.subr.mxu0 %v933
    %4470 = vmatpush1.msra.mxu0 %v932
    %4471 = vmatprep.subr.mxu0 %v941
    %4472 = vmatpush1.msra.mxu0 %v940
    %4473 = vmatprep.subr.mxu0 %v949
    %4474 = vmatpush1.msra.mxu0 %v948
    %4475 = vmatprep.subr.mxu0 %v957
    %4476 = vmatpush1.msra.mxu0 %v956
    %4477 = vmatprep.subr.mxu0 %v965
    %4478 = vmatpush1.msra.mxu0 %v964
    %4479 = vmatprep.subr.mxu0 %v973
    %4480 = vmatpush1.msra.mxu0 %v972
    %4481 = vmatprep.subr.mxu0 %v981
    %4482 = vmatpush1.msra.mxu0 %v980
    %4483 = vmatprep.subr.mxu0 %v989
    %4484 = vmatpush1.msra.mxu0 %v988
    %4485 = vmatprep.subr.mxu0 %v997
    %4486 = vmatpush1.msra.mxu0 %v996
    %4487 = vmatprep.subr.mxu0 %v1005
    %4488 = vmatpush1.msra.mxu0 %v1004
    %4489 = vmatprep.subr.mxu0 %v1013
    %4490 = vmatpush1.msra.mxu0 %v1012
    %4491 = vmatprep.subr.mxu0 %v1021
    %4492 = vmatpush1.msra.mxu0 %v1020
    %4493 = vmatprep.subr.mxu0 %v1029
    %4494 = vmatpush1.msra.mxu0 %v1028
    %4495 = vmatprep.subr.mxu0 %v1037
    %4496 = vmatpush1.msra.mxu0 %v1036
    %4497 = vmatprep.subr.mxu0 %v1045
    %4498 = vmatpush1.msra.mxu0 %v1044
    %4499 = vmatprep.subr.mxu0 %v1053
    %4500 = vmatpush1.msra.mxu0 %v1052
    %4501 = vmatprep.subr.mxu0 %v1061
    %4502 = vmatpush1.msra.mxu0 %v1060
    %4503 = vmatprep.subr.mxu0 %v1069
    %4504 = vmatpush1.msra.mxu0 %v1068
    %4505 = vmatprep.subr.mxu0 %v1077
    %4506 = vmatpush1.msra.mxu0 %v1076
    %4507 = vmatprep.subr.mxu0 %v1085
    %4508 = vmatpush1.msra.mxu0 %v1084
    %4509 = vmatprep.subr.mxu0 %v1093
    %4510 = vmatpush1.msra.mxu0 %v1092
    %4511 = vmatprep.subr.mxu0 %v1101
    %4512 = vmatpush1.msra.mxu0 %v1100
    %4513 = vmatprep.subr.mxu0 %v1109
    %4514 = vmatpush1.msra.mxu0 %v1108
    %4515 = vmatprep.subr.mxu0 %v1117
    %4516 = vmatpush1.msra.mxu0 %v1116
    %4517 = vmatprep.subr.mxu0 %v1125
    %4518 = vmatpush1.msra.mxu0 %v1124
    %4519 = vmatprep.subr.mxu0 %v1133
    %4520 = vmatpush1.msra.mxu0 %v1132
    %4521 = vmatprep.subr.mxu0 %v1141
    %4522 = vmatpush1.msra.mxu0 %v1140
    %4523 = vmatprep.mubr.f32.mxu0 %v4385
    %4524 = vmatmul.mubr.f32.gmra.mrb[0].mxu0 %v4384
    %v4525 = vpop.f32.mrb[0].mxu0
    %v4526 = vadd.f32 0.0, %v4525
    %v4527 = vpop.f32.mrb[0].mxu0
    %v4528 = vadd.f32 0.0, %v4527
    %4529 = vdwg.mxu0
    %4530 = vmatprep.subr.mxu0 %v895
    %4531 = vmatpush1.msra.mxu0 %v894
    %4532 = vmatprep.subr.mxu0 %v903
    %4533 = vmatpush1.msra.mxu0 %v902
    %4534 = vmatprep.subr.mxu0 %v911
    %4535 = vmatpush1.msra.mxu0 %v910
    %4536 = vmatprep.subr.mxu0 %v919
    %4537 = vmatpush1.msra.mxu0 %v918
    %4538 = vmatprep.subr.mxu0 %v927
    %4539 = vmatpush1.msra.mxu0 %v926
    %4540 = vmatprep.subr.mxu0 %v935
    %4541 = vmatpush1.msra.mxu0 %v934
    %4542 = vmatprep.subr.mxu0 %v943
    %4543 = vmatpush1.msra.mxu0 %v942
    %4544 = vmatprep.subr.mxu0 %v951
    %4545 = vmatpush1.msra.mxu0 %v950
    %4546 = vmatprep.subr.mxu0 %v959
    %4547 = vmatpush1.msra.mxu0 %v958
    %4548 = vmatprep.subr.mxu0 %v967
    %4549 = vmatpush1.msra.mxu0 %v966
    %4550 = vmatprep.subr.mxu0 %v975
    %4551 = vmatpush1.msra.mxu0 %v974
    %4552 = vmatprep.subr.mxu0 %v983
    %4553 = vmatpush1.msra.mxu0 %v982
    %4554 = vmatprep.subr.mxu0 %v991
    %4555 = vmatpush1.msra.mxu0 %v990
    %4556 = vmatprep.subr.mxu0 %v999
    %4557 = vmatpush1.msra.mxu0 %v998
    %4558 = vmatprep.subr.mxu0 %v1007
    %4559 = vmatpush1.msra.mxu0 %v1006
    %4560 = vmatprep.subr.mxu0 %v1015
    %4561 = vmatpush1.msra.mxu0 %v1014
    %4562 = vmatprep.subr.mxu0 %v1023
    %4563 = vmatpush1.msra.mxu0 %v1022
    %4564 = vmatprep.subr.mxu0 %v1031
    %4565 = vmatpush1.msra.mxu0 %v1030
    %4566 = vmatprep.subr.mxu0 %v1039
    %4567 = vmatpush1.msra.mxu0 %v1038
    %4568 = vmatprep.subr.mxu0 %v1047
    %4569 = vmatpush1.msra.mxu0 %v1046
    %4570 = vmatprep.subr.mxu0 %v1055
    %4571 = vmatpush1.msra.mxu0 %v1054
    %4572 = vmatprep.subr.mxu0 %v1063
    %4573 = vmatpush1.msra.mxu0 %v1062
    %4574 = vmatprep.subr.mxu0 %v1071
    %4575 = vmatpush1.msra.mxu0 %v1070
    %4576 = vmatprep.subr.mxu0 %v1079
    %4577 = vmatpush1.msra.mxu0 %v1078
    %4578 = vmatprep.subr.mxu0 %v1087
    %4579 = vmatpush1.msra.mxu0 %v1086
    %4580 = vmatprep.subr.mxu0 %v1095
    %4581 = vmatpush1.msra.mxu0 %v1094
    %4582 = vmatprep.subr.mxu0 %v1103
    %4583 = vmatpush1.msra.mxu0 %v1102
    %4584 = vmatprep.subr.mxu0 %v1111
    %4585 = vmatpush1.msra.mxu0 %v1110
    %4586 = vmatprep.subr.mxu0 %v1119
    %4587 = vmatpush1.msra.mxu0 %v1118
    %4588 = vmatprep.subr.mxu0 %v1127
    %4589 = vmatpush1.msra.mxu0 %v1126
    %4590 = vmatprep.subr.mxu0 %v1135
    %4591 = vmatpush1.msra.mxu0 %v1134
    %4592 = vmatprep.subr.mxu0 %v1143
    %4593 = vmatpush1.msra.mxu0 %v1142
    %4594 = vmatprep.mubr.f32.mxu0 %v4385
    %4595 = vmatmul.mubr.f32.gmra.mrb[0].mxu0 %v4384
    %v4596 = vpop.f32.mrb[0].mxu0
    %v4597 = vadd.f32 0.0, %v4596
    %v4598 = vpop.f32.mrb[0].mxu0
    %v4599 = vadd.f32 0.0, %v4598
    %4600 = vdwg.mxu0
    %4601 = vmatprep.subr.mxu0 %v897
    %4602 = vmatpush1.msra.mxu0 %v896
    %4603 = vmatprep.subr.mxu0 %v905
    %4604 = vmatpush1.msra.mxu0 %v904
    %4605 = vmatprep.subr.mxu0 %v913
    %4606 = vmatpush1.msra.mxu0 %v912
    %4607 = vmatprep.subr.mxu0 %v921
    %4608 = vmatpush1.msra.mxu0 %v920
    %4609 = vmatprep.subr.mxu0 %v929
    %4610 = vmatpush1.msra.mxu0 %v928
    %4611 = vmatprep.subr.mxu0 %v937
    %4612 = vmatpush1.msra.mxu0 %v936
    %4613 = vmatprep.subr.mxu0 %v945
    %4614 = vmatpush1.msra.mxu0 %v944
    %4615 = vmatprep.subr.mxu0 %v953
    %4616 = vmatpush1.msra.mxu0 %v952
    %4617 = vmatprep.subr.mxu0 %v961
    %4618 = vmatpush1.msra.mxu0 %v960
    %4619 = vmatprep.subr.mxu0 %v969
    %4620 = vmatpush1.msra.mxu0 %v968
    %4621 = vmatprep.subr.mxu0 %v977
    %4622 = vmatpush1.msra.mxu0 %v976
    %4623 = vmatprep.subr.mxu0 %v985
    %4624 = vmatpush1.msra.mxu0 %v984
    %4625 = vmatprep.subr.mxu0 %v993
    %4626 = vmatpush1.msra.mxu0 %v992
    %4627 = vmatprep.subr.mxu0 %v1001
    %4628 = vmatpush1.msra.mxu0 %v1000
    %4629 = vmatprep.subr.mxu0 %v1009
    %4630 = vmatpush1.msra.mxu0 %v1008
    %4631 = vmatprep.subr.mxu0 %v1017
    %4632 = vmatpush1.msra.mxu0 %v1016
    %4633 = vmatprep.subr.mxu0 %v1025
    %4634 = vmatpush1.msra.mxu0 %v1024
    %4635 = vmatprep.subr.mxu0 %v1033
    %4636 = vmatpush1.msra.mxu0 %v1032
    %4637 = vmatprep.subr.mxu0 %v1041
    %4638 = vmatpush1.msra.mxu0 %v1040
    %4639 = vmatprep.subr.mxu0 %v1049
    %4640 = vmatpush1.msra.mxu0 %v1048
    %4641 = vmatprep.subr.mxu0 %v1057
    %4642 = vmatpush1.msra.mxu0 %v1056
    %4643 = vmatprep.subr.mxu0 %v1065
    %4644 = vmatpush1.msra.mxu0 %v1064
    %4645 = vmatprep.subr.mxu0 %v1073
    %4646 = vmatpush1.msra.mxu0 %v1072
    %4647 = vmatprep.subr.mxu0 %v1081
    %4648 = vmatpush1.msra.mxu0 %v1080
    %4649 = vmatprep.subr.mxu0 %v1089
    %4650 = vmatpush1.msra.mxu0 %v1088
    %4651 = vmatprep.subr.mxu0 %v1097
    %4652 = vmatpush1.msra.mxu0 %v1096
    %4653 = vmatprep.subr.mxu0 %v1105
    %4654 = vmatpush1.msra.mxu0 %v1104
    %4655 = vmatprep.subr.mxu0 %v1113
    %4656 = vmatpush1.msra.mxu0 %v1112
    %4657 = vmatprep.subr.mxu0 %v1121
    %4658 = vmatpush1.msra.mxu0 %v1120
    %4659 = vmatprep.subr.mxu0 %v1129
    %4660 = vmatpush1.msra.mxu0 %v1128
    %4661 = vmatprep.subr.mxu0 %v1137
    %4662 = vmatpush1.msra.mxu0 %v1136
    %4663 = vmatprep.subr.mxu0 %v1145
    %4664 = vmatpush1.msra.mxu0 %v1144
    %4665 = vmatprep.mubr.f32.mxu0 %v4385
    %4666 = vmatmul.mubr.f32.gmra.mrb[0].mxu0 %v4384
    %v4667 = vpop.f32.mrb[0].mxu0
    %v4668 = vadd.f32 0.0, %v4667
    %v4669 = vpop.f32.mrb[0].mxu0
    %v4670 = vadd.f32 0.0, %v4669
    %4671 = vdwg.mxu0
    %v4680 = vrot.slane %v4455, 2
    %v4681 = vrot.slane %v4457, 2
    %v4682 = vrot.slane %v4526, 2
    %v4683 = vrot.slane %v4528, 2
    %v4684 = vrot.slane %v4597, 2
    %v4685 = vrot.slane %v4599, 2
    %v4686 = vrot.slane %v4668, 2
    %v4687 = vrot.slane %v4670, 2
    %v4696 = vadd.f32 %v4374, %v4680
    %v4697 = vadd.f32 %v4375, %v4681
    %v4698 = vadd.f32 %v4376, %v4682
    %v4699 = vadd.f32 %v4377, %v4683
    %v4700 = vadd.f32 %v4378, %v4684
    %v4701 = vadd.f32 %v4379, %v4685
    %v4702 = vadd.f32 %v4380, %v4686
    %v4703 = vadd.f32 %v4381, %v4687
    %v4704 = vxor.u32 %v4696, 2147483648
    %v4705 = vxor.u32 %v4697, 2147483648
    %v4706 = vmul.f32 %v4704, 1.442695
    %v4707 = vpow.pop %v4706
    %v4708 = vmul.f32 %v4705, 1.442695
    %v4709 = vpow.pop %v4708
    %v4710 = vadd.f32 %v4707, 1.0
    %v4711 = vadd.f32 %v4709, 1.0
    %v4712 = vrcp.pop %v4710
    %v4713 = vmul.f32 1.0, %v4712
    %v4714 = vrcp.pop %v4711
    %v4715 = vmul.f32 1.0, %v4714
    %v4716 = vxor.u32 %v4698, 2147483648
    %v4717 = vxor.u32 %v4699, 2147483648
    %v4718 = vmul.f32 %v4716, 1.442695
    %v4719 = vpow.pop %v4718
    %v4720 = vmul.f32 %v4717, 1.442695
    %v4721 = vpow.pop %v4720
    %v4722 = vadd.f32 %v4719, 1.0
    %v4723 = vadd.f32 %v4721, 1.0
    %v4724 = vrcp.pop %v4722
    %v4725 = vmul.f32 1.0, %v4724
    %v4726 = vrcp.pop %v4723
    %v4727 = vmul.f32 1.0, %v4726
    %v4728 = vtanh.pop %v4700
    %v4729 = vtanh.pop %v4701
    %v4730 = vxor.u32 %v4702, 2147483648
    %v4731 = vxor.u32 %v4703, 2147483648
    %v4732 = vmul.f32 %v4730, 1.442695
    %v4733 = vpow.pop %v4732
    %v4734 = vmul.f32 %v4731, 1.442695
    %v4735 = vpow.pop %v4734
    %v4736 = vadd.f32 %v4733, 1.0
    %v4737 = vadd.f32 %v4735, 1.0
    %v4738 = vrcp.pop %v4736
    %v4739 = vmul.f32 1.0, %v4738
    %v4740 = vrcp.pop %v4737
    %v4741 = vmul.f32 1.0, %v4740
    %v4744 = vrot.slane %v4368, 6
    %v4745 = vrot.slane %v4369, 6
    %v4748 = vmul.f32 %v4725, %v4744
    %v4749 = vmul.f32 %v4727, %v4745
    %v4750 = vmul.f32 %v4713, %v4728
    %v4751 = vmul.f32 %v4715, %v4729
    %v4752 = vadd.f32 %v4748, %v4750
    %v4753 = vadd.f32 %v4749, %v4751
    %v4754 = vtanh.pop %v4752
    %v4755 = vtanh.pop %v4753
    %v4756 = vmul.f32 %v4739, %v4754
    %v4757 = vmul.f32 %v4741, %v4755
    %v4758 = vld [vmem:[%s5] sm:$0x3]
    %v4759 = vld [vmem:[%s5 + $0x2] sm:$0x3]
    %v4761 = vlaneseq
    %v4762 = vshrl.u32 %v4761, 7
    %v4763 = vsub.s32 0, %v4762
    %v4764 = vrot.slane %v4758, %v4763
    %v4765 = vlaneseq
    %v4766 = vshrl.u32 %v4765, 7
    %v4767 = vsub.s32 1, %v4766
    %v4768 = vrot.slane %v4758, %v4767
    %v4771 = vmul.f32 %v4756, %v4764
    %v4772 = vmul.f32 %v4757, %v4768
    %vm4773 = vcmask 1047558
    %v4774 = vsel %vm4773, %v4771, 0.0
    %v4775 = vsel %vm4773, %v4772, 0.0
    %v4776 = vadd.f32 %v4774, %v4775
    %4777 = vadd.xlane.f32.xlu0 %v4776
    %v4778 = vpop.xlane.xlu0 %4777
    %v4780 = vlaneseq
    %v4781 = vshrl.u32 %v4780, 7
    %v4782 = vsub.s32 0, %v4781
    %v4783 = vrot.slane %v4759, %v4782
    %v4784 = vlaneseq
    %v4785 = vshrl.u32 %v4784, 7
    %v4786 = vsub.s32 1, %v4785
    %v4787 = vrot.slane %v4759, %v4786
    %v4790 = vmul.f32 %v2104, %v4783
    %v4791 = vmul.f32 %v2105, %v4787
    %v4792 = vsel %vm4773, %v4790, 0.0
    %v4793 = vsel %vm4773, %v4791, 0.0
    %v4794 = vadd.f32 %v4792, %v4793
    %4795 = vadd.xlane.f32.xlu0 %v4794
    %v4796 = vpop.xlane.xlu0 %4795
    %v4797 = vadd.f32 %v4778, %v4796
    %v4798 = vld [vmem:[#allocation3] sm:$0x1]
    %v4800 = vlaneseq
    %v4801 = vshrl.u32 %v4800, 7
    %v4802 = vsub.s32 0, %v4801
    %v4803 = vrot.slane %v4798, %v4802
    %v4805 = vadd.f32 %v4797, %v4803
    %v4806 = vxor.u32 %v4805, 2147483648
    %v4807 = vmul.f32 %v4806, 1.442695
    %v4808 = vpow.pop %v4807
    %v4809 = vadd.f32 %v4808, 1.0
    %v4810 = vrcp.pop %v4809
    %v4811 = vmul.f32 1.0, %v4810
    %vm4812 = vcmask 7174
    %4813 = vst.msk [vmem:[%s7 - $0x6] sm:$0xc0] %vm4812, %v4811
    // Predicated region
    $region42: #{forward.1} parent=1 // pred_check
      _
    $region43: #{forward.1} parent=1 // pred_check_branch
      %4815 = sbr.rel (0) target = $region45
    $region44: #{forward.1} parent=1 // pred_region
      _
    $region45: #{forward.1} parent=1 // pred_fallthru
      _
    // Predicated region
    $region46: #{forward.1} parent=1 // pred_check
      _
    $region47: #{forward.1} parent=1 // pred_check_branch
      %4817 = sbr.rel (0) target = $region49
    $region48: #{forward.1} parent=1 // pred_region
      _
    $region49: #{forward.1} parent=1 // pred_fallthru
      _
    %4818 = vsyncpa [#allocation5], 1
    %4819 = vsyncpa [#allocation7], 1

</llo_original>
